<compile_context>
chip_gen: v5e
topology: v5e:2x2
jax: 0.10.0
libtpu: 0.0.40
codegen_flags: <defaults>
</compile_context>

<pallas_src>
import jax
import jax.numpy as jnp
from jax.experimental import pallas as pl
from jax.experimental.pallas import tpu as pltpu

EPS = 1e-5
OUT_DIM = 40
OUT_PAD = 128  # lane-dense padded width for the 40-wide last layer


def _encoder_mri_kernel(x_ref,
                        w1_ref, gamma_ref, beta_ref,
                        w2_ref, b2_ref,
                        w3_ref, b3_ref,
                        w4_ref, b4_ref,
                        o_ref):
    cdt = w1_ref.dtype  # matmul operand dtype (bf16 default / f32); f32 accumulate

    # x arrives f32 (it changes every call); cast in VMEM, not in the wrapper.
    x = x_ref[...].astype(cdt)

    # ---- Linear(input_size, 512); bias omitted (cancels under batch-stat BN) ----
    h1 = jnp.dot(x, w1_ref[...], preferred_element_type=jnp.float32)   # (B,512) f32

    # ---- BatchNorm1d(512), training-mode batch statistics, folded to one FMA ----
    b = h1.shape[0]
    inv_b = 1.0 / b
    mean = jnp.sum(h1, axis=0, keepdims=True) * inv_b                  # (1,512)
    ex2 = jnp.sum(h1 * h1, axis=0, keepdims=True) * inv_b              # (1,512)
    # Single-pass moment form (no `centered` temporary). Cancellation is benign
    # at these magnitudes; clamp at 0 so rsqrt never sees a negative.
    var = jnp.maximum(ex2 - mean * mean, 0.0)
    inv_std = jax.lax.rsqrt(var + EPS)
    scale = gamma_ref[...] * inv_std                                   # (1,512) f32
    shift = beta_ref[...] - mean * scale                               # (1,512) f32
    h1 = jnp.maximum(h1 * scale + shift, 0.0)                          # BN + ReLU, f32

    # ---- Linear(512, 256) + ReLU ----
    h2 = jnp.dot(h1.astype(cdt), w2_ref[...],
                 preferred_element_type=jnp.float32) + b2_ref[...]
    h2 = jnp.maximum(h2, 0.0)

    # ---- Linear(256, 128) + ReLU ----
    h3 = jnp.dot(h2.astype(cdt), w3_ref[...],
                 preferred_element_type=jnp.float32) + b3_ref[...]
    h3 = jnp.maximum(h3, 0.0)

    # ---- Linear(128, 40), zero-padded to 128 lanes for an unmasked store ----
    out = jnp.dot(h3.astype(cdt), w4_ref[...],
                  preferred_element_type=jnp.float32) + b4_ref[...]
    o_ref[...] = out.astype(o_ref.dtype)


def prepare_params(params, *, compute_dtype=jnp.bfloat16):
    """One-time weight prep (cast + pad). Call once; reuse every forward."""
    w4, b4 = params["w4"], params["b4"]
    k4, n4 = w4.shape
    w4p = jnp.zeros((k4, OUT_PAD), jnp.float32).at[:, :n4].set(w4)
    b4p = jnp.zeros((1, OUT_PAD), jnp.float32).at[:, :n4].set(b4)
    prepared = {
        "w1": params["w1"].astype(compute_dtype),
        "gamma": params["gamma"].astype(jnp.float32),
        "beta": params["beta"].astype(jnp.float32),
        "w2": params["w2"].astype(compute_dtype),
        "b2": params["b2"].astype(jnp.float32),
        "w3": params["w3"].astype(compute_dtype),
        "b3": params["b3"].astype(jnp.float32),
        "w4p": w4p.astype(compute_dtype),
        "b4p": b4p,
    }
    # Materialize now so no cast/pad work ever rides on the forward path.
    return jax.tree_util.tree_map(lambda a: a.block_until_ready(), prepared)


def _vmem_capacity_bytes():
    try:
        cap = getattr(pltpu.get_tpu_info(), "vmem_capacity_bytes", None)
        if cap:
            return int(cap)
    except Exception:
        pass
    return 64 << 20  # conservative fallback: v7x per-TC VMEM


def encoder_mri_forward(x, prepared, *, return_padded=False):
    """x: (B, input_size) float32, prepared = prepare_params(...).

    Returns (B, 40) f32, or the lane-dense padded (B, 128) slab if
    return_padded=True (slice where it is consumed to skip the extra copy).
    """
    B, input_size = x.shape

    args = (
        x,
        prepared["w1"], prepared["gamma"], prepared["beta"],
        prepared["w2"], prepared["b2"],
        prepared["w3"], prepared["b3"],
        prepared["w4p"], prepared["b4p"],
    )

    def nbytes(a):
        return int(a.size) * a.dtype.itemsize

    operand_bytes = sum(nbytes(a) for a in args)
    out_bytes = 4 * B * OUT_PAD
    # f32 intermediates: h1 (+ one temp for h1*h1), h2, h3, out.
    act_bytes = 4 * B * (512 + 512 + 256 + 128 + OUT_PAD)
    vmem_bytes = int(1.5 * (operand_bytes + out_bytes + act_bytes))
    vmem_bytes = max(vmem_bytes, 4 << 20)
    # Generation-aware cap (v7x: 64 MiB/TC; v5e/v6e: 128 MiB).
    vmem_bytes = min(vmem_bytes, int(0.75 * _vmem_capacity_bytes()))
    # TODO(synk): if operand+activation bytes exceed this cap (huge input_size),
    # switch to the K-tiled grid path instead of relying on the cap.

    flops = 2 * B * (input_size * 512 + 512 * 256 + 256 * 128 + 128 * OUT_PAD)
    cost = pl.CostEstimate(flops=flops, transcendentals=0,
                           bytes_accessed=operand_bytes + out_bytes)

    vmem_spec = pl.BlockSpec(memory_space=pltpu.MemorySpace.VMEM)
    out_padded = pl.pallas_call(
        _encoder_mri_kernel,
        out_shape=jax.ShapeDtypeStruct((B, OUT_PAD), jnp.float32),
        in_specs=[vmem_spec] * len(args),
        out_specs=vmem_spec,
        compiler_params=pltpu.CompilerParams(vmem_limit_bytes=vmem_bytes),
        cost_estimate=cost,
    )(*args)

    if return_padded:
        return out_padded
    return out_padded[:, :OUT_DIM]


def init_params(key, input_size):
    """Deterministic init matching the PyTorch module's shapes.

    nn.Linear(in, out): weight (out, in), bias (out,) -> stored transposed as
    (in, out) with (1, out) bias for lane-major compute.
    nn.BatchNorm1d(512): gamma=1, beta=0 (PyTorch defaults).
    b1 is kept for the reference; the kernel drops it (cancels exactly under
    batch-statistic BatchNorm).
    """
    dims = [(input_size, 512), (512, 256), (256, 128), (128, OUT_DIM)]
    params = {}
    keys = jax.random.split(key, 2 * len(dims))
    for idx, (fan_in, fan_out) in enumerate(dims):
        bound = 1.0 / jnp.sqrt(fan_in)
        w = jax.random.uniform(keys[2 * idx], (fan_in, fan_out),
                               minval=-bound, maxval=bound, dtype=jnp.float32)
        bvec = jax.random.uniform(keys[2 * idx + 1], (1, fan_out),
                                  minval=-bound, maxval=bound, dtype=jnp.float32)
        params[f"w{idx + 1}"] = w
        params[f"b{idx + 1}"] = bvec
    params["gamma"] = jnp.ones((1, 512), dtype=jnp.float32)
    params["beta"] = jnp.zeros((1, 512), dtype=jnp.float32)
    return params


def reference_forward(x, params):
    """Pure-JAX reference with the PyTorch .train()-mode semantics (f32)."""
    hp = jax.lax.Precision.HIGHEST
    h1 = jnp.dot(x, params["w1"], precision=hp) + params["b1"]
    mean = jnp.mean(h1, axis=0, keepdims=True)
    var = jnp.mean((h1 - mean) ** 2, axis=0, keepdims=True)
    h1 = (h1 - mean) / jnp.sqrt(var + EPS) * params["gamma"] + params["beta"]
    h1 = jnp.maximum(h1, 0.0)
    h2 = jnp.maximum(jnp.dot(h1, params["w2"], precision=hp) + params["b2"], 0.0)
    h3 = jnp.maximum(jnp.dot(h2, params["w3"], precision=hp) + params["b3"], 0.0)
    return jnp.dot(h3, params["w4"], precision=hp) + params["b4"]


if __name__ == "__main__":
    key = jax.random.PRNGKey(0)
    k_param, k_x = jax.random.split(key)

    batch = 256       # multiple of 8; fills the 256-wide MXU on v6e/v7x
    input_size = 64
    params = init_params(k_param, input_size)
    x = jax.random.normal(k_x, (batch, input_size), dtype=jnp.float32)

    ref = reference_forward(x, params)

    # f32-operand path: matches the PyTorch-semantics reference tightly.
    prep_f32 = prepare_params(params, compute_dtype=jnp.float32)
    out = jax.block_until_ready(encoder_mri_forward(x, prep_f32))
    assert out.shape == (batch, OUT_DIM), out.shape
    assert jnp.allclose(out, ref, atol=1e-3, rtol=1e-3), \
        f"max abs err {float(jnp.max(jnp.abs(out - ref)))}"

    # Default bf16-operand path (MXU-native); f32 accumulate + f32 BN/ReLU.
    # Note: BN batch statistics are computed from bf16-rounded matmul products,
    # a bounded semantic difference vs. the f32 reference (inference-tolerable).
    prep_bf16 = prepare_params(params)  # bf16 default
    out_bf16 = jax.block_until_ready(encoder_mri_forward(x, prep_bf16))
    assert out_bf16.shape == (batch, OUT_DIM)
    assert bool(jnp.all(jnp.isfinite(out_bf16)))
    assert jnp.allclose(out_bf16, ref, atol=2e-1, rtol=2e-1), \
        f"max abs err {float(jnp.max(jnp.abs(out_bf16 - ref)))}"

    # Padded-slab output path (lane-dense (B,128); consumer slices [:, :40]).
    out_pad = jax.block_until_ready(
        encoder_mri_forward(x, prep_bf16, return_padded=True))
    assert out_pad.shape == (batch, OUT_PAD)
    assert jnp.allclose(out_pad[:, :OUT_DIM], out_bf16, atol=0, rtol=0)

    print("KERNEL_OK")
</pallas_src>

<mosaic_0001>
module attributes {stable_mosaic.version = 11 : i64} {
  func.func @_encoder_mri_kernel(%arg0: memref<256x64xf32, #tpu.memory_space<vmem>>, %arg1: memref<64x512xf32, #tpu.memory_space<vmem>>, %arg2: memref<1x512xf32, #tpu.memory_space<vmem>>, %arg3: memref<1x512xf32, #tpu.memory_space<vmem>>, %arg4: memref<512x256xf32, #tpu.memory_space<vmem>>, %arg5: memref<1x256xf32, #tpu.memory_space<vmem>>, %arg6: memref<256x128xf32, #tpu.memory_space<vmem>>, %arg7: memref<1x128xf32, #tpu.memory_space<vmem>>, %arg8: memref<128x128xf32, #tpu.memory_space<vmem>>, %arg9: memref<1x128xf32, #tpu.memory_space<vmem>>, %arg10: memref<256x128xf32, #tpu.memory_space<vmem>>) attributes {dimension_semantics = [], scalar_prefetch = 0 : i64, scratch_operands = 0 : i64, tpu.core_type = #tpu.core_type<tc>} {
    %c0 = arith.constant 0 : index
    %c0_0 = arith.constant 0 : index
    %0 = vector.load %arg0[%c0, %c0_0] : memref<256x64xf32, #tpu.memory_space<vmem>>, vector<256x64xf32>
    %c0_1 = arith.constant 0 : index
    %c0_2 = arith.constant 0 : index
    %1 = vector.load %arg1[%c0_1, %c0_2] : memref<64x512xf32, #tpu.memory_space<vmem>>, vector<64x512xf32>
    %cst = arith.constant dense<0.000000e+00> : vector<256x512xf32>
    %2 = tpu.matmul %0, %1, %cst {dimension_numbers = #tpu.dot_dimension_numbers<[1], [0], [0], [1], [0, 0, 1, 1], [], []>} : vector<256x64xf32>, vector<64x512xf32>, vector<256x512xf32> -> vector<256x512xf32>
    %cst_3 = arith.constant dense<0.000000e+00> : vector<512xf32>
    %3 = vector.multi_reduction <add>, %2, %cst_3 [0] : vector<256x512xf32> to vector<512xf32>
    %4 = vector.shape_cast %3 : vector<512xf32> to vector<1x512xf32>
    %cst_4 = arith.constant 3.906250e-03 : f32
    %5 = vector.broadcast %cst_4 : f32 to vector<1x512xf32>
    %6 = arith.mulf %4, %5 : vector<1x512xf32>
    %7 = arith.mulf %2, %2 : vector<256x512xf32>
    %cst_5 = arith.constant dense<0.000000e+00> : vector<512xf32>
    %8 = vector.multi_reduction <add>, %7, %cst_5 [0] : vector<256x512xf32> to vector<512xf32>
    %9 = vector.shape_cast %8 : vector<512xf32> to vector<1x512xf32>
    %cst_6 = arith.constant 3.906250e-03 : f32
    %10 = vector.broadcast %cst_6 : f32 to vector<1x512xf32>
    %11 = arith.mulf %9, %10 : vector<1x512xf32>
    %12 = arith.mulf %6, %6 : vector<1x512xf32>
    %13 = arith.subf %11, %12 : vector<1x512xf32>
    %cst_7 = arith.constant 0.000000e+00 : f32
    %14 = vector.broadcast %cst_7 : f32 to vector<1x512xf32>
    %15 = arith.maximumf %13, %14 : vector<1x512xf32>
    %cst_8 = arith.constant 9.99999974E-6 : f32
    %16 = vector.broadcast %cst_8 : f32 to vector<1x512xf32>
    %17 = arith.addf %15, %16 : vector<1x512xf32>
    %18 = math.rsqrt %17 : vector<1x512xf32>
    %c0_9 = arith.constant 0 : index
    %c0_10 = arith.constant 0 : index
    %19 = vector.load %arg2[%c0_9, %c0_10] : memref<1x512xf32, #tpu.memory_space<vmem>>, vector<1x512xf32>
    %20 = arith.mulf %19, %18 : vector<1x512xf32>
    %c0_11 = arith.constant 0 : index
    %c0_12 = arith.constant 0 : index
    %21 = vector.load %arg3[%c0_11, %c0_12] : memref<1x512xf32, #tpu.memory_space<vmem>>, vector<1x512xf32>
    %22 = arith.mulf %6, %20 : vector<1x512xf32>
    %23 = arith.subf %21, %22 : vector<1x512xf32>
    %24 = vector.broadcast %20 : vector<1x512xf32> to vector<256x512xf32>
    %25 = arith.mulf %2, %24 : vector<256x512xf32>
    %26 = vector.broadcast %23 : vector<1x512xf32> to vector<256x512xf32>
    %27 = arith.addf %25, %26 : vector<256x512xf32>
    %cst_13 = arith.constant 0.000000e+00 : f32
    %28 = vector.broadcast %cst_13 : f32 to vector<256x512xf32>
    %29 = arith.maximumf %27, %28 : vector<256x512xf32>
    %c0_14 = arith.constant 0 : index
    %c0_15 = arith.constant 0 : index
    %30 = vector.load %arg4[%c0_14, %c0_15] : memref<512x256xf32, #tpu.memory_space<vmem>>, vector<512x256xf32>
    %cst_16 = arith.constant dense<0.000000e+00> : vector<256x256xf32>
    %31 = tpu.matmul %29, %30, %cst_16 {dimension_numbers = #tpu.dot_dimension_numbers<[1], [0], [0], [1], [0, 0, 1, 1], [], []>} : vector<256x512xf32>, vector<512x256xf32>, vector<256x256xf32> -> vector<256x256xf32>
    %c0_17 = arith.constant 0 : index
    %c0_18 = arith.constant 0 : index
    %32 = vector.load %arg5[%c0_17, %c0_18] : memref<1x256xf32, #tpu.memory_space<vmem>>, vector<1x256xf32>
    %33 = vector.broadcast %32 : vector<1x256xf32> to vector<256x256xf32>
    %34 = arith.addf %31, %33 : vector<256x256xf32>
    %cst_19 = arith.constant 0.000000e+00 : f32
    %35 = vector.broadcast %cst_19 : f32 to vector<256x256xf32>
    %36 = arith.maximumf %34, %35 : vector<256x256xf32>
    %c0_20 = arith.constant 0 : index
    %c0_21 = arith.constant 0 : index
    %37 = vector.load %arg6[%c0_20, %c0_21] : memref<256x128xf32, #tpu.memory_space<vmem>>, vector<256x128xf32>
    %cst_22 = arith.constant dense<0.000000e+00> : vector<256x128xf32>
    %38 = tpu.matmul %36, %37, %cst_22 {dimension_numbers = #tpu.dot_dimension_numbers<[1], [0], [0], [1], [0, 0, 1, 1], [], []>} : vector<256x256xf32>, vector<256x128xf32>, vector<256x128xf32> -> vector<256x128xf32>
    %c0_23 = arith.constant 0 : index
    %c0_24 = arith.constant 0 : index
    %39 = vector.load %arg7[%c0_23, %c0_24] : memref<1x128xf32, #tpu.memory_space<vmem>>, vector<1x128xf32>
    %40 = vector.broadcast %39 : vector<1x128xf32> to vector<256x128xf32>
    %41 = arith.addf %38, %40 : vector<256x128xf32>
    %cst_25 = arith.constant 0.000000e+00 : f32
    %42 = vector.broadcast %cst_25 : f32 to vector<256x128xf32>
    %43 = arith.maximumf %41, %42 : vector<256x128xf32>
    %c0_26 = arith.constant 0 : index
    %c0_27 = arith.constant 0 : index
    %44 = vector.load %arg8[%c0_26, %c0_27] : memref<128x128xf32, #tpu.memory_space<vmem>>, vector<128x128xf32>
    %cst_28 = arith.constant dense<0.000000e+00> : vector<256x128xf32>
    %45 = tpu.matmul %43, %44, %cst_28 {dimension_numbers = #tpu.dot_dimension_numbers<[1], [0], [0], [1], [0, 0, 1, 1], [], []>} : vector<256x128xf32>, vector<128x128xf32>, vector<256x128xf32> -> vector<256x128xf32>
    %c0_29 = arith.constant 0 : index
    %c0_30 = arith.constant 0 : index
    %46 = vector.load %arg9[%c0_29, %c0_30] : memref<1x128xf32, #tpu.memory_space<vmem>>, vector<1x128xf32>
    %47 = vector.broadcast %46 : vector<1x128xf32> to vector<256x128xf32>
    %48 = arith.addf %45, %47 : vector<256x128xf32>
    %c0_31 = arith.constant 0 : index
    %c0_32 = arith.constant 0 : index
    %49 = vector.load %arg10[%c0_31, %c0_32] : memref<256x128xf32, #tpu.memory_space<vmem>>, vector<256x128xf32>
    tpu.vector_store %arg10[%c0_31, %c0_32], %48 {strides = array<i32>} : memref<256x128xf32, #tpu.memory_space<vmem>>, vector<256x128xf32>,
    return
  }
}

</mosaic_0001>

<llo_original>
// kernel: tpu_custom_call.1
$region0: #{tpu_custom_call.1}
  #allocation0 [shape = 'u32[]', space=smem, size = 0x4, offset = 0x4, fixed_abs, tag = 'smem constant byte address 0x4 - core index']
  #allocation1 [shape = 'u32[72,128]{1,0:T(1,128)}', space=vmem, size = 0x9000, scoped, tag = 'internal scratch']
  %s0 = inlined_call_operand.vmem [shape: f32[256,64], index: 0, kind: input, shape index: {}]
  %s1 = inlined_call_operand.vmem [shape: f32[64,512], index: 1, kind: input, shape index: {}]
  %s2 = inlined_call_operand.hbm [shape: f32[1,512], index: 2, kind: input, shape index: {}]
  %s3 = inlined_call_operand.hbm [shape: f32[1,512], index: 3, kind: input, shape index: {}]
  %s4 = inlined_call_operand.hbm [shape: f32[512,256], index: 4, kind: input, shape index: {}]
  %s5 = inlined_call_operand.vmem [shape: f32[1,256], index: 5, kind: input, shape index: {}]
  %s6 = inlined_call_operand.hbm [shape: f32[256,128], index: 6, kind: input, shape index: {}]
  %s7 = inlined_call_operand.vmem [shape: f32[1,128], index: 7, kind: input, shape index: {}]
  %s8 = inlined_call_operand.vmem [shape: f32[128,128], index: 8, kind: input, shape index: {}]
  %s9 = inlined_call_operand.vmem [shape: f32[1,128], index: 9, kind: input, shape index: {}]
  %s10 = inlined_call_operand.hbm [shape: f32[256,128], index: 10, kind: output, shape index: {}]
  %s11 = sld [smem:[#allocation0]]
  $region66: #{tpu_custom_call.1} parent=0
    _
  %s13 = ssub.s32 1, %s11
  %s14 = scalar_select 0, %s13, %s11
  $region1: #{tpu_custom_call.1} parent=0
    #allocation2 [shape = 'u8[2048]{0}', space=vmem, size = 0x800, scoped, tag = 'input window, operand 2, single buffered']
    #allocation3 [shape = 's32[1]{0}', space=sflag, size = 0x4, scoped, tag = 'scoped memory for tpu_custom_call.1']
    #allocation4 [shape = 's32[1]{0}', space=sflag, size = 0x4, scoped, tag = 'scoped memory for tpu_custom_call.1']
    #allocation5 [shape = 'u8[2048]{0}', space=vmem, size = 0x800, scoped, tag = 'input window, operand 3, single buffered']
    #allocation6 [shape = 's32[1]{0}', space=sflag, size = 0x4, scoped, tag = 'scoped memory for tpu_custom_call.1']
    #allocation7 [shape = 'u8[524288]{0}', space=vmem, size = 0x80000, scoped, tag = 'input window, operand 4, single buffered']
    #allocation8 [shape = 'u8[131072]{0}', space=vmem, size = 0x20000, scoped, tag = 'input window, operand 6, single buffered']
    #allocation9 [shape = 's32[1]{0}', space=sflag, size = 0x4, scoped, tag = 'scoped memory for tpu_custom_call.1']
    #allocation10 [shape = 'u8[131072]{0}', space=vmem, size = 0x20000, scoped, tag = 'output window, operand 0, single buffered']
    %15 = vsyncpa [#allocation3], 0
    %16 = vsyncpa [#allocation6], 0
    %17 = vsyncpa [#allocation9], 0
    %18 = vsyncpa [#allocation4], 0
    // Predicated region
    $region2: #{tpu_custom_call.1} parent=1 // pred_check
      _
    $region3: #{tpu_custom_call.1} parent=1 // pred_check_branch
      %20 = sbr.rel (0) target = $region5
    $region4: #{tpu_custom_call.1} parent=1 // pred_region
      _
    $region5: #{tpu_custom_call.1} parent=1 // pred_fallthru
      _
    // Predicated region
    $region6: #{tpu_custom_call.1} parent=1 // pred_check
      _
    $region7: #{tpu_custom_call.1} parent=1 // pred_check_branch
      %22 = sbr.rel (0) target = $region9
    $region8: #{tpu_custom_call.1} parent=1 // pred_region
      _
    $region9: #{tpu_custom_call.1} parent=1 // pred_fallthru
      _
    // Predicated region
    $region10: #{tpu_custom_call.1} parent=1 // pred_check
      _
    $region11: #{tpu_custom_call.1} parent=1 // pred_check_branch
      %24 = sbr.rel (0) target = $region13
    $region12: #{tpu_custom_call.1} parent=1 // pred_region
      %26 = vsyncadd [#allocation3], 0
      %s28 = sshll.u32 %s2, 4
      %s29 = int_to_ptr.hbm [resolvable:$true] %s28
      %s30 = sshll.u32 [#allocation2], 4
      %s31 = int_to_ptr.vmem [resolvable:$true] %s30
      %33 = dma.hbm_to_vmem [thread:$0]  %s29, 64, %s31, [#allocation3]
    $region13: #{tpu_custom_call.1} parent=1 // pred_fallthru
      _
    // Predicated region
    $region14: #{tpu_custom_call.1} parent=1 // pred_check
      _
    $region15: #{tpu_custom_call.1} parent=1 // pred_check_branch
      %35 = sbr.rel (0) target = $region17
    $region16: #{tpu_custom_call.1} parent=1 // pred_region
      %37 = vsyncadd [#allocation6], 0
      %s39 = sshll.u32 %s3, 4
      %s40 = int_to_ptr.hbm [resolvable:$true] %s39
      %s41 = sshll.u32 [#allocation5], 4
      %s42 = int_to_ptr.vmem [resolvable:$true] %s41
      %44 = dma.hbm_to_vmem [thread:$0]  %s40, 64, %s42, [#allocation6]
    $region17: #{tpu_custom_call.1} parent=1 // pred_fallthru
      _
    // Predicated region
    $region18: #{tpu_custom_call.1} parent=1 // pred_check
      _
    $region19: #{tpu_custom_call.1} parent=1 // pred_check_branch
      %46 = sbr.rel (0) target = $region21
    $region20: #{tpu_custom_call.1} parent=1 // pred_region
      %48 = vsyncadd [#allocation6], 0
      %s49 = sshll.u32 %s4, 4
      %s50 = int_to_ptr.hbm [resolvable:$true] %s49
      %s51 = sshll.u32 [#allocation7], 4
      %s52 = int_to_ptr.vmem [resolvable:$true] %s51
      %57 = dma.hbm_to_vmem [thread:$0]  %s50, 16384, %s52, [#allocation6], 256, 256, 16
    $region21: #{tpu_custom_call.1} parent=1 // pred_fallthru
      _
    // Predicated region
    $region22: #{tpu_custom_call.1} parent=1 // pred_check
      _
    $region23: #{tpu_custom_call.1} parent=1 // pred_check_branch
      %59 = sbr.rel (0) target = $region25
    $region24: #{tpu_custom_call.1} parent=1 // pred_region
      _
    $region25: #{tpu_custom_call.1} parent=1 // pred_fallthru
      _
    // Predicated region
    $region26: #{tpu_custom_call.1} parent=1 // pred_check
      _
    $region27: #{tpu_custom_call.1} parent=1 // pred_check_branch
      %61 = sbr.rel (0) target = $region29
    $region28: #{tpu_custom_call.1} parent=1 // pred_region
      %63 = vsyncadd [#allocation9], 0
      %s64 = sshll.u32 %s6, 4
      %s65 = int_to_ptr.hbm [resolvable:$true] %s64
      %s66 = sshll.u32 [#allocation8], 4
      %s67 = int_to_ptr.vmem [resolvable:$true] %s66
      %72 = dma.hbm_to_vmem [thread:$0]  %s65, 4096, %s67, [#allocation9], 128, 128, 8
    $region29: #{tpu_custom_call.1} parent=1 // pred_fallthru
      _
    // Predicated region
    $region30: #{tpu_custom_call.1} parent=1 // pred_check
      _
    $region31: #{tpu_custom_call.1} parent=1 // pred_check_branch
      %74 = sbr.rel (0) target = $region33
    $region32: #{tpu_custom_call.1} parent=1 // pred_region
      _
    $region33: #{tpu_custom_call.1} parent=1 // pred_fallthru
      _
    // Predicated region
    $region34: #{tpu_custom_call.1} parent=1 // pred_check
      _
    $region35: #{tpu_custom_call.1} parent=1 // pred_check_branch
      %76 = sbr.rel (0) target = $region37
    $region36: #{tpu_custom_call.1} parent=1 // pred_region
      _
    $region37: #{tpu_custom_call.1} parent=1 // pred_fallthru
      _
    // Predicated region
    $region38: #{tpu_custom_call.1} parent=1 // pred_check
      _
    $region39: #{tpu_custom_call.1} parent=1 // pred_check_branch
      %78 = sbr.rel (0) target = $region41
    $region40: #{tpu_custom_call.1} parent=1 // pred_region
      _
    $region41: #{tpu_custom_call.1} parent=1 // pred_fallthru
      _
    // Predicated region
    $region42: #{tpu_custom_call.1} parent=1 // pred_check
      _
    $region43: #{tpu_custom_call.1} parent=1 // pred_check_branch
      %80 = sbr.rel (0) target = $region45
    $region44: #{tpu_custom_call.1} parent=1 // pred_region
      %82 = dma.done [#allocation3], 64
    $region45: #{tpu_custom_call.1} parent=1 // pred_fallthru
      _
    // Predicated region
    $region46: #{tpu_custom_call.1} parent=1 // pred_check
      _
    $region47: #{tpu_custom_call.1} parent=1 // pred_check_branch
      %84 = sbr.rel (0) target = $region49
    $region48: #{tpu_custom_call.1} parent=1 // pred_region
      %86 = dma.done [#allocation6], 64
    $region49: #{tpu_custom_call.1} parent=1 // pred_fallthru
      _
    // Predicated region
    $region50: #{tpu_custom_call.1} parent=1 // pred_check
      _
    $region51: #{tpu_custom_call.1} parent=1 // pred_check_branch
      %88 = sbr.rel (0) target = $region53
    $region52: #{tpu_custom_call.1} parent=1 // pred_region
      %90 = dma.done [#allocation6], 16384
    $region53: #{tpu_custom_call.1} parent=1 // pred_fallthru
      _
    // Predicated region
    $region54: #{tpu_custom_call.1} parent=1 // pred_check
      _
    $region55: #{tpu_custom_call.1} parent=1 // pred_check_branch
      %92 = sbr.rel (0) target = $region57
    $region56: #{tpu_custom_call.1} parent=1 // pred_region
      %94 = dma.done [#allocation9], 4096
    $region57: #{tpu_custom_call.1} parent=1 // pred_fallthru
      _
    %v95 = vld [vmem:[%s0] sm:$0xff]
    %v96 = vld [vmem:[%s0 + $0x8] sm:$0xff]
    %v97 = vld [vmem:[%s0 + $0x10] sm:$0xff]
    %v98 = vld [vmem:[%s0 + $0x18] sm:$0xff]
    %v99 = vld [vmem:[%s0 + $0x20] sm:$0xff]
    %v100 = vld [vmem:[%s0 + $0x28] sm:$0xff]
    %v101 = vld [vmem:[%s0 + $0x30] sm:$0xff]
    %v102 = vld [vmem:[%s0 + $0x38] sm:$0xff]
    %v103 = vld [vmem:[%s0 + $0x40] sm:$0xff]
    %v104 = vld [vmem:[%s0 + $0x48] sm:$0xff]
    %v105 = vld [vmem:[%s0 + $0x50] sm:$0xff]
    %v106 = vld [vmem:[%s0 + $0x58] sm:$0xff]
    %v107 = vld [vmem:[%s0 + $0x60] sm:$0xff]
    %v108 = vld [vmem:[%s0 + $0x68] sm:$0xff]
    %v109 = vld [vmem:[%s0 + $0x70] sm:$0xff]
    %v110 = vld [vmem:[%s0 + $0x78] sm:$0xff]
    %v111 = vld [vmem:[%s0 + $0x80] sm:$0xff]
    %v112 = vld [vmem:[%s0 + $0x88] sm:$0xff]
    %v113 = vld [vmem:[%s0 + $0x90] sm:$0xff]
    %v114 = vld [vmem:[%s0 + $0x98] sm:$0xff]
    %v115 = vld [vmem:[%s0 + $0xa0] sm:$0xff]
    %v116 = vld [vmem:[%s0 + $0xa8] sm:$0xff]
    %v117 = vld [vmem:[%s0 + $0xb0] sm:$0xff]
    %v118 = vld [vmem:[%s0 + $0xb8] sm:$0xff]
    %v119 = vld [vmem:[%s0 + $0xc0] sm:$0xff]
    %v120 = vld [vmem:[%s0 + $0xc8] sm:$0xff]
    %v121 = vld [vmem:[%s0 + $0xd0] sm:$0xff]
    %v122 = vld [vmem:[%s0 + $0xd8] sm:$0xff]
    %v123 = vld [vmem:[%s0 + $0xe0] sm:$0xff]
    %v124 = vld [vmem:[%s0 + $0xe8] sm:$0xff]
    %v125 = vld [vmem:[%s0 + $0xf0] sm:$0xff]
    %v126 = vld [vmem:[%s0 + $0xf8] sm:$0xff]
    %v127 = vld [vmem:[%s1] sm:$0xff]
    %v128 = vld [vmem:[%s1 + $0x8] sm:$0xff]
    %v129 = vld [vmem:[%s1 + $0x10] sm:$0xff]
    %v130 = vld [vmem:[%s1 + $0x18] sm:$0xff]
    %v131 = vld [vmem:[%s1 + $0x20] sm:$0xff]
    %v132 = vld [vmem:[%s1 + $0x28] sm:$0xff]
    %v133 = vld [vmem:[%s1 + $0x30] sm:$0xff]
    %v134 = vld [vmem:[%s1 + $0x38] sm:$0xff]
    %v135 = vld [vmem:[%s1 + $0x40] sm:$0xff]
    %v136 = vld [vmem:[%s1 + $0x48] sm:$0xff]
    %v137 = vld [vmem:[%s1 + $0x50] sm:$0xff]
    %v138 = vld [vmem:[%s1 + $0x58] sm:$0xff]
    %v139 = vld [vmem:[%s1 + $0x60] sm:$0xff]
    %v140 = vld [vmem:[%s1 + $0x68] sm:$0xff]
    %v141 = vld [vmem:[%s1 + $0x70] sm:$0xff]
    %v142 = vld [vmem:[%s1 + $0x78] sm:$0xff]
    %v143 = vld [vmem:[%s1 + $0x80] sm:$0xff]
    %v144 = vld [vmem:[%s1 + $0x88] sm:$0xff]
    %v145 = vld [vmem:[%s1 + $0x90] sm:$0xff]
    %v146 = vld [vmem:[%s1 + $0x98] sm:$0xff]
    %v147 = vld [vmem:[%s1 + $0xa0] sm:$0xff]
    %v148 = vld [vmem:[%s1 + $0xa8] sm:$0xff]
    %v149 = vld [vmem:[%s1 + $0xb0] sm:$0xff]
    %v150 = vld [vmem:[%s1 + $0xb8] sm:$0xff]
    %v151 = vld [vmem:[%s1 + $0xc0] sm:$0xff]
    %v152 = vld [vmem:[%s1 + $0xc8] sm:$0xff]
    %v153 = vld [vmem:[%s1 + $0xd0] sm:$0xff]
    %v154 = vld [vmem:[%s1 + $0xd8] sm:$0xff]
    %v155 = vld [vmem:[%s1 + $0xe0] sm:$0xff]
    %v156 = vld [vmem:[%s1 + $0xe8] sm:$0xff]
    %v157 = vld [vmem:[%s1 + $0xf0] sm:$0xff]
    %v158 = vld [vmem:[%s1 + $0xf8] sm:$0xff]
    %vm159 = vcmask 523264
    %v161 = vsel %vm159, %v95, 0
    %v164 = vsel %vm159, %v96, 0
    %v167 = vsel %vm159, %v97, 0
    %v170 = vsel %vm159, %v98, 0
    %v173 = vsel %vm159, %v99, 0
    %v176 = vsel %vm159, %v100, 0
    %v179 = vsel %vm159, %v101, 0
    %v182 = vsel %vm159, %v102, 0
    %v185 = vsel %vm159, %v103, 0
    %v188 = vsel %vm159, %v104, 0
    %v191 = vsel %vm159, %v105, 0
    %v194 = vsel %vm159, %v106, 0
    %v197 = vsel %vm159, %v107, 0
    %v200 = vsel %vm159, %v108, 0
    %v203 = vsel %vm159, %v109, 0
    %v206 = vsel %vm159, %v110, 0
    %v209 = vsel %vm159, %v111, 0
    %v212 = vsel %vm159, %v112, 0
    %v215 = vsel %vm159, %v113, 0
    %v218 = vsel %vm159, %v114, 0
    %v221 = vsel %vm159, %v115, 0
    %v224 = vsel %vm159, %v116, 0
    %v227 = vsel %vm159, %v117, 0
    %v230 = vsel %vm159, %v118, 0
    %v233 = vsel %vm159, %v119, 0
    %v236 = vsel %vm159, %v120, 0
    %v239 = vsel %vm159, %v121, 0
    %v242 = vsel %vm159, %v122, 0
    %v245 = vsel %vm159, %v123, 0
    %v248 = vsel %vm159, %v124, 0
    %v251 = vsel %vm159, %v125, 0
    %v254 = vsel %vm159, %v126, 0
    %256 = vmatpush.msra.mxu0 0.0
    %257 = vmatpush.msra.mxu0 0.0
    %258 = vmatpush.msra.mxu0 0.0
    %259 = vmatpush.msra.mxu0 0.0
    %260 = vmatpush.msra.mxu0 0.0
    %261 = vmatpush.msra.mxu0 0.0
    %262 = vmatpush.msra.mxu0 0.0
    %263 = vmatpush.msra.mxu0 0.0
    %264 = vmatpush.msra.mxu0 %v155
    %265 = vmatpush.msra.mxu0 %v151
    %266 = vmatpush.msra.mxu0 %v147
    %267 = vmatpush.msra.mxu0 %v143
    %268 = vmatpush.msra.mxu0 %v139
    %269 = vmatpush.msra.mxu0 %v135
    %270 = vmatpush.msra.mxu0 %v131
    %271 = vmatpush.msra.mxu0 %v127
    %272 = vmatmul.f32.gmra.mxu0 %v161
    %v273 = vpop.f32.mrf.mxu0
    %v274 = vadd.f32 0.0, %v273
    %275 = vmatmul.f32.gmra.mxu0 %v164
    %v276 = vpop.f32.mrf.mxu0
    %v277 = vadd.f32 0.0, %v276
    %278 = vmatmul.f32.gmra.mxu0 %v167
    %v279 = vpop.f32.mrf.mxu0
    %v280 = vadd.f32 0.0, %v279
    %281 = vmatmul.f32.gmra.mxu0 %v170
    %v282 = vpop.f32.mrf.mxu0
    %v283 = vadd.f32 0.0, %v282
    %284 = vmatmul.f32.gmra.mxu0 %v173
    %v285 = vpop.f32.mrf.mxu0
    %v286 = vadd.f32 0.0, %v285
    %287 = vmatmul.f32.gmra.mxu0 %v176
    %v288 = vpop.f32.mrf.mxu0
    %v289 = vadd.f32 0.0, %v288
    %290 = vmatmul.f32.gmra.mxu0 %v179
    %v291 = vpop.f32.mrf.mxu0
    %v292 = vadd.f32 0.0, %v291
    %293 = vmatmul.f32.gmra.mxu0 %v182
    %v294 = vpop.f32.mrf.mxu0
    %v295 = vadd.f32 0.0, %v294
    %296 = vmatmul.f32.gmra.mxu0 %v185
    %v297 = vpop.f32.mrf.mxu0
    %v298 = vadd.f32 0.0, %v297
    %299 = vmatmul.f32.gmra.mxu0 %v188
    %v300 = vpop.f32.mrf.mxu0
    %v301 = vadd.f32 0.0, %v300
    %302 = vmatmul.f32.gmra.mxu0 %v191
    %v303 = vpop.f32.mrf.mxu0
    %v304 = vadd.f32 0.0, %v303
    %305 = vmatmul.f32.gmra.mxu0 %v194
    %v306 = vpop.f32.mrf.mxu0
    %v307 = vadd.f32 0.0, %v306
    %308 = vmatmul.f32.gmra.mxu0 %v197
    %v309 = vpop.f32.mrf.mxu0
    %v310 = vadd.f32 0.0, %v309
    %311 = vmatmul.f32.gmra.mxu0 %v200
    %v312 = vpop.f32.mrf.mxu0
    %v313 = vadd.f32 0.0, %v312
    %314 = vmatmul.f32.gmra.mxu0 %v203
    %v315 = vpop.f32.mrf.mxu0
    %v316 = vadd.f32 0.0, %v315
    %317 = vmatmul.f32.gmra.mxu0 %v206
    %v318 = vpop.f32.mrf.mxu0
    %v319 = vadd.f32 0.0, %v318
    %320 = vmatmul.f32.gmra.mxu0 %v209
    %v321 = vpop.f32.mrf.mxu0
    %v322 = vadd.f32 0.0, %v321
    %323 = vmatmul.f32.gmra.mxu0 %v212
    %v324 = vpop.f32.mrf.mxu0
    %v325 = vadd.f32 0.0, %v324
    %326 = vmatmul.f32.gmra.mxu0 %v215
    %v327 = vpop.f32.mrf.mxu0
    %v328 = vadd.f32 0.0, %v327
    %329 = vmatmul.f32.gmra.mxu0 %v218
    %v330 = vpop.f32.mrf.mxu0
    %v331 = vadd.f32 0.0, %v330
    %332 = vmatmul.f32.gmra.mxu0 %v221
    %v333 = vpop.f32.mrf.mxu0
    %v334 = vadd.f32 0.0, %v333
    %335 = vmatmul.f32.gmra.mxu0 %v224
    %v336 = vpop.f32.mrf.mxu0
    %v337 = vadd.f32 0.0, %v336
    %338 = vmatmul.f32.gmra.mxu0 %v227
    %v339 = vpop.f32.mrf.mxu0
    %v340 = vadd.f32 0.0, %v339
    %341 = vmatmul.f32.gmra.mxu0 %v230
    %v342 = vpop.f32.mrf.mxu0
    %v343 = vadd.f32 0.0, %v342
    %344 = vmatmul.f32.gmra.mxu0 %v233
    %v345 = vpop.f32.mrf.mxu0
    %v346 = vadd.f32 0.0, %v345
    %347 = vmatmul.f32.gmra.mxu0 %v236
    %v348 = vpop.f32.mrf.mxu0
    %v349 = vadd.f32 0.0, %v348
    %350 = vmatmul.f32.gmra.mxu0 %v239
    %v351 = vpop.f32.mrf.mxu0
    %v352 = vadd.f32 0.0, %v351
    %353 = vmatmul.f32.gmra.mxu0 %v242
    %v354 = vpop.f32.mrf.mxu0
    %v355 = vadd.f32 0.0, %v354
    %356 = vmatmul.f32.gmra.mxu0 %v245
    %v357 = vpop.f32.mrf.mxu0
    %v358 = vadd.f32 0.0, %v357
    %359 = vmatmul.f32.gmra.mxu0 %v248
    %v360 = vpop.f32.mrf.mxu0
    %v361 = vadd.f32 0.0, %v360
    %362 = vmatmul.f32.gmra.mxu0 %v251
    %v363 = vpop.f32.mrf.mxu0
    %v364 = vadd.f32 0.0, %v363
    %365 = vmatmul.f32.gmra.mxu0 %v254
    %v366 = vpop.f32.mrf.mxu0
    %v367 = vadd.f32 0.0, %v366
    %368 = vdwg.mxu0
    %369 = vmatpush.msra.mxu0 0.0
    %370 = vmatpush.msra.mxu0 0.0
    %371 = vmatpush.msra.mxu0 0.0
    %372 = vmatpush.msra.mxu0 0.0
    %373 = vmatpush.msra.mxu0 0.0
    %374 = vmatpush.msra.mxu0 0.0
    %375 = vmatpush.msra.mxu0 0.0
    %376 = vmatpush.msra.mxu0 0.0
    %377 = vmatpush.msra.mxu0 %v156
    %378 = vmatpush.msra.mxu0 %v152
    %379 = vmatpush.msra.mxu0 %v148
    %380 = vmatpush.msra.mxu0 %v144
    %381 = vmatpush.msra.mxu0 %v140
    %382 = vmatpush.msra.mxu0 %v136
    %383 = vmatpush.msra.mxu0 %v132
    %384 = vmatpush.msra.mxu0 %v128
    %385 = vmatmul.f32.gmra.mxu0 %v161
    %v386 = vpop.f32.mrf.mxu0
    %v387 = vadd.f32 0.0, %v386
    %388 = vmatmul.f32.gmra.mxu0 %v164
    %v389 = vpop.f32.mrf.mxu0
    %v390 = vadd.f32 0.0, %v389
    %391 = vmatmul.f32.gmra.mxu0 %v167
    %v392 = vpop.f32.mrf.mxu0
    %v393 = vadd.f32 0.0, %v392
    %394 = vmatmul.f32.gmra.mxu0 %v170
    %v395 = vpop.f32.mrf.mxu0
    %v396 = vadd.f32 0.0, %v395
    %397 = vmatmul.f32.gmra.mxu0 %v173
    %v398 = vpop.f32.mrf.mxu0
    %v399 = vadd.f32 0.0, %v398
    %400 = vmatmul.f32.gmra.mxu0 %v176
    %v401 = vpop.f32.mrf.mxu0
    %v402 = vadd.f32 0.0, %v401
    %403 = vmatmul.f32.gmra.mxu0 %v179
    %v404 = vpop.f32.mrf.mxu0
    %v405 = vadd.f32 0.0, %v404
    %406 = vmatmul.f32.gmra.mxu0 %v182
    %v407 = vpop.f32.mrf.mxu0
    %v408 = vadd.f32 0.0, %v407
    %409 = vmatmul.f32.gmra.mxu0 %v185
    %v410 = vpop.f32.mrf.mxu0
    %v411 = vadd.f32 0.0, %v410
    %412 = vmatmul.f32.gmra.mxu0 %v188
    %v413 = vpop.f32.mrf.mxu0
    %v414 = vadd.f32 0.0, %v413
    %415 = vmatmul.f32.gmra.mxu0 %v191
    %v416 = vpop.f32.mrf.mxu0
    %v417 = vadd.f32 0.0, %v416
    %418 = vmatmul.f32.gmra.mxu0 %v194
    %v419 = vpop.f32.mrf.mxu0
    %v420 = vadd.f32 0.0, %v419
    %421 = vmatmul.f32.gmra.mxu0 %v197
    %v422 = vpop.f32.mrf.mxu0
    %v423 = vadd.f32 0.0, %v422
    %424 = vmatmul.f32.gmra.mxu0 %v200
    %v425 = vpop.f32.mrf.mxu0
    %v426 = vadd.f32 0.0, %v425
    %427 = vmatmul.f32.gmra.mxu0 %v203
    %v428 = vpop.f32.mrf.mxu0
    %v429 = vadd.f32 0.0, %v428
    %430 = vmatmul.f32.gmra.mxu0 %v206
    %v431 = vpop.f32.mrf.mxu0
    %v432 = vadd.f32 0.0, %v431
    %433 = vmatmul.f32.gmra.mxu0 %v209
    %v434 = vpop.f32.mrf.mxu0
    %v435 = vadd.f32 0.0, %v434
    %436 = vmatmul.f32.gmra.mxu0 %v212
    %v437 = vpop.f32.mrf.mxu0
    %v438 = vadd.f32 0.0, %v437
    %439 = vmatmul.f32.gmra.mxu0 %v215
    %v440 = vpop.f32.mrf.mxu0
    %v441 = vadd.f32 0.0, %v440
    %442 = vmatmul.f32.gmra.mxu0 %v218
    %v443 = vpop.f32.mrf.mxu0
    %v444 = vadd.f32 0.0, %v443
    %445 = vmatmul.f32.gmra.mxu0 %v221
    %v446 = vpop.f32.mrf.mxu0
    %v447 = vadd.f32 0.0, %v446
    %448 = vmatmul.f32.gmra.mxu0 %v224
    %v449 = vpop.f32.mrf.mxu0
    %v450 = vadd.f32 0.0, %v449
    %451 = vmatmul.f32.gmra.mxu0 %v227
    %v452 = vpop.f32.mrf.mxu0
    %v453 = vadd.f32 0.0, %v452
    %454 = vmatmul.f32.gmra.mxu0 %v230
    %v455 = vpop.f32.mrf.mxu0
    %v456 = vadd.f32 0.0, %v455
    %457 = vmatmul.f32.gmra.mxu0 %v233
    %v458 = vpop.f32.mrf.mxu0
    %v459 = vadd.f32 0.0, %v458
    %460 = vmatmul.f32.gmra.mxu0 %v236
    %v461 = vpop.f32.mrf.mxu0
    %v462 = vadd.f32 0.0, %v461
    %463 = vmatmul.f32.gmra.mxu0 %v239
    %v464 = vpop.f32.mrf.mxu0
    %v465 = vadd.f32 0.0, %v464
    %466 = vmatmul.f32.gmra.mxu0 %v242
    %v467 = vpop.f32.mrf.mxu0
    %v468 = vadd.f32 0.0, %v467
    %469 = vmatmul.f32.gmra.mxu0 %v245
    %v470 = vpop.f32.mrf.mxu0
    %v471 = vadd.f32 0.0, %v470
    %472 = vmatmul.f32.gmra.mxu0 %v248
    %v473 = vpop.f32.mrf.mxu0
    %v474 = vadd.f32 0.0, %v473
    %475 = vmatmul.f32.gmra.mxu0 %v251
    %v476 = vpop.f32.mrf.mxu0
    %v477 = vadd.f32 0.0, %v476
    %478 = vmatmul.f32.gmra.mxu0 %v254
    %v479 = vpop.f32.mrf.mxu0
    %v480 = vadd.f32 0.0, %v479
    %481 = vdwg.mxu0
    %482 = vmatpush.msra.mxu0 0.0
    %483 = vmatpush.msra.mxu0 0.0
    %484 = vmatpush.msra.mxu0 0.0
    %485 = vmatpush.msra.mxu0 0.0
    %486 = vmatpush.msra.mxu0 0.0
    %487 = vmatpush.msra.mxu0 0.0
    %488 = vmatpush.msra.mxu0 0.0
    %489 = vmatpush.msra.mxu0 0.0
    %490 = vmatpush.msra.mxu0 %v157
    %491 = vmatpush.msra.mxu0 %v153
    %492 = vmatpush.msra.mxu0 %v149
    %493 = vmatpush.msra.mxu0 %v145
    %494 = vmatpush.msra.mxu0 %v141
    %495 = vmatpush.msra.mxu0 %v137
    %496 = vmatpush.msra.mxu0 %v133
    %497 = vmatpush.msra.mxu0 %v129
    %498 = vmatmul.f32.gmra.mxu0 %v161
    %v499 = vpop.f32.mrf.mxu0
    %v500 = vadd.f32 0.0, %v499
    %501 = vmatmul.f32.gmra.mxu0 %v164
    %v502 = vpop.f32.mrf.mxu0
    %v503 = vadd.f32 0.0, %v502
    %504 = vmatmul.f32.gmra.mxu0 %v167
    %v505 = vpop.f32.mrf.mxu0
    %v506 = vadd.f32 0.0, %v505
    %507 = vmatmul.f32.gmra.mxu0 %v170
    %v508 = vpop.f32.mrf.mxu0
    %v509 = vadd.f32 0.0, %v508
    %510 = vmatmul.f32.gmra.mxu0 %v173
    %v511 = vpop.f32.mrf.mxu0
    %v512 = vadd.f32 0.0, %v511
    %513 = vmatmul.f32.gmra.mxu0 %v176
    %v514 = vpop.f32.mrf.mxu0
    %v515 = vadd.f32 0.0, %v514
    %516 = vmatmul.f32.gmra.mxu0 %v179
    %v517 = vpop.f32.mrf.mxu0
    %v518 = vadd.f32 0.0, %v517
    %519 = vmatmul.f32.gmra.mxu0 %v182
    %v520 = vpop.f32.mrf.mxu0
    %v521 = vadd.f32 0.0, %v520
    %522 = vmatmul.f32.gmra.mxu0 %v185
    %v523 = vpop.f32.mrf.mxu0
    %v524 = vadd.f32 0.0, %v523
    %525 = vmatmul.f32.gmra.mxu0 %v188
    %v526 = vpop.f32.mrf.mxu0
    %v527 = vadd.f32 0.0, %v526
    %528 = vmatmul.f32.gmra.mxu0 %v191
    %v529 = vpop.f32.mrf.mxu0
    %v530 = vadd.f32 0.0, %v529
    %531 = vmatmul.f32.gmra.mxu0 %v194
    %v532 = vpop.f32.mrf.mxu0
    %v533 = vadd.f32 0.0, %v532
    %534 = vmatmul.f32.gmra.mxu0 %v197
    %v535 = vpop.f32.mrf.mxu0
    %v536 = vadd.f32 0.0, %v535
    %537 = vmatmul.f32.gmra.mxu0 %v200
    %v538 = vpop.f32.mrf.mxu0
    %v539 = vadd.f32 0.0, %v538
    %540 = vmatmul.f32.gmra.mxu0 %v203
    %v541 = vpop.f32.mrf.mxu0
    %v542 = vadd.f32 0.0, %v541
    %543 = vmatmul.f32.gmra.mxu0 %v206
    %v544 = vpop.f32.mrf.mxu0
    %v545 = vadd.f32 0.0, %v544
    %546 = vmatmul.f32.gmra.mxu0 %v209
    %v547 = vpop.f32.mrf.mxu0
    %v548 = vadd.f32 0.0, %v547
    %549 = vmatmul.f32.gmra.mxu0 %v212
    %v550 = vpop.f32.mrf.mxu0
    %v551 = vadd.f32 0.0, %v550
    %552 = vmatmul.f32.gmra.mxu0 %v215
    %v553 = vpop.f32.mrf.mxu0
    %v554 = vadd.f32 0.0, %v553
    %555 = vmatmul.f32.gmra.mxu0 %v218
    %v556 = vpop.f32.mrf.mxu0
    %v557 = vadd.f32 0.0, %v556
    %558 = vmatmul.f32.gmra.mxu0 %v221
    %v559 = vpop.f32.mrf.mxu0
    %v560 = vadd.f32 0.0, %v559
    %561 = vmatmul.f32.gmra.mxu0 %v224
    %v562 = vpop.f32.mrf.mxu0
    %v563 = vadd.f32 0.0, %v562
    %564 = vmatmul.f32.gmra.mxu0 %v227
    %v565 = vpop.f32.mrf.mxu0
    %v566 = vadd.f32 0.0, %v565
    %567 = vmatmul.f32.gmra.mxu0 %v230
    %v568 = vpop.f32.mrf.mxu0
    %v569 = vadd.f32 0.0, %v568
    %570 = vmatmul.f32.gmra.mxu0 %v233
    %v571 = vpop.f32.mrf.mxu0
    %v572 = vadd.f32 0.0, %v571
    %573 = vmatmul.f32.gmra.mxu0 %v236
    %v574 = vpop.f32.mrf.mxu0
    %v575 = vadd.f32 0.0, %v574
    %576 = vmatmul.f32.gmra.mxu0 %v239
    %v577 = vpop.f32.mrf.mxu0
    %v578 = vadd.f32 0.0, %v577
    %579 = vmatmul.f32.gmra.mxu0 %v242
    %v580 = vpop.f32.mrf.mxu0
    %v581 = vadd.f32 0.0, %v580
    %582 = vmatmul.f32.gmra.mxu0 %v245
    %v583 = vpop.f32.mrf.mxu0
    %v584 = vadd.f32 0.0, %v583
    %585 = vmatmul.f32.gmra.mxu0 %v248
    %v586 = vpop.f32.mrf.mxu0
    %v587 = vadd.f32 0.0, %v586
    %588 = vmatmul.f32.gmra.mxu0 %v251
    %v589 = vpop.f32.mrf.mxu0
    %v590 = vadd.f32 0.0, %v589
    %591 = vmatmul.f32.gmra.mxu0 %v254
    %v592 = vpop.f32.mrf.mxu0
    %v593 = vadd.f32 0.0, %v592
    %594 = vdwg.mxu0
    %595 = vmatpush.msra.mxu0 0.0
    %596 = vmatpush.msra.mxu0 0.0
    %597 = vmatpush.msra.mxu0 0.0
    %598 = vmatpush.msra.mxu0 0.0
    %599 = vmatpush.msra.mxu0 0.0
    %600 = vmatpush.msra.mxu0 0.0
    %601 = vmatpush.msra.mxu0 0.0
    %602 = vmatpush.msra.mxu0 0.0
    %603 = vmatpush.msra.mxu0 %v158
    %604 = vmatpush.msra.mxu0 %v154
    %605 = vmatpush.msra.mxu0 %v150
    %606 = vmatpush.msra.mxu0 %v146
    %607 = vmatpush.msra.mxu0 %v142
    %608 = vmatpush.msra.mxu0 %v138
    %609 = vmatpush.msra.mxu0 %v134
    %610 = vmatpush.msra.mxu0 %v130
    %611 = vmatmul.f32.gmra.mxu0 %v161
    %v612 = vpop.f32.mrf.mxu0
    %v613 = vadd.f32 0.0, %v612
    %614 = vmatmul.f32.gmra.mxu0 %v164
    %v615 = vpop.f32.mrf.mxu0
    %v616 = vadd.f32 0.0, %v615
    %617 = vmatmul.f32.gmra.mxu0 %v167
    %v618 = vpop.f32.mrf.mxu0
    %v619 = vadd.f32 0.0, %v618
    %620 = vmatmul.f32.gmra.mxu0 %v170
    %v621 = vpop.f32.mrf.mxu0
    %v622 = vadd.f32 0.0, %v621
    %623 = vmatmul.f32.gmra.mxu0 %v173
    %v624 = vpop.f32.mrf.mxu0
    %v625 = vadd.f32 0.0, %v624
    %626 = vmatmul.f32.gmra.mxu0 %v176
    %v627 = vpop.f32.mrf.mxu0
    %v628 = vadd.f32 0.0, %v627
    %629 = vmatmul.f32.gmra.mxu0 %v179
    %v630 = vpop.f32.mrf.mxu0
    %v631 = vadd.f32 0.0, %v630
    %632 = vmatmul.f32.gmra.mxu0 %v182
    %v633 = vpop.f32.mrf.mxu0
    %v634 = vadd.f32 0.0, %v633
    %635 = vmatmul.f32.gmra.mxu0 %v185
    %v636 = vpop.f32.mrf.mxu0
    %v637 = vadd.f32 0.0, %v636
    %638 = vmatmul.f32.gmra.mxu0 %v188
    %v639 = vpop.f32.mrf.mxu0
    %v640 = vadd.f32 0.0, %v639
    %641 = vmatmul.f32.gmra.mxu0 %v191
    %v642 = vpop.f32.mrf.mxu0
    %v643 = vadd.f32 0.0, %v642
    %644 = vmatmul.f32.gmra.mxu0 %v194
    %v645 = vpop.f32.mrf.mxu0
    %v646 = vadd.f32 0.0, %v645
    %647 = vmatmul.f32.gmra.mxu0 %v197
    %v648 = vpop.f32.mrf.mxu0
    %v649 = vadd.f32 0.0, %v648
    %650 = vmatmul.f32.gmra.mxu0 %v200
    %v651 = vpop.f32.mrf.mxu0
    %v652 = vadd.f32 0.0, %v651
    %653 = vmatmul.f32.gmra.mxu0 %v203
    %v654 = vpop.f32.mrf.mxu0
    %v655 = vadd.f32 0.0, %v654
    %656 = vmatmul.f32.gmra.mxu0 %v206
    %v657 = vpop.f32.mrf.mxu0
    %v658 = vadd.f32 0.0, %v657
    %659 = vmatmul.f32.gmra.mxu0 %v209
    %v660 = vpop.f32.mrf.mxu0
    %v661 = vadd.f32 0.0, %v660
    %662 = vmatmul.f32.gmra.mxu0 %v212
    %v663 = vpop.f32.mrf.mxu0
    %v664 = vadd.f32 0.0, %v663
    %665 = vmatmul.f32.gmra.mxu0 %v215
    %v666 = vpop.f32.mrf.mxu0
    %v667 = vadd.f32 0.0, %v666
    %668 = vmatmul.f32.gmra.mxu0 %v218
    %v669 = vpop.f32.mrf.mxu0
    %v670 = vadd.f32 0.0, %v669
    %671 = vmatmul.f32.gmra.mxu0 %v221
    %v672 = vpop.f32.mrf.mxu0
    %v673 = vadd.f32 0.0, %v672
    %674 = vmatmul.f32.gmra.mxu0 %v224
    %v675 = vpop.f32.mrf.mxu0
    %v676 = vadd.f32 0.0, %v675
    %677 = vmatmul.f32.gmra.mxu0 %v227
    %v678 = vpop.f32.mrf.mxu0
    %v679 = vadd.f32 0.0, %v678
    %680 = vmatmul.f32.gmra.mxu0 %v230
    %v681 = vpop.f32.mrf.mxu0
    %v682 = vadd.f32 0.0, %v681
    %683 = vmatmul.f32.gmra.mxu0 %v233
    %v684 = vpop.f32.mrf.mxu0
    %v685 = vadd.f32 0.0, %v684
    %686 = vmatmul.f32.gmra.mxu0 %v236
    %v687 = vpop.f32.mrf.mxu0
    %v688 = vadd.f32 0.0, %v687
    %689 = vmatmul.f32.gmra.mxu0 %v239
    %v690 = vpop.f32.mrf.mxu0
    %v691 = vadd.f32 0.0, %v690
    %692 = vmatmul.f32.gmra.mxu0 %v242
    %v693 = vpop.f32.mrf.mxu0
    %v694 = vadd.f32 0.0, %v693
    %695 = vmatmul.f32.gmra.mxu0 %v245
    %v696 = vpop.f32.mrf.mxu0
    %v697 = vadd.f32 0.0, %v696
    %698 = vmatmul.f32.gmra.mxu0 %v248
    %v699 = vpop.f32.mrf.mxu0
    %v700 = vadd.f32 0.0, %v699
    %701 = vmatmul.f32.gmra.mxu0 %v251
    %v702 = vpop.f32.mrf.mxu0
    %v703 = vadd.f32 0.0, %v702
    %704 = vmatmul.f32.gmra.mxu0 %v254
    %v705 = vpop.f32.mrf.mxu0
    %v706 = vadd.f32 0.0, %v705
    %707 = vdwg.mxu0
    %v708 = vadd.f32 %v274, %v277
    %v709 = vadd.f32 %v708, %v280
    %v710 = vadd.f32 %v709, %v283
    %v711 = vadd.f32 %v710, %v286
    %v712 = vadd.f32 %v711, %v289
    %v713 = vadd.f32 %v712, %v292
    %v714 = vadd.f32 %v713, %v295
    %v715 = vadd.f32 %v714, %v298
    %v716 = vadd.f32 %v715, %v301
    %v717 = vadd.f32 %v716, %v304
    %v718 = vadd.f32 %v717, %v307
    %v719 = vadd.f32 %v718, %v310
    %v720 = vadd.f32 %v719, %v313
    %v721 = vadd.f32 %v720, %v316
    %v722 = vadd.f32 %v721, %v319
    %v723 = vadd.f32 %v722, %v322
    %v724 = vadd.f32 %v723, %v325
    %v725 = vadd.f32 %v724, %v328
    %v726 = vadd.f32 %v725, %v331
    %v727 = vadd.f32 %v726, %v334
    %v728 = vadd.f32 %v727, %v337
    %v729 = vadd.f32 %v728, %v340
    %v730 = vadd.f32 %v729, %v343
    %v731 = vadd.f32 %v730, %v346
    %v732 = vadd.f32 %v731, %v349
    %v733 = vadd.f32 %v732, %v352
    %v734 = vadd.f32 %v733, %v355
    %v735 = vadd.f32 %v734, %v358
    %v736 = vadd.f32 %v735, %v361
    %v737 = vadd.f32 %v736, %v364
    %v738 = vadd.f32 %v737, %v367
    %v739 = vrot.slane %v738, 4
    %v740 = vadd.f32 %v738, %v739
    %v741 = vrot.slane %v740, 2
    %v742 = vadd.f32 %v740, %v741
    %v743 = vrot.slane %v742, 1
    %v744 = vadd.f32 %v742, %v743
    %v745 = vadd.f32 %v387, %v390
    %v746 = vadd.f32 %v745, %v393
    %v747 = vadd.f32 %v746, %v396
    %v748 = vadd.f32 %v747, %v399
    %v749 = vadd.f32 %v748, %v402
    %v750 = vadd.f32 %v749, %v405
    %v751 = vadd.f32 %v750, %v408
    %v752 = vadd.f32 %v751, %v411
    %v753 = vadd.f32 %v752, %v414
    %v754 = vadd.f32 %v753, %v417
    %v755 = vadd.f32 %v754, %v420
    %v756 = vadd.f32 %v755, %v423
    %v757 = vadd.f32 %v756, %v426
    %v758 = vadd.f32 %v757, %v429
    %v759 = vadd.f32 %v758, %v432
    %v760 = vadd.f32 %v759, %v435
    %v761 = vadd.f32 %v760, %v438
    %v762 = vadd.f32 %v761, %v441
    %v763 = vadd.f32 %v762, %v444
    %v764 = vadd.f32 %v763, %v447
    %v765 = vadd.f32 %v764, %v450
    %v766 = vadd.f32 %v765, %v453
    %v767 = vadd.f32 %v766, %v456
    %v768 = vadd.f32 %v767, %v459
    %v769 = vadd.f32 %v768, %v462
    %v770 = vadd.f32 %v769, %v465
    %v771 = vadd.f32 %v770, %v468
    %v772 = vadd.f32 %v771, %v471
    %v773 = vadd.f32 %v772, %v474
    %v774 = vadd.f32 %v773, %v477
    %v775 = vadd.f32 %v774, %v480
    %v776 = vrot.slane %v775, 4
    %v777 = vadd.f32 %v775, %v776
    %v778 = vrot.slane %v777, 2
    %v779 = vadd.f32 %v777, %v778
    %v780 = vrot.slane %v779, 1
    %v781 = vadd.f32 %v779, %v780
    %v782 = vadd.f32 %v500, %v503
    %v783 = vadd.f32 %v782, %v506
    %v784 = vadd.f32 %v783, %v509
    %v785 = vadd.f32 %v784, %v512
    %v786 = vadd.f32 %v785, %v515
    %v787 = vadd.f32 %v786, %v518
    %v788 = vadd.f32 %v787, %v521
    %v789 = vadd.f32 %v788, %v524
    %v790 = vadd.f32 %v789, %v527
    %v791 = vadd.f32 %v790, %v530
    %v792 = vadd.f32 %v791, %v533
    %v793 = vadd.f32 %v792, %v536
    %v794 = vadd.f32 %v793, %v539
    %v795 = vadd.f32 %v794, %v542
    %v796 = vadd.f32 %v795, %v545
    %v797 = vadd.f32 %v796, %v548
    %v798 = vadd.f32 %v797, %v551
    %v799 = vadd.f32 %v798, %v554
    %v800 = vadd.f32 %v799, %v557
    %v801 = vadd.f32 %v800, %v560
    %v802 = vadd.f32 %v801, %v563
    %v803 = vadd.f32 %v802, %v566
    %v804 = vadd.f32 %v803, %v569
    %v805 = vadd.f32 %v804, %v572
    %v806 = vadd.f32 %v805, %v575
    %v807 = vadd.f32 %v806, %v578
    %v808 = vadd.f32 %v807, %v581
    %v809 = vadd.f32 %v808, %v584
    %v810 = vadd.f32 %v809, %v587
    %v811 = vadd.f32 %v810, %v590
    %v812 = vadd.f32 %v811, %v593
    %v813 = vrot.slane %v812, 4
    %v814 = vadd.f32 %v812, %v813
    %v815 = vrot.slane %v814, 2
    %v816 = vadd.f32 %v814, %v815
    %v817 = vrot.slane %v816, 1
    %v818 = vadd.f32 %v816, %v817
    %v819 = vadd.f32 %v613, %v616
    %v820 = vadd.f32 %v819, %v619
    %v821 = vadd.f32 %v820, %v622
    %v822 = vadd.f32 %v821, %v625
    %v823 = vadd.f32 %v822, %v628
    %v824 = vadd.f32 %v823, %v631
    %v825 = vadd.f32 %v824, %v634
    %v826 = vadd.f32 %v825, %v637
    %v827 = vadd.f32 %v826, %v640
    %v828 = vadd.f32 %v827, %v643
    %v829 = vadd.f32 %v828, %v646
    %v830 = vadd.f32 %v829, %v649
    %v831 = vadd.f32 %v830, %v652
    %v832 = vadd.f32 %v831, %v655
    %v833 = vadd.f32 %v832, %v658
    %v834 = vadd.f32 %v833, %v661
    %v835 = vadd.f32 %v834, %v664
    %v836 = vadd.f32 %v835, %v667
    %v837 = vadd.f32 %v836, %v670
    %v838 = vadd.f32 %v837, %v673
    %v839 = vadd.f32 %v838, %v676
    %v840 = vadd.f32 %v839, %v679
    %v841 = vadd.f32 %v840, %v682
    %v842 = vadd.f32 %v841, %v685
    %v843 = vadd.f32 %v842, %v688
    %v844 = vadd.f32 %v843, %v691
    %v845 = vadd.f32 %v844, %v694
    %v846 = vadd.f32 %v845, %v697
    %v847 = vadd.f32 %v846, %v700
    %v848 = vadd.f32 %v847, %v703
    %v849 = vadd.f32 %v848, %v706
    %v850 = vrot.slane %v849, 4
    %v851 = vadd.f32 %v849, %v850
    %v852 = vrot.slane %v851, 2
    %v853 = vadd.f32 %v851, %v852
    %v854 = vrot.slane %v853, 1
    %v855 = vadd.f32 %v853, %v854
    %v856 = vmul.f32 %v744, 0.00390625
    %v857 = vmul.f32 %v781, 0.00390625
    %v858 = vmul.f32 %v818, 0.00390625
    %v859 = vmul.f32 %v855, 0.00390625
    %v860 = vmul.f32 %v274, %v274
    %v861 = vmul.f32 %v387, %v387
    %v862 = vmul.f32 %v500, %v500
    %v863 = vmul.f32 %v613, %v613
    %v864 = vmul.f32 %v277, %v277
    %v865 = vmul.f32 %v390, %v390
    %v866 = vmul.f32 %v503, %v503
    %v867 = vmul.f32 %v616, %v616
    %v868 = vmul.f32 %v280, %v280
    %v869 = vmul.f32 %v393, %v393
    %v870 = vmul.f32 %v506, %v506
    %v871 = vmul.f32 %v619, %v619
    %v872 = vmul.f32 %v283, %v283
    %v873 = vmul.f32 %v396, %v396
    %v874 = vmul.f32 %v509, %v509
    %v875 = vmul.f32 %v622, %v622
    %v876 = vmul.f32 %v286, %v286
    %v877 = vmul.f32 %v399, %v399
    %v878 = vmul.f32 %v512, %v512
    %v879 = vmul.f32 %v625, %v625
    %v880 = vmul.f32 %v289, %v289
    %v881 = vmul.f32 %v402, %v402
    %v882 = vmul.f32 %v515, %v515
    %v883 = vmul.f32 %v628, %v628
    %v884 = vmul.f32 %v292, %v292
    %v885 = vmul.f32 %v405, %v405
    %v886 = vmul.f32 %v518, %v518
    %v887 = vmul.f32 %v631, %v631
    %v888 = vmul.f32 %v295, %v295
    %v889 = vmul.f32 %v408, %v408
    %v890 = vmul.f32 %v521, %v521
    %v891 = vmul.f32 %v634, %v634
    %v892 = vmul.f32 %v298, %v298
    %v893 = vmul.f32 %v411, %v411
    %v894 = vmul.f32 %v524, %v524
    %v895 = vmul.f32 %v637, %v637
    %v896 = vmul.f32 %v301, %v301
    %v897 = vmul.f32 %v414, %v414
    %v898 = vmul.f32 %v527, %v527
    %v899 = vmul.f32 %v640, %v640
    %v900 = vmul.f32 %v304, %v304
    %v901 = vmul.f32 %v417, %v417
    %v902 = vmul.f32 %v530, %v530
    %v903 = vmul.f32 %v643, %v643
    %v904 = vmul.f32 %v307, %v307
    %v905 = vmul.f32 %v420, %v420
    %v906 = vmul.f32 %v533, %v533
    %v907 = vmul.f32 %v646, %v646
    %v908 = vmul.f32 %v310, %v310
    %v909 = vmul.f32 %v423, %v423
    %v910 = vmul.f32 %v536, %v536
    %v911 = vmul.f32 %v649, %v649
    %v912 = vmul.f32 %v313, %v313
    %v913 = vmul.f32 %v426, %v426
    %v914 = vmul.f32 %v539, %v539
    %v915 = vmul.f32 %v652, %v652
    %v916 = vmul.f32 %v316, %v316
    %v917 = vmul.f32 %v429, %v429
    %v918 = vmul.f32 %v542, %v542
    %v919 = vmul.f32 %v655, %v655
    %v920 = vmul.f32 %v319, %v319
    %v921 = vmul.f32 %v432, %v432
    %v922 = vmul.f32 %v545, %v545
    %v923 = vmul.f32 %v658, %v658
    %v924 = vmul.f32 %v322, %v322
    %v925 = vmul.f32 %v435, %v435
    %v926 = vmul.f32 %v548, %v548
    %v927 = vmul.f32 %v661, %v661
    %v928 = vmul.f32 %v325, %v325
    %v929 = vmul.f32 %v438, %v438
    %v930 = vmul.f32 %v551, %v551
    %v931 = vmul.f32 %v664, %v664
    %v932 = vmul.f32 %v328, %v328
    %v933 = vmul.f32 %v441, %v441
    %v934 = vmul.f32 %v554, %v554
    %v935 = vmul.f32 %v667, %v667
    %v936 = vmul.f32 %v331, %v331
    %v937 = vmul.f32 %v444, %v444
    %v938 = vmul.f32 %v557, %v557
    %v939 = vmul.f32 %v670, %v670
    %v940 = vmul.f32 %v334, %v334
    %v941 = vmul.f32 %v447, %v447
    %v942 = vmul.f32 %v560, %v560
    %v943 = vmul.f32 %v673, %v673
    %v944 = vmul.f32 %v337, %v337
    %v945 = vmul.f32 %v450, %v450
    %v946 = vmul.f32 %v563, %v563
    %v947 = vmul.f32 %v676, %v676
    %v948 = vmul.f32 %v340, %v340
    %v949 = vmul.f32 %v453, %v453
    %v950 = vmul.f32 %v566, %v566
    %v951 = vmul.f32 %v679, %v679
    %v952 = vmul.f32 %v343, %v343
    %v953 = vmul.f32 %v456, %v456
    %v954 = vmul.f32 %v569, %v569
    %v955 = vmul.f32 %v682, %v682
    %v956 = vmul.f32 %v346, %v346
    %v957 = vmul.f32 %v459, %v459
    %v958 = vmul.f32 %v572, %v572
    %v959 = vmul.f32 %v685, %v685
    %v960 = vmul.f32 %v349, %v349
    %v961 = vmul.f32 %v462, %v462
    %v962 = vmul.f32 %v575, %v575
    %v963 = vmul.f32 %v688, %v688
    %v964 = vmul.f32 %v352, %v352
    %v965 = vmul.f32 %v465, %v465
    %v966 = vmul.f32 %v578, %v578
    %v967 = vmul.f32 %v691, %v691
    %v968 = vmul.f32 %v355, %v355
    %v969 = vmul.f32 %v468, %v468
    %v970 = vmul.f32 %v581, %v581
    %v971 = vmul.f32 %v694, %v694
    %v972 = vmul.f32 %v358, %v358
    %v973 = vmul.f32 %v471, %v471
    %v974 = vmul.f32 %v584, %v584
    %v975 = vmul.f32 %v697, %v697
    %v976 = vmul.f32 %v361, %v361
    %v977 = vmul.f32 %v474, %v474
    %v978 = vmul.f32 %v587, %v587
    %v979 = vmul.f32 %v700, %v700
    %v980 = vmul.f32 %v364, %v364
    %v981 = vmul.f32 %v477, %v477
    %v982 = vmul.f32 %v590, %v590
    %v983 = vmul.f32 %v703, %v703
    %v984 = vmul.f32 %v367, %v367
    %v985 = vmul.f32 %v480, %v480
    %v986 = vmul.f32 %v593, %v593
    %v987 = vmul.f32 %v706, %v706
    %v988 = vadd.f32 %v860, %v864
    %v989 = vadd.f32 %v988, %v868
    %v990 = vadd.f32 %v989, %v872
    %v991 = vadd.f32 %v990, %v876
    %v992 = vadd.f32 %v991, %v880
    %v993 = vadd.f32 %v992, %v884
    %v994 = vadd.f32 %v993, %v888
    %v995 = vadd.f32 %v994, %v892
    %v996 = vadd.f32 %v995, %v896
    %v997 = vadd.f32 %v996, %v900
    %v998 = vadd.f32 %v997, %v904
    %v999 = vadd.f32 %v998, %v908
    %v1000 = vadd.f32 %v999, %v912
    %v1001 = vadd.f32 %v1000, %v916
    %v1002 = vadd.f32 %v1001, %v920
    %v1003 = vadd.f32 %v1002, %v924
    %v1004 = vadd.f32 %v1003, %v928
    %v1005 = vadd.f32 %v1004, %v932
    %v1006 = vadd.f32 %v1005, %v936
    %v1007 = vadd.f32 %v1006, %v940
    %v1008 = vadd.f32 %v1007, %v944
    %v1009 = vadd.f32 %v1008, %v948
    %v1010 = vadd.f32 %v1009, %v952
    %v1011 = vadd.f32 %v1010, %v956
    %v1012 = vadd.f32 %v1011, %v960
    %v1013 = vadd.f32 %v1012, %v964
    %v1014 = vadd.f32 %v1013, %v968
    %v1015 = vadd.f32 %v1014, %v972
    %v1016 = vadd.f32 %v1015, %v976
    %v1017 = vadd.f32 %v1016, %v980
    %v1018 = vadd.f32 %v1017, %v984
    %v1019 = vrot.slane %v1018, 4
    %v1020 = vadd.f32 %v1018, %v1019
    %v1021 = vrot.slane %v1020, 2
    %v1022 = vadd.f32 %v1020, %v1021
    %v1023 = vrot.slane %v1022, 1
    %v1024 = vadd.f32 %v1022, %v1023
    %v1025 = vadd.f32 %v861, %v865
    %v1026 = vadd.f32 %v1025, %v869
    %v1027 = vadd.f32 %v1026, %v873
    %v1028 = vadd.f32 %v1027, %v877
    %v1029 = vadd.f32 %v1028, %v881
    %v1030 = vadd.f32 %v1029, %v885
    %v1031 = vadd.f32 %v1030, %v889
    %v1032 = vadd.f32 %v1031, %v893
    %v1033 = vadd.f32 %v1032, %v897
    %v1034 = vadd.f32 %v1033, %v901
    %v1035 = vadd.f32 %v1034, %v905
    %v1036 = vadd.f32 %v1035, %v909
    %v1037 = vadd.f32 %v1036, %v913
    %v1038 = vadd.f32 %v1037, %v917
    %v1039 = vadd.f32 %v1038, %v921
    %v1040 = vadd.f32 %v1039, %v925
    %v1041 = vadd.f32 %v1040, %v929
    %v1042 = vadd.f32 %v1041, %v933
    %v1043 = vadd.f32 %v1042, %v937
    %v1044 = vadd.f32 %v1043, %v941
    %v1045 = vadd.f32 %v1044, %v945
    %v1046 = vadd.f32 %v1045, %v949
    %v1047 = vadd.f32 %v1046, %v953
    %v1048 = vadd.f32 %v1047, %v957
    %v1049 = vadd.f32 %v1048, %v961
    %v1050 = vadd.f32 %v1049, %v965
    %v1051 = vadd.f32 %v1050, %v969
    %v1052 = vadd.f32 %v1051, %v973
    %v1053 = vadd.f32 %v1052, %v977
    %v1054 = vadd.f32 %v1053, %v981
    %v1055 = vadd.f32 %v1054, %v985
    %v1056 = vrot.slane %v1055, 4
    %v1057 = vadd.f32 %v1055, %v1056
    %v1058 = vrot.slane %v1057, 2
    %v1059 = vadd.f32 %v1057, %v1058
    %v1060 = vrot.slane %v1059, 1
    %v1061 = vadd.f32 %v1059, %v1060
    %v1062 = vadd.f32 %v862, %v866
    %v1063 = vadd.f32 %v1062, %v870
    %v1064 = vadd.f32 %v1063, %v874
    %v1065 = vadd.f32 %v1064, %v878
    %v1066 = vadd.f32 %v1065, %v882
    %v1067 = vadd.f32 %v1066, %v886
    %v1068 = vadd.f32 %v1067, %v890
    %v1069 = vadd.f32 %v1068, %v894
    %v1070 = vadd.f32 %v1069, %v898
    %v1071 = vadd.f32 %v1070, %v902
    %v1072 = vadd.f32 %v1071, %v906
    %v1073 = vadd.f32 %v1072, %v910
    %v1074 = vadd.f32 %v1073, %v914
    %v1075 = vadd.f32 %v1074, %v918
    %v1076 = vadd.f32 %v1075, %v922
    %v1077 = vadd.f32 %v1076, %v926
    %v1078 = vadd.f32 %v1077, %v930
    %v1079 = vadd.f32 %v1078, %v934
    %v1080 = vadd.f32 %v1079, %v938
    %v1081 = vadd.f32 %v1080, %v942
    %v1082 = vadd.f32 %v1081, %v946
    %v1083 = vadd.f32 %v1082, %v950
    %v1084 = vadd.f32 %v1083, %v954
    %v1085 = vadd.f32 %v1084, %v958
    %v1086 = vadd.f32 %v1085, %v962
    %v1087 = vadd.f32 %v1086, %v966
    %v1088 = vadd.f32 %v1087, %v970
    %v1089 = vadd.f32 %v1088, %v974
    %v1090 = vadd.f32 %v1089, %v978
    %v1091 = vadd.f32 %v1090, %v982
    %v1092 = vadd.f32 %v1091, %v986
    %v1093 = vrot.slane %v1092, 4
    %v1094 = vadd.f32 %v1092, %v1093
    %v1095 = vrot.slane %v1094, 2
    %v1096 = vadd.f32 %v1094, %v1095
    %v1097 = vrot.slane %v1096, 1
    %v1098 = vadd.f32 %v1096, %v1097
    %v1099 = vadd.f32 %v863, %v867
    %v1100 = vadd.f32 %v1099, %v871
    %v1101 = vadd.f32 %v1100, %v875
    %v1102 = vadd.f32 %v1101, %v879
    %v1103 = vadd.f32 %v1102, %v883
    %v1104 = vadd.f32 %v1103, %v887
    %v1105 = vadd.f32 %v1104, %v891
    %v1106 = vadd.f32 %v1105, %v895
    %v1107 = vadd.f32 %v1106, %v899
    %v1108 = vadd.f32 %v1107, %v903
    %v1109 = vadd.f32 %v1108, %v907
    %v1110 = vadd.f32 %v1109, %v911
    %v1111 = vadd.f32 %v1110, %v915
    %v1112 = vadd.f32 %v1111, %v919
    %v1113 = vadd.f32 %v1112, %v923
    %v1114 = vadd.f32 %v1113, %v927
    %v1115 = vadd.f32 %v1114, %v931
    %v1116 = vadd.f32 %v1115, %v935
    %v1117 = vadd.f32 %v1116, %v939
    %v1118 = vadd.f32 %v1117, %v943
    %v1119 = vadd.f32 %v1118, %v947
    %v1120 = vadd.f32 %v1119, %v951
    %v1121 = vadd.f32 %v1120, %v955
    %v1122 = vadd.f32 %v1121, %v959
    %v1123 = vadd.f32 %v1122, %v963
    %v1124 = vadd.f32 %v1123, %v967
    %v1125 = vadd.f32 %v1124, %v971
    %v1126 = vadd.f32 %v1125, %v975
    %v1127 = vadd.f32 %v1126, %v979
    %v1128 = vadd.f32 %v1127, %v983
    %v1129 = vadd.f32 %v1128, %v987
    %v1130 = vrot.slane %v1129, 4
    %v1131 = vadd.f32 %v1129, %v1130
    %v1132 = vrot.slane %v1131, 2
    %v1133 = vadd.f32 %v1131, %v1132
    %v1134 = vrot.slane %v1133, 1
    %v1135 = vadd.f32 %v1133, %v1134
    %v1136 = vmul.f32 %v1024, 0.00390625
    %v1137 = vmul.f32 %v1061, 0.00390625
    %v1138 = vmul.f32 %v1098, 0.00390625
    %v1139 = vmul.f32 %v1135, 0.00390625
    %v1140 = vmul.f32 %v856, %v856
    %v1141 = vmul.f32 %v857, %v857
    %v1142 = vmul.f32 %v858, %v858
    %v1143 = vmul.f32 %v859, %v859
    %v1144 = vsub.f32 %v1136, %v1140
    %v1145 = vsub.f32 %v1137, %v1141
    %v1146 = vsub.f32 %v1138, %v1142
    %v1147 = vsub.f32 %v1139, %v1143
    %v1148 = vmax.f32 %v1144, 0.0
    %v1149 = vmax.f32 %v1145, 0.0
    %v1150 = vmax.f32 %v1146, 0.0
    %v1151 = vmax.f32 %v1147, 0.0
    %v1152 = vadd.f32 %v1148, 1e-05
    %v1153 = vadd.f32 %v1149, 1e-05
    %v1154 = vadd.f32 %v1150, 1e-05
    %v1155 = vadd.f32 %v1151, 1e-05
    %v1156 = vrsqrt.pop %v1152
    %v1157 = vmul.f32 %v1156, %v1152
    %v1158 = vmul.f32 %v1157, %v1156
    %v1159 = vmul.f32 0.5, %v1158
    %v1160 = vsub.f32 1.5, %v1159
    %v1161 = vmul.f32 %v1156, %v1160
    %vm1162 = vweird.f32 %v1152
    %vm1163 = vweird.f32 %v1156
    %vm1164 = vmor %vm1162, %vm1163
    %v1165 = vsel %vm1164, %v1156, %v1161
    %v1166 = vrsqrt.pop %v1153
    %v1167 = vmul.f32 %v1166, %v1153
    %v1168 = vmul.f32 %v1167, %v1166
    %v1169 = vmul.f32 0.5, %v1168
    %v1170 = vsub.f32 1.5, %v1169
    %v1171 = vmul.f32 %v1166, %v1170
    %vm1172 = vweird.f32 %v1153
    %vm1173 = vweird.f32 %v1166
    %vm1174 = vmor %vm1172, %vm1173
    %v1175 = vsel %vm1174, %v1166, %v1171
    %v1176 = vrsqrt.pop %v1154
    %v1177 = vmul.f32 %v1176, %v1154
    %v1178 = vmul.f32 %v1177, %v1176
    %v1179 = vmul.f32 0.5, %v1178
    %v1180 = vsub.f32 1.5, %v1179
    %v1181 = vmul.f32 %v1176, %v1180
    %vm1182 = vweird.f32 %v1154
    %vm1183 = vweird.f32 %v1176
    %vm1184 = vmor %vm1182, %vm1183
    %v1185 = vsel %vm1184, %v1176, %v1181
    %v1186 = vrsqrt.pop %v1155
    %v1187 = vmul.f32 %v1186, %v1155
    %v1188 = vmul.f32 %v1187, %v1186
    %v1189 = vmul.f32 0.5, %v1188
    %v1190 = vsub.f32 1.5, %v1189
    %v1191 = vmul.f32 %v1186, %v1190
    %vm1192 = vweird.f32 %v1155
    %vm1193 = vweird.f32 %v1186
    %vm1194 = vmor %vm1192, %vm1193
    %v1195 = vsel %vm1194, %v1186, %v1191
    %v1196 = vld [vmem:[#allocation2] sm:$0xf]
    %v1201 = vrot.slane %v1175, 7
    %v1202 = vrot.slane %v1185, 6
    %v1203 = vrot.slane %v1195, 5
    %vm1204 = vcmask 1040384
    %v1205 = vsel %vm1204, %v1165, %v1201
    %vm1206 = vcmask 1042434
    %v1207 = vsel %vm1206, %v1202, %v1203
    %vm1208 = vcmask 1041408
    %v1209 = vsel %vm1208, %v1205, %v1207
    %v1211 = vmul.f32 %v1196, %v1209
    %v1212 = vld [vmem:[#allocation5] sm:$0xf]
    %v1214 = vperm.slane %v1211, 0
    %v1215 = vperm.slane %v1211, 1
    %v1216 = vperm.slane %v1211, 2
    %v1217 = vperm.slane %v1211, 3
    %v1222 = vmul.f32 %v856, %v1214
    %v1223 = vmul.f32 %v857, %v1215
    %v1224 = vmul.f32 %v858, %v1216
    %v1225 = vmul.f32 %v859, %v1217
    %v1230 = vrot.slane %v1223, 7
    %v1231 = vrot.slane %v1224, 6
    %v1232 = vrot.slane %v1225, 5
    %v1233 = vsel %vm1204, %v1222, %v1230
    %v1234 = vsel %vm1206, %v1231, %v1232
    %v1235 = vsel %vm1208, %v1233, %v1234
    %v1237 = vsub.f32 %v1212, %v1235
    %v1238 = vmul.f32 %v274, %v1214
    %v1239 = vmul.f32 %v387, %v1215
    %v1240 = vmul.f32 %v500, %v1216
    %v1241 = vmul.f32 %v613, %v1217
    %v1242 = vmul.f32 %v277, %v1214
    %v1243 = vmul.f32 %v390, %v1215
    %v1244 = vmul.f32 %v503, %v1216
    %v1245 = vmul.f32 %v616, %v1217
    %v1246 = vmul.f32 %v280, %v1214
    %v1247 = vmul.f32 %v393, %v1215
    %v1248 = vmul.f32 %v506, %v1216
    %v1249 = vmul.f32 %v619, %v1217
    %v1250 = vmul.f32 %v283, %v1214
    %v1251 = vmul.f32 %v396, %v1215
    %v1252 = vmul.f32 %v509, %v1216
    %v1253 = vmul.f32 %v622, %v1217
    %v1254 = vmul.f32 %v286, %v1214
    %v1255 = vmul.f32 %v399, %v1215
    %v1256 = vmul.f32 %v512, %v1216
    %v1257 = vmul.f32 %v625, %v1217
    %v1258 = vmul.f32 %v289, %v1214
    %v1259 = vmul.f32 %v402, %v1215
    %v1260 = vmul.f32 %v515, %v1216
    %v1261 = vmul.f32 %v628, %v1217
    %v1262 = vmul.f32 %v292, %v1214
    %v1263 = vmul.f32 %v405, %v1215
    %v1264 = vmul.f32 %v518, %v1216
    %v1265 = vmul.f32 %v631, %v1217
    %v1266 = vmul.f32 %v295, %v1214
    %v1267 = vmul.f32 %v408, %v1215
    %v1268 = vmul.f32 %v521, %v1216
    %v1269 = vmul.f32 %v634, %v1217
    %v1270 = vmul.f32 %v298, %v1214
    %v1271 = vmul.f32 %v411, %v1215
    %v1272 = vmul.f32 %v524, %v1216
    %v1273 = vmul.f32 %v637, %v1217
    %v1274 = vmul.f32 %v301, %v1214
    %v1275 = vmul.f32 %v414, %v1215
    %v1276 = vmul.f32 %v527, %v1216
    %v1277 = vmul.f32 %v640, %v1217
    %v1278 = vmul.f32 %v304, %v1214
    %v1279 = vmul.f32 %v417, %v1215
    %v1280 = vmul.f32 %v530, %v1216
    %v1281 = vmul.f32 %v643, %v1217
    %v1282 = vmul.f32 %v307, %v1214
    %v1283 = vmul.f32 %v420, %v1215
    %v1284 = vmul.f32 %v533, %v1216
    %v1285 = vmul.f32 %v646, %v1217
    %v1286 = vmul.f32 %v310, %v1214
    %v1287 = vmul.f32 %v423, %v1215
    %v1288 = vmul.f32 %v536, %v1216
    %v1289 = vmul.f32 %v649, %v1217
    %v1290 = vmul.f32 %v313, %v1214
    %v1291 = vmul.f32 %v426, %v1215
    %v1292 = vmul.f32 %v539, %v1216
    %v1293 = vmul.f32 %v652, %v1217
    %v1294 = vmul.f32 %v316, %v1214
    %v1295 = vmul.f32 %v429, %v1215
    %v1296 = vmul.f32 %v542, %v1216
    %v1297 = vmul.f32 %v655, %v1217
    %v1298 = vmul.f32 %v319, %v1214
    %v1299 = vmul.f32 %v432, %v1215
    %v1300 = vmul.f32 %v545, %v1216
    %v1301 = vmul.f32 %v658, %v1217
    %v1302 = vmul.f32 %v322, %v1214
    %v1303 = vmul.f32 %v435, %v1215
    %v1304 = vmul.f32 %v548, %v1216
    %v1305 = vmul.f32 %v661, %v1217
    %v1306 = vmul.f32 %v325, %v1214
    %v1307 = vmul.f32 %v438, %v1215
    %v1308 = vmul.f32 %v551, %v1216
    %v1309 = vmul.f32 %v664, %v1217
    %v1310 = vmul.f32 %v328, %v1214
    %v1311 = vmul.f32 %v441, %v1215
    %v1312 = vmul.f32 %v554, %v1216
    %v1313 = vmul.f32 %v667, %v1217
    %v1314 = vmul.f32 %v331, %v1214
    %v1315 = vmul.f32 %v444, %v1215
    %v1316 = vmul.f32 %v557, %v1216
    %v1317 = vmul.f32 %v670, %v1217
    %v1318 = vmul.f32 %v334, %v1214
    %v1319 = vmul.f32 %v447, %v1215
    %v1320 = vmul.f32 %v560, %v1216
    %v1321 = vmul.f32 %v673, %v1217
    %v1322 = vmul.f32 %v337, %v1214
    %v1323 = vmul.f32 %v450, %v1215
    %v1324 = vmul.f32 %v563, %v1216
    %v1325 = vmul.f32 %v676, %v1217
    %v1326 = vmul.f32 %v340, %v1214
    %v1327 = vmul.f32 %v453, %v1215
    %v1328 = vmul.f32 %v566, %v1216
    %v1329 = vmul.f32 %v679, %v1217
    %v1330 = vmul.f32 %v343, %v1214
    %v1331 = vmul.f32 %v456, %v1215
    %v1332 = vmul.f32 %v569, %v1216
    %v1333 = vmul.f32 %v682, %v1217
    %v1334 = vmul.f32 %v346, %v1214
    %v1335 = vmul.f32 %v459, %v1215
    %v1336 = vmul.f32 %v572, %v1216
    %v1337 = vmul.f32 %v685, %v1217
    %v1338 = vmul.f32 %v349, %v1214
    %v1339 = vmul.f32 %v462, %v1215
    %v1340 = vmul.f32 %v575, %v1216
    %v1341 = vmul.f32 %v688, %v1217
    %v1342 = vmul.f32 %v352, %v1214
    %v1343 = vmul.f32 %v465, %v1215
    %v1344 = vmul.f32 %v578, %v1216
    %v1345 = vmul.f32 %v691, %v1217
    %v1346 = vmul.f32 %v355, %v1214
    %v1347 = vmul.f32 %v468, %v1215
    %v1348 = vmul.f32 %v581, %v1216
    %v1349 = vmul.f32 %v694, %v1217
    %v1350 = vmul.f32 %v358, %v1214
    %v1351 = vmul.f32 %v471, %v1215
    %v1352 = vmul.f32 %v584, %v1216
    %v1353 = vmul.f32 %v697, %v1217
    %v1354 = vmul.f32 %v361, %v1214
    %v1355 = vmul.f32 %v474, %v1215
    %v1356 = vmul.f32 %v587, %v1216
    %v1357 = vmul.f32 %v700, %v1217
    %v1358 = vmul.f32 %v364, %v1214
    %v1359 = vmul.f32 %v477, %v1215
    %v1360 = vmul.f32 %v590, %v1216
    %v1361 = vmul.f32 %v703, %v1217
    %v1362 = vmul.f32 %v367, %v1214
    %v1363 = vmul.f32 %v480, %v1215
    %v1364 = vmul.f32 %v593, %v1216
    %v1365 = vmul.f32 %v706, %v1217
    %v1367 = vperm.slane %v1237, 0
    %v1368 = vperm.slane %v1237, 1
    %v1369 = vperm.slane %v1237, 2
    %v1370 = vperm.slane %v1237, 3
    %v1375 = vadd.f32 %v1238, %v1367
    %v1376 = vadd.f32 %v1239, %v1368
    %v1377 = vadd.f32 %v1240, %v1369
    %v1378 = vadd.f32 %v1241, %v1370
    %v1379 = vadd.f32 %v1242, %v1367
    %v1380 = vadd.f32 %v1243, %v1368
    %v1381 = vadd.f32 %v1244, %v1369
    %v1382 = vadd.f32 %v1245, %v1370
    %v1383 = vadd.f32 %v1246, %v1367
    %v1384 = vadd.f32 %v1247, %v1368
    %v1385 = vadd.f32 %v1248, %v1369
    %v1386 = vadd.f32 %v1249, %v1370
    %v1387 = vadd.f32 %v1250, %v1367
    %v1388 = vadd.f32 %v1251, %v1368
    %v1389 = vadd.f32 %v1252, %v1369
    %v1390 = vadd.f32 %v1253, %v1370
    %v1391 = vadd.f32 %v1254, %v1367
    %v1392 = vadd.f32 %v1255, %v1368
    %v1393 = vadd.f32 %v1256, %v1369
    %v1394 = vadd.f32 %v1257, %v1370
    %v1395 = vadd.f32 %v1258, %v1367
    %v1396 = vadd.f32 %v1259, %v1368
    %v1397 = vadd.f32 %v1260, %v1369
    %v1398 = vadd.f32 %v1261, %v1370
    %v1399 = vadd.f32 %v1262, %v1367
    %v1400 = vadd.f32 %v1263, %v1368
    %v1401 = vadd.f32 %v1264, %v1369
    %v1402 = vadd.f32 %v1265, %v1370
    %v1403 = vadd.f32 %v1266, %v1367
    %v1404 = vadd.f32 %v1267, %v1368
    %v1405 = vadd.f32 %v1268, %v1369
    %v1406 = vadd.f32 %v1269, %v1370
    %v1407 = vadd.f32 %v1270, %v1367
    %v1408 = vadd.f32 %v1271, %v1368
    %v1409 = vadd.f32 %v1272, %v1369
    %v1410 = vadd.f32 %v1273, %v1370
    %v1411 = vadd.f32 %v1274, %v1367
    %v1412 = vadd.f32 %v1275, %v1368
    %v1413 = vadd.f32 %v1276, %v1369
    %v1414 = vadd.f32 %v1277, %v1370
    %v1415 = vadd.f32 %v1278, %v1367
    %v1416 = vadd.f32 %v1279, %v1368
    %v1417 = vadd.f32 %v1280, %v1369
    %v1418 = vadd.f32 %v1281, %v1370
    %v1419 = vadd.f32 %v1282, %v1367
    %v1420 = vadd.f32 %v1283, %v1368
    %v1421 = vadd.f32 %v1284, %v1369
    %v1422 = vadd.f32 %v1285, %v1370
    %v1423 = vadd.f32 %v1286, %v1367
    %v1424 = vadd.f32 %v1287, %v1368
    %v1425 = vadd.f32 %v1288, %v1369
    %v1426 = vadd.f32 %v1289, %v1370
    %v1427 = vadd.f32 %v1290, %v1367
    %v1428 = vadd.f32 %v1291, %v1368
    %v1429 = vadd.f32 %v1292, %v1369
    %v1430 = vadd.f32 %v1293, %v1370
    %v1431 = vadd.f32 %v1294, %v1367
    %v1432 = vadd.f32 %v1295, %v1368
    %v1433 = vadd.f32 %v1296, %v1369
    %v1434 = vadd.f32 %v1297, %v1370
    %v1435 = vadd.f32 %v1298, %v1367
    %v1436 = vadd.f32 %v1299, %v1368
    %v1437 = vadd.f32 %v1300, %v1369
    %v1438 = vadd.f32 %v1301, %v1370
    %v1439 = vadd.f32 %v1302, %v1367
    %v1440 = vadd.f32 %v1303, %v1368
    %v1441 = vadd.f32 %v1304, %v1369
    %v1442 = vadd.f32 %v1305, %v1370
    %v1443 = vadd.f32 %v1306, %v1367
    %v1444 = vadd.f32 %v1307, %v1368
    %v1445 = vadd.f32 %v1308, %v1369
    %v1446 = vadd.f32 %v1309, %v1370
    %v1447 = vadd.f32 %v1310, %v1367
    %v1448 = vadd.f32 %v1311, %v1368
    %v1449 = vadd.f32 %v1312, %v1369
    %v1450 = vadd.f32 %v1313, %v1370
    %v1451 = vadd.f32 %v1314, %v1367
    %v1452 = vadd.f32 %v1315, %v1368
    %v1453 = vadd.f32 %v1316, %v1369
    %v1454 = vadd.f32 %v1317, %v1370
    %v1455 = vadd.f32 %v1318, %v1367
    %v1456 = vadd.f32 %v1319, %v1368
    %v1457 = vadd.f32 %v1320, %v1369
    %v1458 = vadd.f32 %v1321, %v1370
    %v1459 = vadd.f32 %v1322, %v1367
    %v1460 = vadd.f32 %v1323, %v1368
    %v1461 = vadd.f32 %v1324, %v1369
    %v1462 = vadd.f32 %v1325, %v1370
    %v1463 = vadd.f32 %v1326, %v1367
    %v1464 = vadd.f32 %v1327, %v1368
    %v1465 = vadd.f32 %v1328, %v1369
    %v1466 = vadd.f32 %v1329, %v1370
    %v1467 = vadd.f32 %v1330, %v1367
    %v1468 = vadd.f32 %v1331, %v1368
    %v1469 = vadd.f32 %v1332, %v1369
    %v1470 = vadd.f32 %v1333, %v1370
    %v1471 = vadd.f32 %v1334, %v1367
    %v1472 = vadd.f32 %v1335, %v1368
    %v1473 = vadd.f32 %v1336, %v1369
    %v1474 = vadd.f32 %v1337, %v1370
    %v1475 = vadd.f32 %v1338, %v1367
    %v1476 = vadd.f32 %v1339, %v1368
    %v1477 = vadd.f32 %v1340, %v1369
    %v1478 = vadd.f32 %v1341, %v1370
    %v1479 = vadd.f32 %v1342, %v1367
    %v1480 = vadd.f32 %v1343, %v1368
    %v1481 = vadd.f32 %v1344, %v1369
    %v1482 = vadd.f32 %v1345, %v1370
    %v1483 = vadd.f32 %v1346, %v1367
    %v1484 = vadd.f32 %v1347, %v1368
    %v1485 = vadd.f32 %v1348, %v1369
    %v1486 = vadd.f32 %v1349, %v1370
    %v1487 = vadd.f32 %v1350, %v1367
    %v1488 = vadd.f32 %v1351, %v1368
    %v1489 = vadd.f32 %v1352, %v1369
    %v1490 = vadd.f32 %v1353, %v1370
    %v1491 = vadd.f32 %v1354, %v1367
    %v1492 = vadd.f32 %v1355, %v1368
    %v1493 = vadd.f32 %v1356, %v1369
    %v1494 = vadd.f32 %v1357, %v1370
    %v1495 = vadd.f32 %v1358, %v1367
    %v1496 = vadd.f32 %v1359, %v1368
    %v1497 = vadd.f32 %v1360, %v1369
    %v1498 = vadd.f32 %v1361, %v1370
    %v1499 = vadd.f32 %v1362, %v1367
    %v1500 = vadd.f32 %v1363, %v1368
    %v1501 = vadd.f32 %v1364, %v1369
    %v1502 = vadd.f32 %v1365, %v1370
    %v1503 = vmax.f32 %v1375, 0.0
    %v1504 = vmax.f32 %v1376, 0.0
    %v1505 = vmax.f32 %v1377, 0.0
    %v1506 = vmax.f32 %v1378, 0.0
    %v1507 = vmax.f32 %v1379, 0.0
    %v1508 = vmax.f32 %v1380, 0.0
    %v1509 = vmax.f32 %v1381, 0.0
    %v1510 = vmax.f32 %v1382, 0.0
    %v1511 = vmax.f32 %v1383, 0.0
    %v1512 = vmax.f32 %v1384, 0.0
    %v1513 = vmax.f32 %v1385, 0.0
    %v1514 = vmax.f32 %v1386, 0.0
    %v1515 = vmax.f32 %v1387, 0.0
    %v1516 = vmax.f32 %v1388, 0.0
    %v1517 = vmax.f32 %v1389, 0.0
    %v1518 = vmax.f32 %v1390, 0.0
    %v1519 = vmax.f32 %v1391, 0.0
    %v1520 = vmax.f32 %v1392, 0.0
    %v1521 = vmax.f32 %v1393, 0.0
    %v1522 = vmax.f32 %v1394, 0.0
    %v1523 = vmax.f32 %v1395, 0.0
    %v1524 = vmax.f32 %v1396, 0.0
    %v1525 = vmax.f32 %v1397, 0.0
    %v1526 = vmax.f32 %v1398, 0.0
    %v1527 = vmax.f32 %v1399, 0.0
    %v1528 = vmax.f32 %v1400, 0.0
    %v1529 = vmax.f32 %v1401, 0.0
    %v1530 = vmax.f32 %v1402, 0.0
    %v1531 = vmax.f32 %v1403, 0.0
    %v1532 = vmax.f32 %v1404, 0.0
    %v1533 = vmax.f32 %v1405, 0.0
    %v1534 = vmax.f32 %v1406, 0.0
    %v1535 = vmax.f32 %v1407, 0.0
    %v1536 = vmax.f32 %v1408, 0.0
    %v1537 = vmax.f32 %v1409, 0.0
    %v1538 = vmax.f32 %v1410, 0.0
    %v1539 = vmax.f32 %v1411, 0.0
    %v1540 = vmax.f32 %v1412, 0.0
    %v1541 = vmax.f32 %v1413, 0.0
    %v1542 = vmax.f32 %v1414, 0.0
    %v1543 = vmax.f32 %v1415, 0.0
    %v1544 = vmax.f32 %v1416, 0.0
    %v1545 = vmax.f32 %v1417, 0.0
    %v1546 = vmax.f32 %v1418, 0.0
    %v1547 = vmax.f32 %v1419, 0.0
    %v1548 = vmax.f32 %v1420, 0.0
    %v1549 = vmax.f32 %v1421, 0.0
    %v1550 = vmax.f32 %v1422, 0.0
    %v1551 = vmax.f32 %v1423, 0.0
    %v1552 = vmax.f32 %v1424, 0.0
    %v1553 = vmax.f32 %v1425, 0.0
    %v1554 = vmax.f32 %v1426, 0.0
    %v1555 = vmax.f32 %v1427, 0.0
    %v1556 = vmax.f32 %v1428, 0.0
    %v1557 = vmax.f32 %v1429, 0.0
    %v1558 = vmax.f32 %v1430, 0.0
    %v1559 = vmax.f32 %v1431, 0.0
    %v1560 = vmax.f32 %v1432, 0.0
    %v1561 = vmax.f32 %v1433, 0.0
    %v1562 = vmax.f32 %v1434, 0.0
    %v1563 = vmax.f32 %v1435, 0.0
    %v1564 = vmax.f32 %v1436, 0.0
    %v1565 = vmax.f32 %v1437, 0.0
    %v1566 = vmax.f32 %v1438, 0.0
    %v1567 = vmax.f32 %v1439, 0.0
    %v1568 = vmax.f32 %v1440, 0.0
    %v1569 = vmax.f32 %v1441, 0.0
    %v1570 = vmax.f32 %v1442, 0.0
    %v1571 = vmax.f32 %v1443, 0.0
    %v1572 = vmax.f32 %v1444, 0.0
    %v1573 = vmax.f32 %v1445, 0.0
    %v1574 = vmax.f32 %v1446, 0.0
    %v1575 = vmax.f32 %v1447, 0.0
    %v1576 = vmax.f32 %v1448, 0.0
    %v1577 = vmax.f32 %v1449, 0.0
    %v1578 = vmax.f32 %v1450, 0.0
    %v1579 = vmax.f32 %v1451, 0.0
    %v1580 = vmax.f32 %v1452, 0.0
    %v1581 = vmax.f32 %v1453, 0.0
    %v1582 = vmax.f32 %v1454, 0.0
    %v1583 = vmax.f32 %v1455, 0.0
    %v1584 = vmax.f32 %v1456, 0.0
    %v1585 = vmax.f32 %v1457, 0.0
    %v1586 = vmax.f32 %v1458, 0.0
    %v1587 = vmax.f32 %v1459, 0.0
    %v1588 = vmax.f32 %v1460, 0.0
    %v1589 = vmax.f32 %v1461, 0.0
    %v1590 = vmax.f32 %v1462, 0.0
    %v1591 = vmax.f32 %v1463, 0.0
    %v1592 = vmax.f32 %v1464, 0.0
    %v1593 = vmax.f32 %v1465, 0.0
    %v1594 = vmax.f32 %v1466, 0.0
    %v1595 = vmax.f32 %v1467, 0.0
    %v1596 = vmax.f32 %v1468, 0.0
    %v1597 = vmax.f32 %v1469, 0.0
    %v1598 = vmax.f32 %v1470, 0.0
    %v1599 = vmax.f32 %v1471, 0.0
    %v1600 = vmax.f32 %v1472, 0.0
    %v1601 = vmax.f32 %v1473, 0.0
    %v1602 = vmax.f32 %v1474, 0.0
    %v1603 = vmax.f32 %v1475, 0.0
    %v1604 = vmax.f32 %v1476, 0.0
    %v1605 = vmax.f32 %v1477, 0.0
    %v1606 = vmax.f32 %v1478, 0.0
    %v1607 = vmax.f32 %v1479, 0.0
    %v1608 = vmax.f32 %v1480, 0.0
    %v1609 = vmax.f32 %v1481, 0.0
    %v1610 = vmax.f32 %v1482, 0.0
    %v1611 = vmax.f32 %v1483, 0.0
    %v1612 = vmax.f32 %v1484, 0.0
    %v1613 = vmax.f32 %v1485, 0.0
    %v1614 = vmax.f32 %v1486, 0.0
    %v1615 = vmax.f32 %v1487, 0.0
    %v1616 = vmax.f32 %v1488, 0.0
    %v1617 = vmax.f32 %v1489, 0.0
    %v1618 = vmax.f32 %v1490, 0.0
    %v1619 = vmax.f32 %v1491, 0.0
    %v1620 = vmax.f32 %v1492, 0.0
    %v1621 = vmax.f32 %v1493, 0.0
    %v1622 = vmax.f32 %v1494, 0.0
    %v1623 = vmax.f32 %v1495, 0.0
    %v1624 = vmax.f32 %v1496, 0.0
    %v1625 = vmax.f32 %v1497, 0.0
    %v1626 = vmax.f32 %v1498, 0.0
    %v1627 = vmax.f32 %v1499, 0.0
    %v1628 = vmax.f32 %v1500, 0.0
    %v1629 = vmax.f32 %v1501, 0.0
    %v1630 = vmax.f32 %v1502, 0.0
    %v1631 = vld [vmem:[#allocation7] sm:$0xff]
    %v1632 = vld [vmem:[#allocation7 + $0x8] sm:$0xff]
    %v1633 = vld [vmem:[#allocation7 + $0x10] sm:$0xff]
    %v1634 = vld [vmem:[#allocation7 + $0x18] sm:$0xff]
    %v1635 = vld [vmem:[#allocation7 + $0x20] sm:$0xff]
    %v1636 = vld [vmem:[#allocation7 + $0x28] sm:$0xff]
    %v1637 = vld [vmem:[#allocation7 + $0x30] sm:$0xff]
    %v1638 = vld [vmem:[#allocation7 + $0x38] sm:$0xff]
    %v1639 = vld [vmem:[#allocation7 + $0x40] sm:$0xff]
    %v1640 = vld [vmem:[#allocation7 + $0x48] sm:$0xff]
    %v1641 = vld [vmem:[#allocation7 + $0x50] sm:$0xff]
    %v1642 = vld [vmem:[#allocation7 + $0x58] sm:$0xff]
    %v1643 = vld [vmem:[#allocation7 + $0x60] sm:$0xff]
    %v1644 = vld [vmem:[#allocation7 + $0x68] sm:$0xff]
    %v1645 = vld [vmem:[#allocation7 + $0x70] sm:$0xff]
    %v1646 = vld [vmem:[#allocation7 + $0x78] sm:$0xff]
    %v1647 = vld [vmem:[#allocation7 + $0x80] sm:$0xff]
    %v1648 = vld [vmem:[#allocation7 + $0x88] sm:$0xff]
    %v1649 = vld [vmem:[#allocation7 + $0x90] sm:$0xff]
    %v1650 = vld [vmem:[#allocation7 + $0x98] sm:$0xff]
    %v1651 = vld [vmem:[#allocation7 + $0xa0] sm:$0xff]
    %v1652 = vld [vmem:[#allocation7 + $0xa8] sm:$0xff]
    %v1653 = vld [vmem:[#allocation7 + $0xb0] sm:$0xff]
    %v1654 = vld [vmem:[#allocation7 + $0xb8] sm:$0xff]
    %v1655 = vld [vmem:[#allocation7 + $0xc0] sm:$0xff]
    %v1656 = vld [vmem:[#allocation7 + $0xc8] sm:$0xff]
    %v1657 = vld [vmem:[#allocation7 + $0xd0] sm:$0xff]
    %v1658 = vld [vmem:[#allocation7 + $0xd8] sm:$0xff]
    %v1659 = vld [vmem:[#allocation7 + $0xe0] sm:$0xff]
    %v1660 = vld [vmem:[#allocation7 + $0xe8] sm:$0xff]
    %v1661 = vld [vmem:[#allocation7 + $0xf0] sm:$0xff]
    %v1662 = vld [vmem:[#allocation7 + $0xf8] sm:$0xff]
    %v1663 = vld [vmem:[#allocation7 + $0x100] sm:$0xff]
    %v1664 = vld [vmem:[#allocation7 + $0x108] sm:$0xff]
    %v1665 = vld [vmem:[#allocation7 + $0x110] sm:$0xff]
    %v1666 = vld [vmem:[#allocation7 + $0x118] sm:$0xff]
    %v1667 = vld [vmem:[#allocation7 + $0x120] sm:$0xff]
    %v1668 = vld [vmem:[#allocation7 + $0x128] sm:$0xff]
    %v1669 = vld [vmem:[#allocation7 + $0x130] sm:$0xff]
    %v1670 = vld [vmem:[#allocation7 + $0x138] sm:$0xff]
    %v1671 = vld [vmem:[#allocation7 + $0x140] sm:$0xff]
    %v1672 = vld [vmem:[#allocation7 + $0x148] sm:$0xff]
    %v1673 = vld [vmem:[#allocation7 + $0x150] sm:$0xff]
    %v1674 = vld [vmem:[#allocation7 + $0x158] sm:$0xff]
    %v1675 = vld [vmem:[#allocation7 + $0x160] sm:$0xff]
    %v1676 = vld [vmem:[#allocation7 + $0x168] sm:$0xff]
    %v1677 = vld [vmem:[#allocation7 + $0x170] sm:$0xff]
    %v1678 = vld [vmem:[#allocation7 + $0x178] sm:$0xff]
    %v1679 = vld [vmem:[#allocation7 + $0x180] sm:$0xff]
    %v1680 = vld [vmem:[#allocation7 + $0x188] sm:$0xff]
    %v1681 = vld [vmem:[#allocation7 + $0x190] sm:$0xff]
    %v1682 = vld [vmem:[#allocation7 + $0x198] sm:$0xff]
    %v1683 = vld [vmem:[#allocation7 + $0x1a0] sm:$0xff]
    %v1684 = vld [vmem:[#allocation7 + $0x1a8] sm:$0xff]
    %v1685 = vld [vmem:[#allocation7 + $0x1b0] sm:$0xff]
    %v1686 = vld [vmem:[#allocation7 + $0x1b8] sm:$0xff]
    %v1687 = vld [vmem:[#allocation7 + $0x1c0] sm:$0xff]
    %v1688 = vld [vmem:[#allocation7 + $0x1c8] sm:$0xff]
    %v1689 = vld [vmem:[#allocation7 + $0x1d0] sm:$0xff]
    %v1690 = vld [vmem:[#allocation7 + $0x1d8] sm:$0xff]
    %v1691 = vld [vmem:[#allocation7 + $0x1e0] sm:$0xff]
    %v1692 = vld [vmem:[#allocation7 + $0x1e8] sm:$0xff]
    %v1693 = vld [vmem:[#allocation7 + $0x1f0] sm:$0xff]
    %v1694 = vld [vmem:[#allocation7 + $0x1f8] sm:$0xff]
    %v1695 = vld [vmem:[#allocation7 + $0x200] sm:$0xff]
    %v1696 = vld [vmem:[#allocation7 + $0x208] sm:$0xff]
    %v1697 = vld [vmem:[#allocation7 + $0x210] sm:$0xff]
    %v1698 = vld [vmem:[#allocation7 + $0x218] sm:$0xff]
    %v1699 = vld [vmem:[#allocation7 + $0x220] sm:$0xff]
    %v1700 = vld [vmem:[#allocation7 + $0x228] sm:$0xff]
    %v1701 = vld [vmem:[#allocation7 + $0x230] sm:$0xff]
    %v1702 = vld [vmem:[#allocation7 + $0x238] sm:$0xff]
    %v1703 = vld [vmem:[#allocation7 + $0x240] sm:$0xff]
    %v1704 = vld [vmem:[#allocation7 + $0x248] sm:$0xff]
    %v1705 = vld [vmem:[#allocation7 + $0x250] sm:$0xff]
    %v1706 = vld [vmem:[#allocation7 + $0x258] sm:$0xff]
    %v1707 = vld [vmem:[#allocation7 + $0x260] sm:$0xff]
    %v1708 = vld [vmem:[#allocation7 + $0x268] sm:$0xff]
    %v1709 = vld [vmem:[#allocation7 + $0x270] sm:$0xff]
    %v1710 = vld [vmem:[#allocation7 + $0x278] sm:$0xff]
    %v1711 = vld [vmem:[#allocation7 + $0x280] sm:$0xff]
    %v1712 = vld [vmem:[#allocation7 + $0x288] sm:$0xff]
    %v1713 = vld [vmem:[#allocation7 + $0x290] sm:$0xff]
    %v1714 = vld [vmem:[#allocation7 + $0x298] sm:$0xff]
    %v1715 = vld [vmem:[#allocation7 + $0x2a0] sm:$0xff]
    %v1716 = vld [vmem:[#allocation7 + $0x2a8] sm:$0xff]
    %v1717 = vld [vmem:[#allocation7 + $0x2b0] sm:$0xff]
    %v1718 = vld [vmem:[#allocation7 + $0x2b8] sm:$0xff]
    %v1719 = vld [vmem:[#allocation7 + $0x2c0] sm:$0xff]
    %v1720 = vld [vmem:[#allocation7 + $0x2c8] sm:$0xff]
    %v1721 = vld [vmem:[#allocation7 + $0x2d0] sm:$0xff]
    %v1722 = vld [vmem:[#allocation7 + $0x2d8] sm:$0xff]
    %v1723 = vld [vmem:[#allocation7 + $0x2e0] sm:$0xff]
    %v1724 = vld [vmem:[#allocation7 + $0x2e8] sm:$0xff]
    %v1725 = vld [vmem:[#allocation7 + $0x2f0] sm:$0xff]
    %v1726 = vld [vmem:[#allocation7 + $0x2f8] sm:$0xff]
    %v1727 = vld [vmem:[#allocation7 + $0x300] sm:$0xff]
    %v1728 = vld [vmem:[#allocation7 + $0x308] sm:$0xff]
    %v1729 = vld [vmem:[#allocation7 + $0x310] sm:$0xff]
    %v1730 = vld [vmem:[#allocation7 + $0x318] sm:$0xff]
    %v1731 = vld [vmem:[#allocation7 + $0x320] sm:$0xff]
    %v1732 = vld [vmem:[#allocation7 + $0x328] sm:$0xff]
    %v1733 = vld [vmem:[#allocation7 + $0x330] sm:$0xff]
    %v1734 = vld [vmem:[#allocation7 + $0x338] sm:$0xff]
    %v1735 = vld [vmem:[#allocation7 + $0x340] sm:$0xff]
    %v1736 = vld [vmem:[#allocation7 + $0x348] sm:$0xff]
    %v1737 = vld [vmem:[#allocation7 + $0x350] sm:$0xff]
    %v1738 = vld [vmem:[#allocation7 + $0x358] sm:$0xff]
    %v1739 = vld [vmem:[#allocation7 + $0x360] sm:$0xff]
    %v1740 = vld [vmem:[#allocation7 + $0x368] sm:$0xff]
    %v1741 = vld [vmem:[#allocation7 + $0x370] sm:$0xff]
    %v1742 = vld [vmem:[#allocation7 + $0x378] sm:$0xff]
    %v1743 = vld [vmem:[#allocation7 + $0x380] sm:$0xff]
    %v1744 = vld [vmem:[#allocation7 + $0x388] sm:$0xff]
    %v1745 = vld [vmem:[#allocation7 + $0x390] sm:$0xff]
    %v1746 = vld [vmem:[#allocation7 + $0x398] sm:$0xff]
    %v1747 = vld [vmem:[#allocation7 + $0x3a0] sm:$0xff]
    %v1748 = vld [vmem:[#allocation7 + $0x3a8] sm:$0xff]
    %v1749 = vld [vmem:[#allocation7 + $0x3b0] sm:$0xff]
    %v1750 = vld [vmem:[#allocation7 + $0x3b8] sm:$0xff]
    %v1751 = vld [vmem:[#allocation7 + $0x3c0] sm:$0xff]
    %v1752 = vld [vmem:[#allocation7 + $0x3c8] sm:$0xff]
    %v1753 = vld [vmem:[#allocation7 + $0x3d0] sm:$0xff]
    %v1754 = vld [vmem:[#allocation7 + $0x3d8] sm:$0xff]
    %v1755 = vld [vmem:[#allocation7 + $0x3e0] sm:$0xff]
    %v1756 = vld [vmem:[#allocation7 + $0x3e8] sm:$0xff]
    %v1757 = vld [vmem:[#allocation7 + $0x3f0] sm:$0xff]
    %v1758 = vld [vmem:[#allocation7 + $0x3f8] sm:$0xff]
    %v1759 = vld [vmem:[%s5] sm:$0x3]
    %v1761 = vperm.slane %v1759, 0
    %v1762 = vperm.slane %v1759, 1
    %1765 = vmatpush.msra.mxu0 %v1661
    %1766 = vmatpush.msra.mxu0 %v1659
    %1767 = vmatpush.msra.mxu0 %v1657
    %1768 = vmatpush.msra.mxu0 %v1655
    %1769 = vmatpush.msra.mxu0 %v1653
    %1770 = vmatpush.msra.mxu0 %v1651
    %1771 = vmatpush.msra.mxu0 %v1649
    %1772 = vmatpush.msra.mxu0 %v1647
    %1773 = vmatpush.msra.mxu0 %v1645
    %1774 = vmatpush.msra.mxu0 %v1643
    %1775 = vmatpush.msra.mxu0 %v1641
    %1776 = vmatpush.msra.mxu0 %v1639
    %1777 = vmatpush.msra.mxu0 %v1637
    %1778 = vmatpush.msra.mxu0 %v1635
    %1779 = vmatpush.msra.mxu0 %v1633
    %1780 = vmatpush.msra.mxu0 %v1631
    %1781 = vmatmul.f32.gmra.mxu0 %v1503
    %v1782 = vpop.f32.mrf.mxu0
    %v1783 = vadd.f32 %v1761, %v1782
    %1784 = vmatmul.f32.gmra.mxu0 %v1507
    %v1785 = vpop.f32.mrf.mxu0
    %v1786 = vadd.f32 %v1761, %v1785
    %1787 = vmatmul.f32.gmra.mxu0 %v1511
    %v1788 = vpop.f32.mrf.mxu0
    %v1789 = vadd.f32 %v1761, %v1788
    %1790 = vmatmul.f32.gmra.mxu0 %v1515
    %v1791 = vpop.f32.mrf.mxu0
    %v1792 = vadd.f32 %v1761, %v1791
    %1793 = vmatmul.f32.gmra.mxu0 %v1519
    %v1794 = vpop.f32.mrf.mxu0
    %v1795 = vadd.f32 %v1761, %v1794
    %1796 = vmatmul.f32.gmra.mxu0 %v1523
    %v1797 = vpop.f32.mrf.mxu0
    %v1798 = vadd.f32 %v1761, %v1797
    %1799 = vmatmul.f32.gmra.mxu0 %v1527
    %v1800 = vpop.f32.mrf.mxu0
    %v1801 = vadd.f32 %v1761, %v1800
    %1802 = vmatmul.f32.gmra.mxu0 %v1531
    %v1803 = vpop.f32.mrf.mxu0
    %v1804 = vadd.f32 %v1761, %v1803
    %1805 = vmatmul.f32.gmra.mxu0 %v1535
    %v1806 = vpop.f32.mrf.mxu0
    %v1807 = vadd.f32 %v1761, %v1806
    %1808 = vmatmul.f32.gmra.mxu0 %v1539
    %v1809 = vpop.f32.mrf.mxu0
    %v1810 = vadd.f32 %v1761, %v1809
    %1811 = vmatmul.f32.gmra.mxu0 %v1543
    %v1812 = vpop.f32.mrf.mxu0
    %v1813 = vadd.f32 %v1761, %v1812
    %1814 = vmatmul.f32.gmra.mxu0 %v1547
    %v1815 = vpop.f32.mrf.mxu0
    %v1816 = vadd.f32 %v1761, %v1815
    %1817 = vmatmul.f32.gmra.mxu0 %v1551
    %v1818 = vpop.f32.mrf.mxu0
    %v1819 = vadd.f32 %v1761, %v1818
    %1820 = vmatmul.f32.gmra.mxu0 %v1555
    %v1821 = vpop.f32.mrf.mxu0
    %v1822 = vadd.f32 %v1761, %v1821
    %1823 = vmatmul.f32.gmra.mxu0 %v1559
    %v1824 = vpop.f32.mrf.mxu0
    %v1825 = vadd.f32 %v1761, %v1824
    %1826 = vmatmul.f32.gmra.mxu0 %v1563
    %v1827 = vpop.f32.mrf.mxu0
    %v1828 = vadd.f32 %v1761, %v1827
    %1829 = vmatmul.f32.gmra.mxu0 %v1567
    %v1830 = vpop.f32.mrf.mxu0
    %v1831 = vadd.f32 %v1761, %v1830
    %1832 = vmatmul.f32.gmra.mxu0 %v1571
    %v1833 = vpop.f32.mrf.mxu0
    %v1834 = vadd.f32 %v1761, %v1833
    %1835 = vmatmul.f32.gmra.mxu0 %v1575
    %v1836 = vpop.f32.mrf.mxu0
    %v1837 = vadd.f32 %v1761, %v1836
    %1838 = vmatmul.f32.gmra.mxu0 %v1579
    %v1839 = vpop.f32.mrf.mxu0
    %v1840 = vadd.f32 %v1761, %v1839
    %1841 = vmatmul.f32.gmra.mxu0 %v1583
    %v1842 = vpop.f32.mrf.mxu0
    %v1843 = vadd.f32 %v1761, %v1842
    %1844 = vmatmul.f32.gmra.mxu0 %v1587
    %v1845 = vpop.f32.mrf.mxu0
    %v1846 = vadd.f32 %v1761, %v1845
    %1847 = vmatmul.f32.gmra.mxu0 %v1591
    %v1848 = vpop.f32.mrf.mxu0
    %v1849 = vadd.f32 %v1761, %v1848
    %1850 = vmatmul.f32.gmra.mxu0 %v1595
    %v1851 = vpop.f32.mrf.mxu0
    %v1852 = vadd.f32 %v1761, %v1851
    %1853 = vmatmul.f32.gmra.mxu0 %v1599
    %v1854 = vpop.f32.mrf.mxu0
    %v1855 = vadd.f32 %v1761, %v1854
    %1856 = vmatmul.f32.gmra.mxu0 %v1603
    %v1857 = vpop.f32.mrf.mxu0
    %v1858 = vadd.f32 %v1761, %v1857
    %1859 = vmatmul.f32.gmra.mxu0 %v1607
    %v1860 = vpop.f32.mrf.mxu0
    %v1861 = vadd.f32 %v1761, %v1860
    %1862 = vmatmul.f32.gmra.mxu0 %v1611
    %v1863 = vpop.f32.mrf.mxu0
    %v1864 = vadd.f32 %v1761, %v1863
    %1865 = vmatmul.f32.gmra.mxu0 %v1615
    %v1866 = vpop.f32.mrf.mxu0
    %v1867 = vadd.f32 %v1761, %v1866
    %1868 = vmatmul.f32.gmra.mxu0 %v1619
    %v1869 = vpop.f32.mrf.mxu0
    %v1870 = vadd.f32 %v1761, %v1869
    %1871 = vmatmul.f32.gmra.mxu0 %v1623
    %v1872 = vpop.f32.mrf.mxu0
    %v1873 = vadd.f32 %v1761, %v1872
    %1874 = vmatmul.f32.gmra.mxu0 %v1627
    %v1875 = vpop.f32.mrf.mxu0
    %v1876 = vadd.f32 %v1761, %v1875
    %1877 = vdwg.mxu0
    %1878 = vmatpush.msra.mxu0 %v1693
    %1879 = vmatpush.msra.mxu0 %v1691
    %1880 = vmatpush.msra.mxu0 %v1689
    %1881 = vmatpush.msra.mxu0 %v1687
    %1882 = vmatpush.msra.mxu0 %v1685
    %1883 = vmatpush.msra.mxu0 %v1683
    %1884 = vmatpush.msra.mxu0 %v1681
    %1885 = vmatpush.msra.mxu0 %v1679
    %1886 = vmatpush.msra.mxu0 %v1677
    %1887 = vmatpush.msra.mxu0 %v1675
    %1888 = vmatpush.msra.mxu0 %v1673
    %1889 = vmatpush.msra.mxu0 %v1671
    %1890 = vmatpush.msra.mxu0 %v1669
    %1891 = vmatpush.msra.mxu0 %v1667
    %1892 = vmatpush.msra.mxu0 %v1665
    %1893 = vmatpush.msra.mxu0 %v1663
    %1894 = vmatmul.f32.gmra.mxu0 %v1504
    %v1895 = vpop.f32.mrf.mxu0
    %v1896 = vadd.f32 %v1783, %v1895
    %1897 = vmatmul.f32.gmra.mxu0 %v1508
    %v1898 = vpop.f32.mrf.mxu0
    %v1899 = vadd.f32 %v1786, %v1898
    %1900 = vmatmul.f32.gmra.mxu0 %v1512
    %v1901 = vpop.f32.mrf.mxu0
    %v1902 = vadd.f32 %v1789, %v1901
    %1903 = vmatmul.f32.gmra.mxu0 %v1516
    %v1904 = vpop.f32.mrf.mxu0
    %v1905 = vadd.f32 %v1792, %v1904
    %1906 = vmatmul.f32.gmra.mxu0 %v1520
    %v1907 = vpop.f32.mrf.mxu0
    %v1908 = vadd.f32 %v1795, %v1907
    %1909 = vmatmul.f32.gmra.mxu0 %v1524
    %v1910 = vpop.f32.mrf.mxu0
    %v1911 = vadd.f32 %v1798, %v1910
    %1912 = vmatmul.f32.gmra.mxu0 %v1528
    %v1913 = vpop.f32.mrf.mxu0
    %v1914 = vadd.f32 %v1801, %v1913
    %1915 = vmatmul.f32.gmra.mxu0 %v1532
    %v1916 = vpop.f32.mrf.mxu0
    %v1917 = vadd.f32 %v1804, %v1916
    %1918 = vmatmul.f32.gmra.mxu0 %v1536
    %v1919 = vpop.f32.mrf.mxu0
    %v1920 = vadd.f32 %v1807, %v1919
    %1921 = vmatmul.f32.gmra.mxu0 %v1540
    %v1922 = vpop.f32.mrf.mxu0
    %v1923 = vadd.f32 %v1810, %v1922
    %1924 = vmatmul.f32.gmra.mxu0 %v1544
    %v1925 = vpop.f32.mrf.mxu0
    %v1926 = vadd.f32 %v1813, %v1925
    %1927 = vmatmul.f32.gmra.mxu0 %v1548
    %v1928 = vpop.f32.mrf.mxu0
    %v1929 = vadd.f32 %v1816, %v1928
    %1930 = vmatmul.f32.gmra.mxu0 %v1552
    %v1931 = vpop.f32.mrf.mxu0
    %v1932 = vadd.f32 %v1819, %v1931
    %1933 = vmatmul.f32.gmra.mxu0 %v1556
    %v1934 = vpop.f32.mrf.mxu0
    %v1935 = vadd.f32 %v1822, %v1934
    %1936 = vmatmul.f32.gmra.mxu0 %v1560
    %v1937 = vpop.f32.mrf.mxu0
    %v1938 = vadd.f32 %v1825, %v1937
    %1939 = vmatmul.f32.gmra.mxu0 %v1564
    %v1940 = vpop.f32.mrf.mxu0
    %v1941 = vadd.f32 %v1828, %v1940
    %1942 = vmatmul.f32.gmra.mxu0 %v1568
    %v1943 = vpop.f32.mrf.mxu0
    %v1944 = vadd.f32 %v1831, %v1943
    %1945 = vmatmul.f32.gmra.mxu0 %v1572
    %v1946 = vpop.f32.mrf.mxu0
    %v1947 = vadd.f32 %v1834, %v1946
    %1948 = vmatmul.f32.gmra.mxu0 %v1576
    %v1949 = vpop.f32.mrf.mxu0
    %v1950 = vadd.f32 %v1837, %v1949
    %1951 = vmatmul.f32.gmra.mxu0 %v1580
    %v1952 = vpop.f32.mrf.mxu0
    %v1953 = vadd.f32 %v1840, %v1952
    %1954 = vmatmul.f32.gmra.mxu0 %v1584
    %v1955 = vpop.f32.mrf.mxu0
    %v1956 = vadd.f32 %v1843, %v1955
    %1957 = vmatmul.f32.gmra.mxu0 %v1588
    %v1958 = vpop.f32.mrf.mxu0
    %v1959 = vadd.f32 %v1846, %v1958
    %1960 = vmatmul.f32.gmra.mxu0 %v1592
    %v1961 = vpop.f32.mrf.mxu0
    %v1962 = vadd.f32 %v1849, %v1961
    %1963 = vmatmul.f32.gmra.mxu0 %v1596
    %v1964 = vpop.f32.mrf.mxu0
    %v1965 = vadd.f32 %v1852, %v1964
    %1966 = vmatmul.f32.gmra.mxu0 %v1600
    %v1967 = vpop.f32.mrf.mxu0
    %v1968 = vadd.f32 %v1855, %v1967
    %1969 = vmatmul.f32.gmra.mxu0 %v1604
    %v1970 = vpop.f32.mrf.mxu0
    %v1971 = vadd.f32 %v1858, %v1970
    %1972 = vmatmul.f32.gmra.mxu0 %v1608
    %v1973 = vpop.f32.mrf.mxu0
    %v1974 = vadd.f32 %v1861, %v1973
    %1975 = vmatmul.f32.gmra.mxu0 %v1612
    %v1976 = vpop.f32.mrf.mxu0
    %v1977 = vadd.f32 %v1864, %v1976
    %1978 = vmatmul.f32.gmra.mxu0 %v1616
    %v1979 = vpop.f32.mrf.mxu0
    %v1980 = vadd.f32 %v1867, %v1979
    %1981 = vmatmul.f32.gmra.mxu0 %v1620
    %v1982 = vpop.f32.mrf.mxu0
    %v1983 = vadd.f32 %v1870, %v1982
    %1984 = vmatmul.f32.gmra.mxu0 %v1624
    %v1985 = vpop.f32.mrf.mxu0
    %v1986 = vadd.f32 %v1873, %v1985
    %1987 = vmatmul.f32.gmra.mxu0 %v1628
    %v1988 = vpop.f32.mrf.mxu0
    %v1989 = vadd.f32 %v1876, %v1988
    %1990 = vdwg.mxu0
    %1991 = vmatpush.msra.mxu0 %v1725
    %1992 = vmatpush.msra.mxu0 %v1723
    %1993 = vmatpush.msra.mxu0 %v1721
    %1994 = vmatpush.msra.mxu0 %v1719
    %1995 = vmatpush.msra.mxu0 %v1717
    %1996 = vmatpush.msra.mxu0 %v1715
    %1997 = vmatpush.msra.mxu0 %v1713
    %1998 = vmatpush.msra.mxu0 %v1711
    %1999 = vmatpush.msra.mxu0 %v1709
    %2000 = vmatpush.msra.mxu0 %v1707
    %2001 = vmatpush.msra.mxu0 %v1705
    %2002 = vmatpush.msra.mxu0 %v1703
    %2003 = vmatpush.msra.mxu0 %v1701
    %2004 = vmatpush.msra.mxu0 %v1699
    %2005 = vmatpush.msra.mxu0 %v1697
    %2006 = vmatpush.msra.mxu0 %v1695
    %2007 = vmatmul.f32.gmra.mxu0 %v1505
    %v2008 = vpop.f32.mrf.mxu0
    %v2009 = vadd.f32 %v1896, %v2008
    %2010 = vmatmul.f32.gmra.mxu0 %v1509
    %v2011 = vpop.f32.mrf.mxu0
    %v2012 = vadd.f32 %v1899, %v2011
    %2013 = vmatmul.f32.gmra.mxu0 %v1513
    %v2014 = vpop.f32.mrf.mxu0
    %v2015 = vadd.f32 %v1902, %v2014
    %2016 = vmatmul.f32.gmra.mxu0 %v1517
    %v2017 = vpop.f32.mrf.mxu0
    %v2018 = vadd.f32 %v1905, %v2017
    %2019 = vmatmul.f32.gmra.mxu0 %v1521
    %v2020 = vpop.f32.mrf.mxu0
    %v2021 = vadd.f32 %v1908, %v2020
    %2022 = vmatmul.f32.gmra.mxu0 %v1525
    %v2023 = vpop.f32.mrf.mxu0
    %v2024 = vadd.f32 %v1911, %v2023
    %2025 = vmatmul.f32.gmra.mxu0 %v1529
    %v2026 = vpop.f32.mrf.mxu0
    %v2027 = vadd.f32 %v1914, %v2026
    %2028 = vmatmul.f32.gmra.mxu0 %v1533
    %v2029 = vpop.f32.mrf.mxu0
    %v2030 = vadd.f32 %v1917, %v2029
    %2031 = vmatmul.f32.gmra.mxu0 %v1537
    %v2032 = vpop.f32.mrf.mxu0
    %v2033 = vadd.f32 %v1920, %v2032
    %2034 = vmatmul.f32.gmra.mxu0 %v1541
    %v2035 = vpop.f32.mrf.mxu0
    %v2036 = vadd.f32 %v1923, %v2035
    %2037 = vmatmul.f32.gmra.mxu0 %v1545
    %v2038 = vpop.f32.mrf.mxu0
    %v2039 = vadd.f32 %v1926, %v2038
    %2040 = vmatmul.f32.gmra.mxu0 %v1549
    %v2041 = vpop.f32.mrf.mxu0
    %v2042 = vadd.f32 %v1929, %v2041
    %2043 = vmatmul.f32.gmra.mxu0 %v1553
    %v2044 = vpop.f32.mrf.mxu0
    %v2045 = vadd.f32 %v1932, %v2044
    %2046 = vmatmul.f32.gmra.mxu0 %v1557
    %v2047 = vpop.f32.mrf.mxu0
    %v2048 = vadd.f32 %v1935, %v2047
    %2049 = vmatmul.f32.gmra.mxu0 %v1561
    %v2050 = vpop.f32.mrf.mxu0
    %v2051 = vadd.f32 %v1938, %v2050
    %2052 = vmatmul.f32.gmra.mxu0 %v1565
    %v2053 = vpop.f32.mrf.mxu0
    %v2054 = vadd.f32 %v1941, %v2053
    %2055 = vmatmul.f32.gmra.mxu0 %v1569
    %v2056 = vpop.f32.mrf.mxu0
    %v2057 = vadd.f32 %v1944, %v2056
    %2058 = vmatmul.f32.gmra.mxu0 %v1573
    %v2059 = vpop.f32.mrf.mxu0
    %v2060 = vadd.f32 %v1947, %v2059
    %2061 = vmatmul.f32.gmra.mxu0 %v1577
    %v2062 = vpop.f32.mrf.mxu0
    %v2063 = vadd.f32 %v1950, %v2062
    %2064 = vmatmul.f32.gmra.mxu0 %v1581
    %v2065 = vpop.f32.mrf.mxu0
    %v2066 = vadd.f32 %v1953, %v2065
    %2067 = vmatmul.f32.gmra.mxu0 %v1585
    %v2068 = vpop.f32.mrf.mxu0
    %v2069 = vadd.f32 %v1956, %v2068
    %2070 = vmatmul.f32.gmra.mxu0 %v1589
    %v2071 = vpop.f32.mrf.mxu0
    %v2072 = vadd.f32 %v1959, %v2071
    %2073 = vmatmul.f32.gmra.mxu0 %v1593
    %v2074 = vpop.f32.mrf.mxu0
    %v2075 = vadd.f32 %v1962, %v2074
    %2076 = vmatmul.f32.gmra.mxu0 %v1597
    %v2077 = vpop.f32.mrf.mxu0
    %v2078 = vadd.f32 %v1965, %v2077
    %2079 = vmatmul.f32.gmra.mxu0 %v1601
    %v2080 = vpop.f32.mrf.mxu0
    %v2081 = vadd.f32 %v1968, %v2080
    %2082 = vmatmul.f32.gmra.mxu0 %v1605
    %v2083 = vpop.f32.mrf.mxu0
    %v2084 = vadd.f32 %v1971, %v2083
    %2085 = vmatmul.f32.gmra.mxu0 %v1609
    %v2086 = vpop.f32.mrf.mxu0
    %v2087 = vadd.f32 %v1974, %v2086
    %2088 = vmatmul.f32.gmra.mxu0 %v1613
    %v2089 = vpop.f32.mrf.mxu0
    %v2090 = vadd.f32 %v1977, %v2089
    %2091 = vmatmul.f32.gmra.mxu0 %v1617
    %v2092 = vpop.f32.mrf.mxu0
    %v2093 = vadd.f32 %v1980, %v2092
    %2094 = vmatmul.f32.gmra.mxu0 %v1621
    %v2095 = vpop.f32.mrf.mxu0
    %v2096 = vadd.f32 %v1983, %v2095
    %2097 = vmatmul.f32.gmra.mxu0 %v1625
    %v2098 = vpop.f32.mrf.mxu0
    %v2099 = vadd.f32 %v1986, %v2098
    %2100 = vmatmul.f32.gmra.mxu0 %v1629
    %v2101 = vpop.f32.mrf.mxu0
    %v2102 = vadd.f32 %v1989, %v2101
    %2103 = vdwg.mxu0
    %2104 = vmatpush.msra.mxu0 %v1757
    %2105 = vmatpush.msra.mxu0 %v1755
    %2106 = vmatpush.msra.mxu0 %v1753
    %2107 = vmatpush.msra.mxu0 %v1751
    %2108 = vmatpush.msra.mxu0 %v1749
    %2109 = vmatpush.msra.mxu0 %v1747
    %2110 = vmatpush.msra.mxu0 %v1745
    %2111 = vmatpush.msra.mxu0 %v1743
    %2112 = vmatpush.msra.mxu0 %v1741
    %2113 = vmatpush.msra.mxu0 %v1739
    %2114 = vmatpush.msra.mxu0 %v1737
    %2115 = vmatpush.msra.mxu0 %v1735
    %2116 = vmatpush.msra.mxu0 %v1733
    %2117 = vmatpush.msra.mxu0 %v1731
    %2118 = vmatpush.msra.mxu0 %v1729
    %2119 = vmatpush.msra.mxu0 %v1727
    %2120 = vmatmul.f32.gmra.mxu0 %v1506
    %v2121 = vpop.f32.mrf.mxu0
    %v2122 = vadd.f32 %v2009, %v2121
    %2123 = vmatmul.f32.gmra.mxu0 %v1510
    %v2124 = vpop.f32.mrf.mxu0
    %v2125 = vadd.f32 %v2012, %v2124
    %2126 = vmatmul.f32.gmra.mxu0 %v1514
    %v2127 = vpop.f32.mrf.mxu0
    %v2128 = vadd.f32 %v2015, %v2127
    %2129 = vmatmul.f32.gmra.mxu0 %v1518
    %v2130 = vpop.f32.mrf.mxu0
    %v2131 = vadd.f32 %v2018, %v2130
    %2132 = vmatmul.f32.gmra.mxu0 %v1522
    %v2133 = vpop.f32.mrf.mxu0
    %v2134 = vadd.f32 %v2021, %v2133
    %2135 = vmatmul.f32.gmra.mxu0 %v1526
    %v2136 = vpop.f32.mrf.mxu0
    %v2137 = vadd.f32 %v2024, %v2136
    %2138 = vmatmul.f32.gmra.mxu0 %v1530
    %v2139 = vpop.f32.mrf.mxu0
    %v2140 = vadd.f32 %v2027, %v2139
    %2141 = vmatmul.f32.gmra.mxu0 %v1534
    %v2142 = vpop.f32.mrf.mxu0
    %v2143 = vadd.f32 %v2030, %v2142
    %2144 = vmatmul.f32.gmra.mxu0 %v1538
    %v2145 = vpop.f32.mrf.mxu0
    %v2146 = vadd.f32 %v2033, %v2145
    %2147 = vmatmul.f32.gmra.mxu0 %v1542
    %v2148 = vpop.f32.mrf.mxu0
    %v2149 = vadd.f32 %v2036, %v2148
    %2150 = vmatmul.f32.gmra.mxu0 %v1546
    %v2151 = vpop.f32.mrf.mxu0
    %v2152 = vadd.f32 %v2039, %v2151
    %2153 = vmatmul.f32.gmra.mxu0 %v1550
    %v2154 = vpop.f32.mrf.mxu0
    %v2155 = vadd.f32 %v2042, %v2154
    %2156 = vmatmul.f32.gmra.mxu0 %v1554
    %v2157 = vpop.f32.mrf.mxu0
    %v2158 = vadd.f32 %v2045, %v2157
    %2159 = vmatmul.f32.gmra.mxu0 %v1558
    %v2160 = vpop.f32.mrf.mxu0
    %v2161 = vadd.f32 %v2048, %v2160
    %2162 = vmatmul.f32.gmra.mxu0 %v1562
    %v2163 = vpop.f32.mrf.mxu0
    %v2164 = vadd.f32 %v2051, %v2163
    %2165 = vmatmul.f32.gmra.mxu0 %v1566
    %v2166 = vpop.f32.mrf.mxu0
    %v2167 = vadd.f32 %v2054, %v2166
    %2168 = vmatmul.f32.gmra.mxu0 %v1570
    %v2169 = vpop.f32.mrf.mxu0
    %v2170 = vadd.f32 %v2057, %v2169
    %2171 = vmatmul.f32.gmra.mxu0 %v1574
    %v2172 = vpop.f32.mrf.mxu0
    %v2173 = vadd.f32 %v2060, %v2172
    %2174 = vmatmul.f32.gmra.mxu0 %v1578
    %v2175 = vpop.f32.mrf.mxu0
    %v2176 = vadd.f32 %v2063, %v2175
    %2177 = vmatmul.f32.gmra.mxu0 %v1582
    %v2178 = vpop.f32.mrf.mxu0
    %v2179 = vadd.f32 %v2066, %v2178
    %2180 = vmatmul.f32.gmra.mxu0 %v1586
    %v2181 = vpop.f32.mrf.mxu0
    %v2182 = vadd.f32 %v2069, %v2181
    %2183 = vmatmul.f32.gmra.mxu0 %v1590
    %v2184 = vpop.f32.mrf.mxu0
    %v2185 = vadd.f32 %v2072, %v2184
    %2186 = vmatmul.f32.gmra.mxu0 %v1594
    %v2187 = vpop.f32.mrf.mxu0
    %v2188 = vadd.f32 %v2075, %v2187
    %2189 = vmatmul.f32.gmra.mxu0 %v1598
    %v2190 = vpop.f32.mrf.mxu0
    %v2191 = vadd.f32 %v2078, %v2190
    %2192 = vmatmul.f32.gmra.mxu0 %v1602
    %v2193 = vpop.f32.mrf.mxu0
    %v2194 = vadd.f32 %v2081, %v2193
    %2195 = vmatmul.f32.gmra.mxu0 %v1606
    %v2196 = vpop.f32.mrf.mxu0
    %v2197 = vadd.f32 %v2084, %v2196
    %2198 = vmatmul.f32.gmra.mxu0 %v1610
    %v2199 = vpop.f32.mrf.mxu0
    %v2200 = vadd.f32 %v2087, %v2199
    %2201 = vmatmul.f32.gmra.mxu0 %v1614
    %v2202 = vpop.f32.mrf.mxu0
    %v2203 = vadd.f32 %v2090, %v2202
    %2204 = vmatmul.f32.gmra.mxu0 %v1618
    %v2205 = vpop.f32.mrf.mxu0
    %v2206 = vadd.f32 %v2093, %v2205
    %2207 = vmatmul.f32.gmra.mxu0 %v1622
    %v2208 = vpop.f32.mrf.mxu0
    %v2209 = vadd.f32 %v2096, %v2208
    %2210 = vmatmul.f32.gmra.mxu0 %v1626
    %v2211 = vpop.f32.mrf.mxu0
    %v2212 = vadd.f32 %v2099, %v2211
    %2213 = vmatmul.f32.gmra.mxu0 %v1630
    %v2214 = vpop.f32.mrf.mxu0
    %v2215 = vadd.f32 %v2102, %v2214
    %2216 = vdwg.mxu0
    %2217 = vmatpush.msra.mxu0 %v1662
    %2218 = vmatpush.msra.mxu0 %v1660
    %2219 = vmatpush.msra.mxu0 %v1658
    %2220 = vmatpush.msra.mxu0 %v1656
    %2221 = vmatpush.msra.mxu0 %v1654
    %2222 = vmatpush.msra.mxu0 %v1652
    %2223 = vmatpush.msra.mxu0 %v1650
    %2224 = vmatpush.msra.mxu0 %v1648
    %2225 = vmatpush.msra.mxu0 %v1646
    %2226 = vmatpush.msra.mxu0 %v1644
    %2227 = vmatpush.msra.mxu0 %v1642
    %2228 = vmatpush.msra.mxu0 %v1640
    %2229 = vmatpush.msra.mxu0 %v1638
    %2230 = vmatpush.msra.mxu0 %v1636
    %2231 = vmatpush.msra.mxu0 %v1634
    %2232 = vmatpush.msra.mxu0 %v1632
    %2233 = vmatmul.f32.gmra.mxu0 %v1503
    %v2234 = vpop.f32.mrf.mxu0
    %v2235 = vadd.f32 %v1762, %v2234
    %2236 = vmatmul.f32.gmra.mxu0 %v1507
    %v2237 = vpop.f32.mrf.mxu0
    %v2238 = vadd.f32 %v1762, %v2237
    %2239 = vmatmul.f32.gmra.mxu0 %v1511
    %v2240 = vpop.f32.mrf.mxu0
    %v2241 = vadd.f32 %v1762, %v2240
    %2242 = vmatmul.f32.gmra.mxu0 %v1515
    %v2243 = vpop.f32.mrf.mxu0
    %v2244 = vadd.f32 %v1762, %v2243
    %2245 = vmatmul.f32.gmra.mxu0 %v1519
    %v2246 = vpop.f32.mrf.mxu0
    %v2247 = vadd.f32 %v1762, %v2246
    %2248 = vmatmul.f32.gmra.mxu0 %v1523
    %v2249 = vpop.f32.mrf.mxu0
    %v2250 = vadd.f32 %v1762, %v2249
    %2251 = vmatmul.f32.gmra.mxu0 %v1527
    %v2252 = vpop.f32.mrf.mxu0
    %v2253 = vadd.f32 %v1762, %v2252
    %2254 = vmatmul.f32.gmra.mxu0 %v1531
    %v2255 = vpop.f32.mrf.mxu0
    %v2256 = vadd.f32 %v1762, %v2255
    %2257 = vmatmul.f32.gmra.mxu0 %v1535
    %v2258 = vpop.f32.mrf.mxu0
    %v2259 = vadd.f32 %v1762, %v2258
    %2260 = vmatmul.f32.gmra.mxu0 %v1539
    %v2261 = vpop.f32.mrf.mxu0
    %v2262 = vadd.f32 %v1762, %v2261
    %2263 = vmatmul.f32.gmra.mxu0 %v1543
    %v2264 = vpop.f32.mrf.mxu0
    %v2265 = vadd.f32 %v1762, %v2264
    %2266 = vmatmul.f32.gmra.mxu0 %v1547
    %v2267 = vpop.f32.mrf.mxu0
    %v2268 = vadd.f32 %v1762, %v2267
    %2269 = vmatmul.f32.gmra.mxu0 %v1551
    %v2270 = vpop.f32.mrf.mxu0
    %v2271 = vadd.f32 %v1762, %v2270
    %2272 = vmatmul.f32.gmra.mxu0 %v1555
    %v2273 = vpop.f32.mrf.mxu0
    %v2274 = vadd.f32 %v1762, %v2273
    %2275 = vmatmul.f32.gmra.mxu0 %v1559
    %v2276 = vpop.f32.mrf.mxu0
    %v2277 = vadd.f32 %v1762, %v2276
    %2278 = vmatmul.f32.gmra.mxu0 %v1563
    %v2279 = vpop.f32.mrf.mxu0
    %v2280 = vadd.f32 %v1762, %v2279
    %2281 = vmatmul.f32.gmra.mxu0 %v1567
    %v2282 = vpop.f32.mrf.mxu0
    %v2283 = vadd.f32 %v1762, %v2282
    %2284 = vmatmul.f32.gmra.mxu0 %v1571
    %v2285 = vpop.f32.mrf.mxu0
    %v2286 = vadd.f32 %v1762, %v2285
    %2287 = vmatmul.f32.gmra.mxu0 %v1575
    %v2288 = vpop.f32.mrf.mxu0
    %v2289 = vadd.f32 %v1762, %v2288
    %2290 = vmatmul.f32.gmra.mxu0 %v1579
    %v2291 = vpop.f32.mrf.mxu0
    %v2292 = vadd.f32 %v1762, %v2291
    %2293 = vmatmul.f32.gmra.mxu0 %v1583
    %v2294 = vpop.f32.mrf.mxu0
    %v2295 = vadd.f32 %v1762, %v2294
    %2296 = vmatmul.f32.gmra.mxu0 %v1587
    %v2297 = vpop.f32.mrf.mxu0
    %v2298 = vadd.f32 %v1762, %v2297
    %2299 = vmatmul.f32.gmra.mxu0 %v1591
    %v2300 = vpop.f32.mrf.mxu0
    %v2301 = vadd.f32 %v1762, %v2300
    %2302 = vmatmul.f32.gmra.mxu0 %v1595
    %v2303 = vpop.f32.mrf.mxu0
    %v2304 = vadd.f32 %v1762, %v2303
    %2305 = vmatmul.f32.gmra.mxu0 %v1599
    %v2306 = vpop.f32.mrf.mxu0
    %v2307 = vadd.f32 %v1762, %v2306
    %2308 = vmatmul.f32.gmra.mxu0 %v1603
    %v2309 = vpop.f32.mrf.mxu0
    %v2310 = vadd.f32 %v1762, %v2309
    %2311 = vmatmul.f32.gmra.mxu0 %v1607
    %v2312 = vpop.f32.mrf.mxu0
    %v2313 = vadd.f32 %v1762, %v2312
    %2314 = vmatmul.f32.gmra.mxu0 %v1611
    %v2315 = vpop.f32.mrf.mxu0
    %v2316 = vadd.f32 %v1762, %v2315
    %2317 = vmatmul.f32.gmra.mxu0 %v1615
    %v2318 = vpop.f32.mrf.mxu0
    %v2319 = vadd.f32 %v1762, %v2318
    %2320 = vmatmul.f32.gmra.mxu0 %v1619
    %v2321 = vpop.f32.mrf.mxu0
    %v2322 = vadd.f32 %v1762, %v2321
    %2323 = vmatmul.f32.gmra.mxu0 %v1623
    %v2324 = vpop.f32.mrf.mxu0
    %v2325 = vadd.f32 %v1762, %v2324
    %2326 = vmatmul.f32.gmra.mxu0 %v1627
    %v2327 = vpop.f32.mrf.mxu0
    %v2328 = vadd.f32 %v1762, %v2327
    %2329 = vdwg.mxu0
    %2330 = vmatpush.msra.mxu0 %v1694
    %2331 = vmatpush.msra.mxu0 %v1692
    %2332 = vmatpush.msra.mxu0 %v1690
    %2333 = vmatpush.msra.mxu0 %v1688
    %2334 = vmatpush.msra.mxu0 %v1686
    %2335 = vmatpush.msra.mxu0 %v1684
    %2336 = vmatpush.msra.mxu0 %v1682
    %2337 = vmatpush.msra.mxu0 %v1680
    %2338 = vmatpush.msra.mxu0 %v1678
    %2339 = vmatpush.msra.mxu0 %v1676
    %2340 = vmatpush.msra.mxu0 %v1674
    %2341 = vmatpush.msra.mxu0 %v1672
    %2342 = vmatpush.msra.mxu0 %v1670
    %2343 = vmatpush.msra.mxu0 %v1668
    %2344 = vmatpush.msra.mxu0 %v1666
    %2345 = vmatpush.msra.mxu0 %v1664
    %2346 = vmatmul.f32.gmra.mxu0 %v1504
    %v2347 = vpop.f32.mrf.mxu0
    %v2348 = vadd.f32 %v2235, %v2347
    %2349 = vmatmul.f32.gmra.mxu0 %v1508
    %v2350 = vpop.f32.mrf.mxu0
    %v2351 = vadd.f32 %v2238, %v2350
    %2352 = vmatmul.f32.gmra.mxu0 %v1512
    %v2353 = vpop.f32.mrf.mxu0
    %v2354 = vadd.f32 %v2241, %v2353
    %2355 = vmatmul.f32.gmra.mxu0 %v1516
    %v2356 = vpop.f32.mrf.mxu0
    %v2357 = vadd.f32 %v2244, %v2356
    %2358 = vmatmul.f32.gmra.mxu0 %v1520
    %v2359 = vpop.f32.mrf.mxu0
    %v2360 = vadd.f32 %v2247, %v2359
    %2361 = vmatmul.f32.gmra.mxu0 %v1524
    %v2362 = vpop.f32.mrf.mxu0
    %v2363 = vadd.f32 %v2250, %v2362
    %2364 = vmatmul.f32.gmra.mxu0 %v1528
    %v2365 = vpop.f32.mrf.mxu0
    %v2366 = vadd.f32 %v2253, %v2365
    %2367 = vmatmul.f32.gmra.mxu0 %v1532
    %v2368 = vpop.f32.mrf.mxu0
    %v2369 = vadd.f32 %v2256, %v2368
    %2370 = vmatmul.f32.gmra.mxu0 %v1536
    %v2371 = vpop.f32.mrf.mxu0
    %v2372 = vadd.f32 %v2259, %v2371
    %2373 = vmatmul.f32.gmra.mxu0 %v1540
    %v2374 = vpop.f32.mrf.mxu0
    %v2375 = vadd.f32 %v2262, %v2374
    %2376 = vmatmul.f32.gmra.mxu0 %v1544
    %v2377 = vpop.f32.mrf.mxu0
    %v2378 = vadd.f32 %v2265, %v2377
    %2379 = vmatmul.f32.gmra.mxu0 %v1548
    %v2380 = vpop.f32.mrf.mxu0
    %v2381 = vadd.f32 %v2268, %v2380
    %2382 = vmatmul.f32.gmra.mxu0 %v1552
    %v2383 = vpop.f32.mrf.mxu0
    %v2384 = vadd.f32 %v2271, %v2383
    %2385 = vmatmul.f32.gmra.mxu0 %v1556
    %v2386 = vpop.f32.mrf.mxu0
    %v2387 = vadd.f32 %v2274, %v2386
    %2388 = vmatmul.f32.gmra.mxu0 %v1560
    %v2389 = vpop.f32.mrf.mxu0
    %v2390 = vadd.f32 %v2277, %v2389
    %2391 = vmatmul.f32.gmra.mxu0 %v1564
    %v2392 = vpop.f32.mrf.mxu0
    %v2393 = vadd.f32 %v2280, %v2392
    %2394 = vmatmul.f32.gmra.mxu0 %v1568
    %v2395 = vpop.f32.mrf.mxu0
    %v2396 = vadd.f32 %v2283, %v2395
    %2397 = vmatmul.f32.gmra.mxu0 %v1572
    %v2398 = vpop.f32.mrf.mxu0
    %v2399 = vadd.f32 %v2286, %v2398
    %2400 = vmatmul.f32.gmra.mxu0 %v1576
    %v2401 = vpop.f32.mrf.mxu0
    %v2402 = vadd.f32 %v2289, %v2401
    %2403 = vmatmul.f32.gmra.mxu0 %v1580
    %v2404 = vpop.f32.mrf.mxu0
    %v2405 = vadd.f32 %v2292, %v2404
    %2406 = vmatmul.f32.gmra.mxu0 %v1584
    %v2407 = vpop.f32.mrf.mxu0
    %v2408 = vadd.f32 %v2295, %v2407
    %2409 = vmatmul.f32.gmra.mxu0 %v1588
    %v2410 = vpop.f32.mrf.mxu0
    %v2411 = vadd.f32 %v2298, %v2410
    %2412 = vmatmul.f32.gmra.mxu0 %v1592
    %v2413 = vpop.f32.mrf.mxu0
    %v2414 = vadd.f32 %v2301, %v2413
    %2415 = vmatmul.f32.gmra.mxu0 %v1596
    %v2416 = vpop.f32.mrf.mxu0
    %v2417 = vadd.f32 %v2304, %v2416
    %2418 = vmatmul.f32.gmra.mxu0 %v1600
    %v2419 = vpop.f32.mrf.mxu0
    %v2420 = vadd.f32 %v2307, %v2419
    %2421 = vmatmul.f32.gmra.mxu0 %v1604
    %v2422 = vpop.f32.mrf.mxu0
    %v2423 = vadd.f32 %v2310, %v2422
    %2424 = vmatmul.f32.gmra.mxu0 %v1608
    %v2425 = vpop.f32.mrf.mxu0
    %v2426 = vadd.f32 %v2313, %v2425
    %2427 = vmatmul.f32.gmra.mxu0 %v1612
    %v2428 = vpop.f32.mrf.mxu0
    %v2429 = vadd.f32 %v2316, %v2428
    %2430 = vmatmul.f32.gmra.mxu0 %v1616
    %v2431 = vpop.f32.mrf.mxu0
    %v2432 = vadd.f32 %v2319, %v2431
    %2433 = vmatmul.f32.gmra.mxu0 %v1620
    %v2434 = vpop.f32.mrf.mxu0
    %v2435 = vadd.f32 %v2322, %v2434
    %2436 = vmatmul.f32.gmra.mxu0 %v1624
    %v2437 = vpop.f32.mrf.mxu0
    %v2438 = vadd.f32 %v2325, %v2437
    %2439 = vmatmul.f32.gmra.mxu0 %v1628
    %v2440 = vpop.f32.mrf.mxu0
    %v2441 = vadd.f32 %v2328, %v2440
    %2442 = vdwg.mxu0
    %2443 = vmatpush.msra.mxu0 %v1726
    %2444 = vmatpush.msra.mxu0 %v1724
    %2445 = vmatpush.msra.mxu0 %v1722
    %2446 = vmatpush.msra.mxu0 %v1720
    %2447 = vmatpush.msra.mxu0 %v1718
    %2448 = vmatpush.msra.mxu0 %v1716
    %2449 = vmatpush.msra.mxu0 %v1714
    %2450 = vmatpush.msra.mxu0 %v1712
    %2451 = vmatpush.msra.mxu0 %v1710
    %2452 = vmatpush.msra.mxu0 %v1708
    %2453 = vmatpush.msra.mxu0 %v1706
    %2454 = vmatpush.msra.mxu0 %v1704
    %2455 = vmatpush.msra.mxu0 %v1702
    %2456 = vmatpush.msra.mxu0 %v1700
    %2457 = vmatpush.msra.mxu0 %v1698
    %2458 = vmatpush.msra.mxu0 %v1696
    %2459 = vmatmul.f32.gmra.mxu0 %v1505
    %v2460 = vpop.f32.mrf.mxu0
    %v2461 = vadd.f32 %v2348, %v2460
    %2462 = vmatmul.f32.gmra.mxu0 %v1509
    %v2463 = vpop.f32.mrf.mxu0
    %v2464 = vadd.f32 %v2351, %v2463
    %2465 = vmatmul.f32.gmra.mxu0 %v1513
    %v2466 = vpop.f32.mrf.mxu0
    %v2467 = vadd.f32 %v2354, %v2466
    %2468 = vmatmul.f32.gmra.mxu0 %v1517
    %v2469 = vpop.f32.mrf.mxu0
    %v2470 = vadd.f32 %v2357, %v2469
    %2471 = vmatmul.f32.gmra.mxu0 %v1521
    %v2472 = vpop.f32.mrf.mxu0
    %v2473 = vadd.f32 %v2360, %v2472
    %2474 = vmatmul.f32.gmra.mxu0 %v1525
    %v2475 = vpop.f32.mrf.mxu0
    %v2476 = vadd.f32 %v2363, %v2475
    %2477 = vmatmul.f32.gmra.mxu0 %v1529
    %v2478 = vpop.f32.mrf.mxu0
    %v2479 = vadd.f32 %v2366, %v2478
    %2480 = vmatmul.f32.gmra.mxu0 %v1533
    %v2481 = vpop.f32.mrf.mxu0
    %v2482 = vadd.f32 %v2369, %v2481
    %2483 = vmatmul.f32.gmra.mxu0 %v1537
    %v2484 = vpop.f32.mrf.mxu0
    %v2485 = vadd.f32 %v2372, %v2484
    %2486 = vmatmul.f32.gmra.mxu0 %v1541
    %v2487 = vpop.f32.mrf.mxu0
    %v2488 = vadd.f32 %v2375, %v2487
    %2489 = vmatmul.f32.gmra.mxu0 %v1545
    %v2490 = vpop.f32.mrf.mxu0
    %v2491 = vadd.f32 %v2378, %v2490
    %2492 = vmatmul.f32.gmra.mxu0 %v1549
    %v2493 = vpop.f32.mrf.mxu0
    %v2494 = vadd.f32 %v2381, %v2493
    %2495 = vmatmul.f32.gmra.mxu0 %v1553
    %v2496 = vpop.f32.mrf.mxu0
    %v2497 = vadd.f32 %v2384, %v2496
    %2498 = vmatmul.f32.gmra.mxu0 %v1557
    %v2499 = vpop.f32.mrf.mxu0
    %v2500 = vadd.f32 %v2387, %v2499
    %2501 = vmatmul.f32.gmra.mxu0 %v1561
    %v2502 = vpop.f32.mrf.mxu0
    %v2503 = vadd.f32 %v2390, %v2502
    %2504 = vmatmul.f32.gmra.mxu0 %v1565
    %v2505 = vpop.f32.mrf.mxu0
    %v2506 = vadd.f32 %v2393, %v2505
    %2507 = vmatmul.f32.gmra.mxu0 %v1569
    %v2508 = vpop.f32.mrf.mxu0
    %v2509 = vadd.f32 %v2396, %v2508
    %2510 = vmatmul.f32.gmra.mxu0 %v1573
    %v2511 = vpop.f32.mrf.mxu0
    %v2512 = vadd.f32 %v2399, %v2511
    %2513 = vmatmul.f32.gmra.mxu0 %v1577
    %v2514 = vpop.f32.mrf.mxu0
    %v2515 = vadd.f32 %v2402, %v2514
    %2516 = vmatmul.f32.gmra.mxu0 %v1581
    %v2517 = vpop.f32.mrf.mxu0
    %v2518 = vadd.f32 %v2405, %v2517
    %2519 = vmatmul.f32.gmra.mxu0 %v1585
    %v2520 = vpop.f32.mrf.mxu0
    %v2521 = vadd.f32 %v2408, %v2520
    %2522 = vmatmul.f32.gmra.mxu0 %v1589
    %v2523 = vpop.f32.mrf.mxu0
    %v2524 = vadd.f32 %v2411, %v2523
    %2525 = vmatmul.f32.gmra.mxu0 %v1593
    %v2526 = vpop.f32.mrf.mxu0
    %v2527 = vadd.f32 %v2414, %v2526
    %2528 = vmatmul.f32.gmra.mxu0 %v1597
    %v2529 = vpop.f32.mrf.mxu0
    %v2530 = vadd.f32 %v2417, %v2529
    %2531 = vmatmul.f32.gmra.mxu0 %v1601
    %v2532 = vpop.f32.mrf.mxu0
    %v2533 = vadd.f32 %v2420, %v2532
    %2534 = vmatmul.f32.gmra.mxu0 %v1605
    %v2535 = vpop.f32.mrf.mxu0
    %v2536 = vadd.f32 %v2423, %v2535
    %2537 = vmatmul.f32.gmra.mxu0 %v1609
    %v2538 = vpop.f32.mrf.mxu0
    %v2539 = vadd.f32 %v2426, %v2538
    %2540 = vmatmul.f32.gmra.mxu0 %v1613
    %v2541 = vpop.f32.mrf.mxu0
    %v2542 = vadd.f32 %v2429, %v2541
    %2543 = vmatmul.f32.gmra.mxu0 %v1617
    %v2544 = vpop.f32.mrf.mxu0
    %v2545 = vadd.f32 %v2432, %v2544
    %2546 = vmatmul.f32.gmra.mxu0 %v1621
    %v2547 = vpop.f32.mrf.mxu0
    %v2548 = vadd.f32 %v2435, %v2547
    %2549 = vmatmul.f32.gmra.mxu0 %v1625
    %v2550 = vpop.f32.mrf.mxu0
    %v2551 = vadd.f32 %v2438, %v2550
    %2552 = vmatmul.f32.gmra.mxu0 %v1629
    %v2553 = vpop.f32.mrf.mxu0
    %v2554 = vadd.f32 %v2441, %v2553
    %2555 = vdwg.mxu0
    %2556 = vmatpush.msra.mxu0 %v1758
    %2557 = vmatpush.msra.mxu0 %v1756
    %2558 = vmatpush.msra.mxu0 %v1754
    %2559 = vmatpush.msra.mxu0 %v1752
    %2560 = vmatpush.msra.mxu0 %v1750
    %2561 = vmatpush.msra.mxu0 %v1748
    %2562 = vmatpush.msra.mxu0 %v1746
    %2563 = vmatpush.msra.mxu0 %v1744
    %2564 = vmatpush.msra.mxu0 %v1742
    %2565 = vmatpush.msra.mxu0 %v1740
    %2566 = vmatpush.msra.mxu0 %v1738
    %2567 = vmatpush.msra.mxu0 %v1736
    %2568 = vmatpush.msra.mxu0 %v1734
    %2569 = vmatpush.msra.mxu0 %v1732
    %2570 = vmatpush.msra.mxu0 %v1730
    %2571 = vmatpush.msra.mxu0 %v1728
    %2572 = vmatmul.f32.gmra.mxu0 %v1506
    %v2573 = vpop.f32.mrf.mxu0
    %v2574 = vadd.f32 %v2461, %v2573
    %2575 = vmatmul.f32.gmra.mxu0 %v1510
    %v2576 = vpop.f32.mrf.mxu0
    %v2577 = vadd.f32 %v2464, %v2576
    %2578 = vmatmul.f32.gmra.mxu0 %v1514
    %v2579 = vpop.f32.mrf.mxu0
    %v2580 = vadd.f32 %v2467, %v2579
    %2581 = vmatmul.f32.gmra.mxu0 %v1518
    %v2582 = vpop.f32.mrf.mxu0
    %v2583 = vadd.f32 %v2470, %v2582
    %2584 = vmatmul.f32.gmra.mxu0 %v1522
    %v2585 = vpop.f32.mrf.mxu0
    %v2586 = vadd.f32 %v2473, %v2585
    %2587 = vmatmul.f32.gmra.mxu0 %v1526
    %v2588 = vpop.f32.mrf.mxu0
    %v2589 = vadd.f32 %v2476, %v2588
    %2590 = vmatmul.f32.gmra.mxu0 %v1530
    %v2591 = vpop.f32.mrf.mxu0
    %v2592 = vadd.f32 %v2479, %v2591
    %2593 = vmatmul.f32.gmra.mxu0 %v1534
    %v2594 = vpop.f32.mrf.mxu0
    %v2595 = vadd.f32 %v2482, %v2594
    %2596 = vmatmul.f32.gmra.mxu0 %v1538
    %v2597 = vpop.f32.mrf.mxu0
    %v2598 = vadd.f32 %v2485, %v2597
    %2599 = vmatmul.f32.gmra.mxu0 %v1542
    %v2600 = vpop.f32.mrf.mxu0
    %v2601 = vadd.f32 %v2488, %v2600
    %2602 = vmatmul.f32.gmra.mxu0 %v1546
    %v2603 = vpop.f32.mrf.mxu0
    %v2604 = vadd.f32 %v2491, %v2603
    %2605 = vmatmul.f32.gmra.mxu0 %v1550
    %v2606 = vpop.f32.mrf.mxu0
    %v2607 = vadd.f32 %v2494, %v2606
    %2608 = vmatmul.f32.gmra.mxu0 %v1554
    %v2609 = vpop.f32.mrf.mxu0
    %v2610 = vadd.f32 %v2497, %v2609
    %2611 = vmatmul.f32.gmra.mxu0 %v1558
    %v2612 = vpop.f32.mrf.mxu0
    %v2613 = vadd.f32 %v2500, %v2612
    %2614 = vmatmul.f32.gmra.mxu0 %v1562
    %v2615 = vpop.f32.mrf.mxu0
    %v2616 = vadd.f32 %v2503, %v2615
    %2617 = vmatmul.f32.gmra.mxu0 %v1566
    %v2618 = vpop.f32.mrf.mxu0
    %v2619 = vadd.f32 %v2506, %v2618
    %2620 = vmatmul.f32.gmra.mxu0 %v1570
    %v2621 = vpop.f32.mrf.mxu0
    %v2622 = vadd.f32 %v2509, %v2621
    %2623 = vmatmul.f32.gmra.mxu0 %v1574
    %v2624 = vpop.f32.mrf.mxu0
    %v2625 = vadd.f32 %v2512, %v2624
    %2626 = vmatmul.f32.gmra.mxu0 %v1578
    %v2627 = vpop.f32.mrf.mxu0
    %v2628 = vadd.f32 %v2515, %v2627
    %2629 = vmatmul.f32.gmra.mxu0 %v1582
    %v2630 = vpop.f32.mrf.mxu0
    %v2631 = vadd.f32 %v2518, %v2630
    %2632 = vmatmul.f32.gmra.mxu0 %v1586
    %v2633 = vpop.f32.mrf.mxu0
    %v2634 = vadd.f32 %v2521, %v2633
    %2635 = vmatmul.f32.gmra.mxu0 %v1590
    %v2636 = vpop.f32.mrf.mxu0
    %v2637 = vadd.f32 %v2524, %v2636
    %2638 = vmatmul.f32.gmra.mxu0 %v1594
    %v2639 = vpop.f32.mrf.mxu0
    %v2640 = vadd.f32 %v2527, %v2639
    %2641 = vmatmul.f32.gmra.mxu0 %v1598
    %v2642 = vpop.f32.mrf.mxu0
    %v2643 = vadd.f32 %v2530, %v2642
    %2644 = vmatmul.f32.gmra.mxu0 %v1602
    %v2645 = vpop.f32.mrf.mxu0
    %v2646 = vadd.f32 %v2533, %v2645
    %2647 = vmatmul.f32.gmra.mxu0 %v1606
    %v2648 = vpop.f32.mrf.mxu0
    %v2649 = vadd.f32 %v2536, %v2648
    %2650 = vmatmul.f32.gmra.mxu0 %v1610
    %v2651 = vpop.f32.mrf.mxu0
    %v2652 = vadd.f32 %v2539, %v2651
    %2653 = vmatmul.f32.gmra.mxu0 %v1614
    %v2654 = vpop.f32.mrf.mxu0
    %v2655 = vadd.f32 %v2542, %v2654
    %2656 = vmatmul.f32.gmra.mxu0 %v1618
    %v2657 = vpop.f32.mrf.mxu0
    %v2658 = vadd.f32 %v2545, %v2657
    %2659 = vmatmul.f32.gmra.mxu0 %v1622
    %v2660 = vpop.f32.mrf.mxu0
    %v2661 = vadd.f32 %v2548, %v2660
    %2662 = vmatmul.f32.gmra.mxu0 %v1626
    %v2663 = vpop.f32.mrf.mxu0
    %v2664 = vadd.f32 %v2551, %v2663
    %2665 = vmatmul.f32.gmra.mxu0 %v1630
    %v2666 = vpop.f32.mrf.mxu0
    %v2667 = vadd.f32 %v2554, %v2666
    %2668 = vdwg.mxu0
    %v2669 = vmax.f32 %v2122, 0.0
    %v2670 = vmax.f32 %v2574, 0.0
    %v2671 = vmax.f32 %v2125, 0.0
    %v2672 = vmax.f32 %v2577, 0.0
    %v2673 = vmax.f32 %v2128, 0.0
    %v2674 = vmax.f32 %v2580, 0.0
    %v2675 = vmax.f32 %v2131, 0.0
    %v2676 = vmax.f32 %v2583, 0.0
    %v2677 = vmax.f32 %v2134, 0.0
    %v2678 = vmax.f32 %v2586, 0.0
    %v2679 = vmax.f32 %v2137, 0.0
    %v2680 = vmax.f32 %v2589, 0.0
    %v2681 = vmax.f32 %v2140, 0.0
    %v2682 = vmax.f32 %v2592, 0.0
    %v2683 = vmax.f32 %v2143, 0.0
    %v2684 = vmax.f32 %v2595, 0.0
    %v2685 = vmax.f32 %v2146, 0.0
    %v2686 = vmax.f32 %v2598, 0.0
    %v2687 = vmax.f32 %v2149, 0.0
    %v2688 = vmax.f32 %v2601, 0.0
    %v2689 = vmax.f32 %v2152, 0.0
    %v2690 = vmax.f32 %v2604, 0.0
    %v2691 = vmax.f32 %v2155, 0.0
    %v2692 = vmax.f32 %v2607, 0.0
    %v2693 = vmax.f32 %v2158, 0.0
    %v2694 = vmax.f32 %v2610, 0.0
    %v2695 = vmax.f32 %v2161, 0.0
    %v2696 = vmax.f32 %v2613, 0.0
    %v2697 = vmax.f32 %v2164, 0.0
    %v2698 = vmax.f32 %v2616, 0.0
    %v2699 = vmax.f32 %v2167, 0.0
    %v2700 = vmax.f32 %v2619, 0.0
    %v2701 = vmax.f32 %v2170, 0.0
    %v2702 = vmax.f32 %v2622, 0.0
    %v2703 = vmax.f32 %v2173, 0.0
    %v2704 = vmax.f32 %v2625, 0.0
    %v2705 = vmax.f32 %v2176, 0.0
    %v2706 = vmax.f32 %v2628, 0.0
    %v2707 = vmax.f32 %v2179, 0.0
    %v2708 = vmax.f32 %v2631, 0.0
    %v2709 = vmax.f32 %v2182, 0.0
    %v2710 = vmax.f32 %v2634, 0.0
    %v2711 = vmax.f32 %v2185, 0.0
    %v2712 = vmax.f32 %v2637, 0.0
    %v2713 = vmax.f32 %v2188, 0.0
    %v2714 = vmax.f32 %v2640, 0.0
    %v2715 = vmax.f32 %v2191, 0.0
    %v2716 = vmax.f32 %v2643, 0.0
    %v2717 = vmax.f32 %v2194, 0.0
    %v2718 = vmax.f32 %v2646, 0.0
    %v2719 = vmax.f32 %v2197, 0.0
    %v2720 = vmax.f32 %v2649, 0.0
    %v2721 = vmax.f32 %v2200, 0.0
    %v2722 = vmax.f32 %v2652, 0.0
    %v2723 = vmax.f32 %v2203, 0.0
    %v2724 = vmax.f32 %v2655, 0.0
    %v2725 = vmax.f32 %v2206, 0.0
    %v2726 = vmax.f32 %v2658, 0.0
    %v2727 = vmax.f32 %v2209, 0.0
    %v2728 = vmax.f32 %v2661, 0.0
    %v2729 = vmax.f32 %v2212, 0.0
    %v2730 = vmax.f32 %v2664, 0.0
    %v2731 = vmax.f32 %v2215, 0.0
    %v2732 = vmax.f32 %v2667, 0.0
    %v2733 = vld [vmem:[#allocation8] sm:$0xff]
    %v2734 = vld [vmem:[#allocation8 + $0x8] sm:$0xff]
    %v2735 = vld [vmem:[#allocation8 + $0x10] sm:$0xff]
    %v2736 = vld [vmem:[#allocation8 + $0x18] sm:$0xff]
    %v2737 = vld [vmem:[#allocation8 + $0x20] sm:$0xff]
    %v2738 = vld [vmem:[#allocation8 + $0x28] sm:$0xff]
    %v2739 = vld [vmem:[#allocation8 + $0x30] sm:$0xff]
    %v2740 = vld [vmem:[#allocation8 + $0x38] sm:$0xff]
    %v2741 = vld [vmem:[#allocation8 + $0x40] sm:$0xff]
    %v2742 = vld [vmem:[#allocation8 + $0x48] sm:$0xff]
    %v2743 = vld [vmem:[#allocation8 + $0x50] sm:$0xff]
    %v2744 = vld [vmem:[#allocation8 + $0x58] sm:$0xff]
    %v2745 = vld [vmem:[#allocation8 + $0x60] sm:$0xff]
    %v2746 = vld [vmem:[#allocation8 + $0x68] sm:$0xff]
    %v2747 = vld [vmem:[#allocation8 + $0x70] sm:$0xff]
    %v2748 = vld [vmem:[#allocation8 + $0x78] sm:$0xff]
    %v2749 = vld [vmem:[#allocation8 + $0x80] sm:$0xff]
    %v2750 = vld [vmem:[#allocation8 + $0x88] sm:$0xff]
    %v2751 = vld [vmem:[#allocation8 + $0x90] sm:$0xff]
    %v2752 = vld [vmem:[#allocation8 + $0x98] sm:$0xff]
    %v2753 = vld [vmem:[#allocation8 + $0xa0] sm:$0xff]
    %v2754 = vld [vmem:[#allocation8 + $0xa8] sm:$0xff]
    %v2755 = vld [vmem:[#allocation8 + $0xb0] sm:$0xff]
    %v2756 = vld [vmem:[#allocation8 + $0xb8] sm:$0xff]
    %v2757 = vld [vmem:[#allocation8 + $0xc0] sm:$0xff]
    %v2758 = vld [vmem:[#allocation8 + $0xc8] sm:$0xff]
    %v2759 = vld [vmem:[#allocation8 + $0xd0] sm:$0xff]
    %v2760 = vld [vmem:[#allocation8 + $0xd8] sm:$0xff]
    %v2761 = vld [vmem:[#allocation8 + $0xe0] sm:$0xff]
    %v2762 = vld [vmem:[#allocation8 + $0xe8] sm:$0xff]
    %v2763 = vld [vmem:[#allocation8 + $0xf0] sm:$0xff]
    %v2764 = vld [vmem:[#allocation8 + $0xf8] sm:$0xff]
    %v2765 = vld [vmem:[%s7] sm:$0x1]
    %v2767 = vperm.slane %v2765, 0
    %2769 = vmatpush.msra.mxu0 %v2748
    %2770 = vmatpush.msra.mxu0 %v2747
    %2771 = vmatpush.msra.mxu0 %v2746
    %2772 = vmatpush.msra.mxu0 %v2745
    %2773 = vmatpush.msra.mxu0 %v2744
    %2774 = vmatpush.msra.mxu0 %v2743
    %2775 = vmatpush.msra.mxu0 %v2742
    %2776 = vmatpush.msra.mxu0 %v2741
    %2777 = vmatpush.msra.mxu0 %v2740
    %2778 = vmatpush.msra.mxu0 %v2739
    %2779 = vmatpush.msra.mxu0 %v2738
    %2780 = vmatpush.msra.mxu0 %v2737
    %2781 = vmatpush.msra.mxu0 %v2736
    %2782 = vmatpush.msra.mxu0 %v2735
    %2783 = vmatpush.msra.mxu0 %v2734
    %2784 = vmatpush.msra.mxu0 %v2733
    %2785 = vmatmul.f32.gmra.mxu0 %v2669
    %v2786 = vpop.f32.mrf.mxu0
    %v2787 = vadd.f32 %v2767, %v2786
    %2788 = vmatmul.f32.gmra.mxu0 %v2671
    %v2789 = vpop.f32.mrf.mxu0
    %v2790 = vadd.f32 %v2767, %v2789
    %2791 = vmatmul.f32.gmra.mxu0 %v2673
    %v2792 = vpop.f32.mrf.mxu0
    %v2793 = vadd.f32 %v2767, %v2792
    %2794 = vmatmul.f32.gmra.mxu0 %v2675
    %v2795 = vpop.f32.mrf.mxu0
    %v2796 = vadd.f32 %v2767, %v2795
    %2797 = vmatmul.f32.gmra.mxu0 %v2677
    %v2798 = vpop.f32.mrf.mxu0
    %v2799 = vadd.f32 %v2767, %v2798
    %2800 = vmatmul.f32.gmra.mxu0 %v2679
    %v2801 = vpop.f32.mrf.mxu0
    %v2802 = vadd.f32 %v2767, %v2801
    %2803 = vmatmul.f32.gmra.mxu0 %v2681
    %v2804 = vpop.f32.mrf.mxu0
    %v2805 = vadd.f32 %v2767, %v2804
    %2806 = vmatmul.f32.gmra.mxu0 %v2683
    %v2807 = vpop.f32.mrf.mxu0
    %v2808 = vadd.f32 %v2767, %v2807
    %2809 = vmatmul.f32.gmra.mxu0 %v2685
    %v2810 = vpop.f32.mrf.mxu0
    %v2811 = vadd.f32 %v2767, %v2810
    %2812 = vmatmul.f32.gmra.mxu0 %v2687
    %v2813 = vpop.f32.mrf.mxu0
    %v2814 = vadd.f32 %v2767, %v2813
    %2815 = vmatmul.f32.gmra.mxu0 %v2689
    %v2816 = vpop.f32.mrf.mxu0
    %v2817 = vadd.f32 %v2767, %v2816
    %2818 = vmatmul.f32.gmra.mxu0 %v2691
    %v2819 = vpop.f32.mrf.mxu0
    %v2820 = vadd.f32 %v2767, %v2819
    %2821 = vmatmul.f32.gmra.mxu0 %v2693
    %v2822 = vpop.f32.mrf.mxu0
    %v2823 = vadd.f32 %v2767, %v2822
    %2824 = vmatmul.f32.gmra.mxu0 %v2695
    %v2825 = vpop.f32.mrf.mxu0
    %v2826 = vadd.f32 %v2767, %v2825
    %2827 = vmatmul.f32.gmra.mxu0 %v2697
    %v2828 = vpop.f32.mrf.mxu0
    %v2829 = vadd.f32 %v2767, %v2828
    %2830 = vmatmul.f32.gmra.mxu0 %v2699
    %v2831 = vpop.f32.mrf.mxu0
    %v2832 = vadd.f32 %v2767, %v2831
    %2833 = vmatmul.f32.gmra.mxu0 %v2701
    %v2834 = vpop.f32.mrf.mxu0
    %v2835 = vadd.f32 %v2767, %v2834
    %2836 = vmatmul.f32.gmra.mxu0 %v2703
    %v2837 = vpop.f32.mrf.mxu0
    %v2838 = vadd.f32 %v2767, %v2837
    %2839 = vmatmul.f32.gmra.mxu0 %v2705
    %v2840 = vpop.f32.mrf.mxu0
    %v2841 = vadd.f32 %v2767, %v2840
    %2842 = vmatmul.f32.gmra.mxu0 %v2707
    %v2843 = vpop.f32.mrf.mxu0
    %v2844 = vadd.f32 %v2767, %v2843
    %2845 = vmatmul.f32.gmra.mxu0 %v2709
    %v2846 = vpop.f32.mrf.mxu0
    %v2847 = vadd.f32 %v2767, %v2846
    %2848 = vmatmul.f32.gmra.mxu0 %v2711
    %v2849 = vpop.f32.mrf.mxu0
    %v2850 = vadd.f32 %v2767, %v2849
    %2851 = vmatmul.f32.gmra.mxu0 %v2713
    %v2852 = vpop.f32.mrf.mxu0
    %v2853 = vadd.f32 %v2767, %v2852
    %2854 = vmatmul.f32.gmra.mxu0 %v2715
    %v2855 = vpop.f32.mrf.mxu0
    %v2856 = vadd.f32 %v2767, %v2855
    %2857 = vmatmul.f32.gmra.mxu0 %v2717
    %v2858 = vpop.f32.mrf.mxu0
    %v2859 = vadd.f32 %v2767, %v2858
    %2860 = vmatmul.f32.gmra.mxu0 %v2719
    %v2861 = vpop.f32.mrf.mxu0
    %v2862 = vadd.f32 %v2767, %v2861
    %2863 = vmatmul.f32.gmra.mxu0 %v2721
    %v2864 = vpop.f32.mrf.mxu0
    %v2865 = vadd.f32 %v2767, %v2864
    %2866 = vmatmul.f32.gmra.mxu0 %v2723
    %v2867 = vpop.f32.mrf.mxu0
    %v2868 = vadd.f32 %v2767, %v2867
    %2869 = vmatmul.f32.gmra.mxu0 %v2725
    %v2870 = vpop.f32.mrf.mxu0
    %v2871 = vadd.f32 %v2767, %v2870
    %2872 = vmatmul.f32.gmra.mxu0 %v2727
    %v2873 = vpop.f32.mrf.mxu0
    %v2874 = vadd.f32 %v2767, %v2873
    %2875 = vmatmul.f32.gmra.mxu0 %v2729
    %v2876 = vpop.f32.mrf.mxu0
    %v2877 = vadd.f32 %v2767, %v2876
    %2878 = vmatmul.f32.gmra.mxu0 %v2731
    %v2879 = vpop.f32.mrf.mxu0
    %v2880 = vadd.f32 %v2767, %v2879
    %2881 = vdwg.mxu0
    %2882 = vmatpush.msra.mxu0 %v2764
    %2883 = vmatpush.msra.mxu0 %v2763
    %2884 = vmatpush.msra.mxu0 %v2762
    %2885 = vmatpush.msra.mxu0 %v2761
    %2886 = vmatpush.msra.mxu0 %v2760
    %2887 = vmatpush.msra.mxu0 %v2759
    %2888 = vmatpush.msra.mxu0 %v2758
    %2889 = vmatpush.msra.mxu0 %v2757
    %2890 = vmatpush.msra.mxu0 %v2756
    %2891 = vmatpush.msra.mxu0 %v2755
    %2892 = vmatpush.msra.mxu0 %v2754
    %2893 = vmatpush.msra.mxu0 %v2753
    %2894 = vmatpush.msra.mxu0 %v2752
    %2895 = vmatpush.msra.mxu0 %v2751
    %2896 = vmatpush.msra.mxu0 %v2750
    %2897 = vmatpush.msra.mxu0 %v2749
    %2898 = vmatmul.f32.gmra.mxu0 %v2670
    %v2899 = vpop.f32.mrf.mxu0
    %v2900 = vadd.f32 %v2787, %v2899
    %2901 = vmatmul.f32.gmra.mxu0 %v2672
    %v2902 = vpop.f32.mrf.mxu0
    %v2903 = vadd.f32 %v2790, %v2902
    %2904 = vmatmul.f32.gmra.mxu0 %v2674
    %v2905 = vpop.f32.mrf.mxu0
    %v2906 = vadd.f32 %v2793, %v2905
    %2907 = vmatmul.f32.gmra.mxu0 %v2676
    %v2908 = vpop.f32.mrf.mxu0
    %v2909 = vadd.f32 %v2796, %v2908
    %2910 = vmatmul.f32.gmra.mxu0 %v2678
    %v2911 = vpop.f32.mrf.mxu0
    %v2912 = vadd.f32 %v2799, %v2911
    %2913 = vmatmul.f32.gmra.mxu0 %v2680
    %v2914 = vpop.f32.mrf.mxu0
    %v2915 = vadd.f32 %v2802, %v2914
    %2916 = vmatmul.f32.gmra.mxu0 %v2682
    %v2917 = vpop.f32.mrf.mxu0
    %v2918 = vadd.f32 %v2805, %v2917
    %2919 = vmatmul.f32.gmra.mxu0 %v2684
    %v2920 = vpop.f32.mrf.mxu0
    %v2921 = vadd.f32 %v2808, %v2920
    %2922 = vmatmul.f32.gmra.mxu0 %v2686
    %v2923 = vpop.f32.mrf.mxu0
    %v2924 = vadd.f32 %v2811, %v2923
    %2925 = vmatmul.f32.gmra.mxu0 %v2688
    %v2926 = vpop.f32.mrf.mxu0
    %v2927 = vadd.f32 %v2814, %v2926
    %2928 = vmatmul.f32.gmra.mxu0 %v2690
    %v2929 = vpop.f32.mrf.mxu0
    %v2930 = vadd.f32 %v2817, %v2929
    %2931 = vmatmul.f32.gmra.mxu0 %v2692
    %v2932 = vpop.f32.mrf.mxu0
    %v2933 = vadd.f32 %v2820, %v2932
    %2934 = vmatmul.f32.gmra.mxu0 %v2694
    %v2935 = vpop.f32.mrf.mxu0
    %v2936 = vadd.f32 %v2823, %v2935
    %2937 = vmatmul.f32.gmra.mxu0 %v2696
    %v2938 = vpop.f32.mrf.mxu0
    %v2939 = vadd.f32 %v2826, %v2938
    %2940 = vmatmul.f32.gmra.mxu0 %v2698
    %v2941 = vpop.f32.mrf.mxu0
    %v2942 = vadd.f32 %v2829, %v2941
    %2943 = vmatmul.f32.gmra.mxu0 %v2700
    %v2944 = vpop.f32.mrf.mxu0
    %v2945 = vadd.f32 %v2832, %v2944
    %2946 = vmatmul.f32.gmra.mxu0 %v2702
    %v2947 = vpop.f32.mrf.mxu0
    %v2948 = vadd.f32 %v2835, %v2947
    %2949 = vmatmul.f32.gmra.mxu0 %v2704
    %v2950 = vpop.f32.mrf.mxu0
    %v2951 = vadd.f32 %v2838, %v2950
    %2952 = vmatmul.f32.gmra.mxu0 %v2706
    %v2953 = vpop.f32.mrf.mxu0
    %v2954 = vadd.f32 %v2841, %v2953
    %2955 = vmatmul.f32.gmra.mxu0 %v2708
    %v2956 = vpop.f32.mrf.mxu0
    %v2957 = vadd.f32 %v2844, %v2956
    %2958 = vmatmul.f32.gmra.mxu0 %v2710
    %v2959 = vpop.f32.mrf.mxu0
    %v2960 = vadd.f32 %v2847, %v2959
    %2961 = vmatmul.f32.gmra.mxu0 %v2712
    %v2962 = vpop.f32.mrf.mxu0
    %v2963 = vadd.f32 %v2850, %v2962
    %2964 = vmatmul.f32.gmra.mxu0 %v2714
    %v2965 = vpop.f32.mrf.mxu0
    %v2966 = vadd.f32 %v2853, %v2965
    %2967 = vmatmul.f32.gmra.mxu0 %v2716
    %v2968 = vpop.f32.mrf.mxu0
    %v2969 = vadd.f32 %v2856, %v2968
    %2970 = vmatmul.f32.gmra.mxu0 %v2718
    %v2971 = vpop.f32.mrf.mxu0
    %v2972 = vadd.f32 %v2859, %v2971
    %2973 = vmatmul.f32.gmra.mxu0 %v2720
    %v2974 = vpop.f32.mrf.mxu0
    %v2975 = vadd.f32 %v2862, %v2974
    %2976 = vmatmul.f32.gmra.mxu0 %v2722
    %v2977 = vpop.f32.mrf.mxu0
    %v2978 = vadd.f32 %v2865, %v2977
    %2979 = vmatmul.f32.gmra.mxu0 %v2724
    %v2980 = vpop.f32.mrf.mxu0
    %v2981 = vadd.f32 %v2868, %v2980
    %2982 = vmatmul.f32.gmra.mxu0 %v2726
    %v2983 = vpop.f32.mrf.mxu0
    %v2984 = vadd.f32 %v2871, %v2983
    %2985 = vmatmul.f32.gmra.mxu0 %v2728
    %v2986 = vpop.f32.mrf.mxu0
    %v2987 = vadd.f32 %v2874, %v2986
    %2988 = vmatmul.f32.gmra.mxu0 %v2730
    %v2989 = vpop.f32.mrf.mxu0
    %v2990 = vadd.f32 %v2877, %v2989
    %2991 = vmatmul.f32.gmra.mxu0 %v2732
    %v2992 = vpop.f32.mrf.mxu0
    %v2993 = vadd.f32 %v2880, %v2992
    %2994 = vdwg.mxu0
    %v2995 = vmax.f32 %v2900, 0.0
    %v2996 = vmax.f32 %v2903, 0.0
    %v2997 = vmax.f32 %v2906, 0.0
    %v2998 = vmax.f32 %v2909, 0.0
    %v2999 = vmax.f32 %v2912, 0.0
    %v3000 = vmax.f32 %v2915, 0.0
    %v3001 = vmax.f32 %v2918, 0.0
    %v3002 = vmax.f32 %v2921, 0.0
    %v3003 = vmax.f32 %v2924, 0.0
    %v3004 = vmax.f32 %v2927, 0.0
    %v3005 = vmax.f32 %v2930, 0.0
    %v3006 = vmax.f32 %v2933, 0.0
    %v3007 = vmax.f32 %v2936, 0.0
    %v3008 = vmax.f32 %v2939, 0.0
    %v3009 = vmax.f32 %v2942, 0.0
    %v3010 = vmax.f32 %v2945, 0.0
    %v3011 = vmax.f32 %v2948, 0.0
    %v3012 = vmax.f32 %v2951, 0.0
    %v3013 = vmax.f32 %v2954, 0.0
    %v3014 = vmax.f32 %v2957, 0.0
    %v3015 = vmax.f32 %v2960, 0.0
    %v3016 = vmax.f32 %v2963, 0.0
    %v3017 = vmax.f32 %v2966, 0.0
    %v3018 = vmax.f32 %v2969, 0.0
    %v3019 = vmax.f32 %v2972, 0.0
    %v3020 = vmax.f32 %v2975, 0.0
    %v3021 = vmax.f32 %v2978, 0.0
    %v3022 = vmax.f32 %v2981, 0.0
    %v3023 = vmax.f32 %v2984, 0.0
    %v3024 = vmax.f32 %v2987, 0.0
    %v3025 = vmax.f32 %v2990, 0.0
    %v3026 = vmax.f32 %v2993, 0.0
    %v3027 = vld [vmem:[%s8] sm:$0xff]
    %v3028 = vld [vmem:[%s8 + $0x8] sm:$0xff]
    %v3029 = vld [vmem:[%s8 + $0x10] sm:$0xff]
    %v3030 = vld [vmem:[%s8 + $0x18] sm:$0xff]
    %v3031 = vld [vmem:[%s8 + $0x20] sm:$0xff]
    %v3032 = vld [vmem:[%s8 + $0x28] sm:$0xff]
    %v3033 = vld [vmem:[%s8 + $0x30] sm:$0xff]
    %v3034 = vld [vmem:[%s8 + $0x38] sm:$0xff]
    %v3035 = vld [vmem:[%s8 + $0x40] sm:$0xff]
    %v3036 = vld [vmem:[%s8 + $0x48] sm:$0xff]
    %v3037 = vld [vmem:[%s8 + $0x50] sm:$0xff]
    %v3038 = vld [vmem:[%s8 + $0x58] sm:$0xff]
    %v3039 = vld [vmem:[%s8 + $0x60] sm:$0xff]
    %v3040 = vld [vmem:[%s8 + $0x68] sm:$0xff]
    %v3041 = vld [vmem:[%s8 + $0x70] sm:$0xff]
    %v3042 = vld [vmem:[%s8 + $0x78] sm:$0xff]
    %v3043 = vld [vmem:[%s9] sm:$0x1]
    %v3045 = vperm.slane %v3043, 0
    %3047 = vmatpush.msra.mxu0 %v3042
    %3048 = vmatpush.msra.mxu0 %v3041
    %3049 = vmatpush.msra.mxu0 %v3040
    %3050 = vmatpush.msra.mxu0 %v3039
    %3051 = vmatpush.msra.mxu0 %v3038
    %3052 = vmatpush.msra.mxu0 %v3037
    %3053 = vmatpush.msra.mxu0 %v3036
    %3054 = vmatpush.msra.mxu0 %v3035
    %3055 = vmatpush.msra.mxu0 %v3034
    %3056 = vmatpush.msra.mxu0 %v3033
    %3057 = vmatpush.msra.mxu0 %v3032
    %3058 = vmatpush.msra.mxu0 %v3031
    %3059 = vmatpush.msra.mxu0 %v3030
    %3060 = vmatpush.msra.mxu0 %v3029
    %3061 = vmatpush.msra.mxu0 %v3028
    %3062 = vmatpush.msra.mxu0 %v3027
    %3063 = vmatmul.f32.gmra.mxu0 %v2995
    %v3064 = vpop.f32.mrf.mxu0
    %v3065 = vadd.f32 %v3045, %v3064
    %3066 = vmatmul.f32.gmra.mxu0 %v2996
    %v3067 = vpop.f32.mrf.mxu0
    %v3068 = vadd.f32 %v3045, %v3067
    %3069 = vmatmul.f32.gmra.mxu0 %v2997
    %v3070 = vpop.f32.mrf.mxu0
    %v3071 = vadd.f32 %v3045, %v3070
    %3072 = vmatmul.f32.gmra.mxu0 %v2998
    %v3073 = vpop.f32.mrf.mxu0
    %v3074 = vadd.f32 %v3045, %v3073
    %3075 = vmatmul.f32.gmra.mxu0 %v2999
    %v3076 = vpop.f32.mrf.mxu0
    %v3077 = vadd.f32 %v3045, %v3076
    %3078 = vmatmul.f32.gmra.mxu0 %v3000
    %v3079 = vpop.f32.mrf.mxu0
    %v3080 = vadd.f32 %v3045, %v3079
    %3081 = vmatmul.f32.gmra.mxu0 %v3001
    %v3082 = vpop.f32.mrf.mxu0
    %v3083 = vadd.f32 %v3045, %v3082
    %3084 = vmatmul.f32.gmra.mxu0 %v3002
    %v3085 = vpop.f32.mrf.mxu0
    %v3086 = vadd.f32 %v3045, %v3085
    %3087 = vmatmul.f32.gmra.mxu0 %v3003
    %v3088 = vpop.f32.mrf.mxu0
    %v3089 = vadd.f32 %v3045, %v3088
    %3090 = vmatmul.f32.gmra.mxu0 %v3004
    %v3091 = vpop.f32.mrf.mxu0
    %v3092 = vadd.f32 %v3045, %v3091
    %3093 = vmatmul.f32.gmra.mxu0 %v3005
    %v3094 = vpop.f32.mrf.mxu0
    %v3095 = vadd.f32 %v3045, %v3094
    %3096 = vmatmul.f32.gmra.mxu0 %v3006
    %v3097 = vpop.f32.mrf.mxu0
    %v3098 = vadd.f32 %v3045, %v3097
    %3099 = vmatmul.f32.gmra.mxu0 %v3007
    %v3100 = vpop.f32.mrf.mxu0
    %v3101 = vadd.f32 %v3045, %v3100
    %3102 = vmatmul.f32.gmra.mxu0 %v3008
    %v3103 = vpop.f32.mrf.mxu0
    %v3104 = vadd.f32 %v3045, %v3103
    %3105 = vmatmul.f32.gmra.mxu0 %v3009
    %v3106 = vpop.f32.mrf.mxu0
    %v3107 = vadd.f32 %v3045, %v3106
    %3108 = vmatmul.f32.gmra.mxu0 %v3010
    %v3109 = vpop.f32.mrf.mxu0
    %v3110 = vadd.f32 %v3045, %v3109
    %3111 = vmatmul.f32.gmra.mxu0 %v3011
    %v3112 = vpop.f32.mrf.mxu0
    %v3113 = vadd.f32 %v3045, %v3112
    %3114 = vmatmul.f32.gmra.mxu0 %v3012
    %v3115 = vpop.f32.mrf.mxu0
    %v3116 = vadd.f32 %v3045, %v3115
    %3117 = vmatmul.f32.gmra.mxu0 %v3013
    %v3118 = vpop.f32.mrf.mxu0
    %v3119 = vadd.f32 %v3045, %v3118
    %3120 = vmatmul.f32.gmra.mxu0 %v3014
    %v3121 = vpop.f32.mrf.mxu0
    %v3122 = vadd.f32 %v3045, %v3121
    %3123 = vmatmul.f32.gmra.mxu0 %v3015
    %v3124 = vpop.f32.mrf.mxu0
    %v3125 = vadd.f32 %v3045, %v3124
    %3126 = vmatmul.f32.gmra.mxu0 %v3016
    %v3127 = vpop.f32.mrf.mxu0
    %v3128 = vadd.f32 %v3045, %v3127
    %3129 = vmatmul.f32.gmra.mxu0 %v3017
    %v3130 = vpop.f32.mrf.mxu0
    %v3131 = vadd.f32 %v3045, %v3130
    %3132 = vmatmul.f32.gmra.mxu0 %v3018
    %v3133 = vpop.f32.mrf.mxu0
    %v3134 = vadd.f32 %v3045, %v3133
    %3135 = vmatmul.f32.gmra.mxu0 %v3019
    %v3136 = vpop.f32.mrf.mxu0
    %v3137 = vadd.f32 %v3045, %v3136
    %3138 = vmatmul.f32.gmra.mxu0 %v3020
    %v3139 = vpop.f32.mrf.mxu0
    %v3140 = vadd.f32 %v3045, %v3139
    %3141 = vmatmul.f32.gmra.mxu0 %v3021
    %v3142 = vpop.f32.mrf.mxu0
    %v3143 = vadd.f32 %v3045, %v3142
    %3144 = vmatmul.f32.gmra.mxu0 %v3022
    %v3145 = vpop.f32.mrf.mxu0
    %v3146 = vadd.f32 %v3045, %v3145
    %3147 = vmatmul.f32.gmra.mxu0 %v3023
    %v3148 = vpop.f32.mrf.mxu0
    %v3149 = vadd.f32 %v3045, %v3148
    %3150 = vmatmul.f32.gmra.mxu0 %v3024
    %v3151 = vpop.f32.mrf.mxu0
    %v3152 = vadd.f32 %v3045, %v3151
    %3153 = vmatmul.f32.gmra.mxu0 %v3025
    %v3154 = vpop.f32.mrf.mxu0
    %v3155 = vadd.f32 %v3045, %v3154
    %3156 = vmatmul.f32.gmra.mxu0 %v3026
    %v3157 = vpop.f32.mrf.mxu0
    %v3158 = vadd.f32 %v3045, %v3157
    %3159 = vdwg.mxu0
    %3160 = vst [vmem:[#allocation10] sm:$0xff] %v3065
    %3161 = vst [vmem:[#allocation10 + $0x8] sm:$0xff] %v3068
    %3162 = vst [vmem:[#allocation10 + $0x10] sm:$0xff] %v3071
    %3163 = vst [vmem:[#allocation10 + $0x18] sm:$0xff] %v3074
    %3164 = vst [vmem:[#allocation10 + $0x20] sm:$0xff] %v3077
    %3165 = vst [vmem:[#allocation10 + $0x28] sm:$0xff] %v3080
    %3166 = vst [vmem:[#allocation10 + $0x30] sm:$0xff] %v3083
    %3167 = vst [vmem:[#allocation10 + $0x38] sm:$0xff] %v3086
    %3168 = vst [vmem:[#allocation10 + $0x40] sm:$0xff] %v3089
    %3169 = vst [vmem:[#allocation10 + $0x48] sm:$0xff] %v3092
    %3170 = vst [vmem:[#allocation10 + $0x50] sm:$0xff] %v3095
    %3171 = vst [vmem:[#allocation10 + $0x58] sm:$0xff] %v3098
    %3172 = vst [vmem:[#allocation10 + $0x60] sm:$0xff] %v3101
    %3173 = vst [vmem:[#allocation10 + $0x68] sm:$0xff] %v3104
    %3174 = vst [vmem:[#allocation10 + $0x70] sm:$0xff] %v3107
    %3175 = vst [vmem:[#allocation10 + $0x78] sm:$0xff] %v3110
    %3176 = vst [vmem:[#allocation10 + $0x80] sm:$0xff] %v3113
    %3177 = vst [vmem:[#allocation10 + $0x88] sm:$0xff] %v3116
    %3178 = vst [vmem:[#allocation10 + $0x90] sm:$0xff] %v3119
    %3179 = vst [vmem:[#allocation10 + $0x98] sm:$0xff] %v3122
    %3180 = vst [vmem:[#allocation10 + $0xa0] sm:$0xff] %v3125
    %3181 = vst [vmem:[#allocation10 + $0xa8] sm:$0xff] %v3128
    %3182 = vst [vmem:[#allocation10 + $0xb0] sm:$0xff] %v3131
    %3183 = vst [vmem:[#allocation10 + $0xb8] sm:$0xff] %v3134
    %3184 = vst [vmem:[#allocation10 + $0xc0] sm:$0xff] %v3137
    %3185 = vst [vmem:[#allocation10 + $0xc8] sm:$0xff] %v3140
    %3186 = vst [vmem:[#allocation10 + $0xd0] sm:$0xff] %v3143
    %3187 = vst [vmem:[#allocation10 + $0xd8] sm:$0xff] %v3146
    %3188 = vst [vmem:[#allocation10 + $0xe0] sm:$0xff] %v3149
    %3189 = vst [vmem:[#allocation10 + $0xe8] sm:$0xff] %v3152
    %3190 = vst [vmem:[#allocation10 + $0xf0] sm:$0xff] %v3155
    %3191 = vst [vmem:[#allocation10 + $0xf8] sm:$0xff] %v3158
    // Predicated region
    $region58: #{tpu_custom_call.1} parent=1 // pred_check
      _
    $region59: #{tpu_custom_call.1} parent=1 // pred_check_branch
      %3193 = sbr.rel (0) target = $region61
    $region60: #{tpu_custom_call.1} parent=1 // pred_region
      %3195 = vsyncadd [#allocation4], 0
      %s3196 = sshll.u32 [#allocation10], 4
      %s3197 = int_to_ptr.vmem [resolvable:$true] %s3196
      %s3198 = sshll.u32 %s10, 4
      %s3199 = int_to_ptr.hbm [resolvable:$true] %s3198
      %3204 = dma.vmem_to_hbm [thread:$0]  %s3197, 4096, %s3199, [#allocation4], 128, 128, 8
    $region61: #{tpu_custom_call.1} parent=1 // pred_fallthru
      _
    // Predicated region
    $region62: #{tpu_custom_call.1} parent=1 // pred_check
      _
    $region63: #{tpu_custom_call.1} parent=1 // pred_check_branch
      %3206 = sbr.rel (0) target = $region65
    $region64: #{tpu_custom_call.1} parent=1 // pred_region
      %3208 = dma.done [#allocation4], 4096
    $region65: #{tpu_custom_call.1} parent=1 // pred_fallthru
      _
    %3209 = vsyncpa [#allocation3], 1
    %3210 = vsyncpa [#allocation6], 1
    %3211 = vsyncpa [#allocation9], 1
    %3212 = vsyncpa [#allocation4], 1

</llo_original>
